<compile_context>
chip_gen: v6e
topology: v6e:2x2x1
jax: 0.10.0
libtpu: 0.0.40
codegen_flags: <defaults>
</compile_context>

<pallas_src>
import math

import jax
import jax.numpy as jnp
from jax import lax
from jax.experimental import pallas as pl
from jax.experimental.pallas import tpu as pltpu

SELU_ALPHA = 1.6732632423543772
SELU_SCALE = 1.0507009873554805

N_CHANNELS = 3
N_CONV1 = 64
N_CONV2 = 128
N_FC1 = 64
N_FC2 = 32
N_POOL = 8


def _selu(v):
    # selu(x) = scale * (max(0,x) + min(0, alpha*(exp(x)-1)))
    return SELU_SCALE * jnp.where(
        v > 0, v, SELU_ALPHA * (jnp.exp(jnp.minimum(v, 0.0)) - 1.0))


# ----------------------------------------------------------------------------
# One fused kernel for the whole Generator: grid over batch tiles, all blocks
# chained inside the kernel (intermediate samples stay in VMEM).
# ----------------------------------------------------------------------------
def _generator_kernel(x_ref, ltri_ref, tie_ref,
                      w1t_ref, b1_ref, w2t_ref, b2_ref,
                      wf1_ref, bf1_ref, wf2t_ref, bf2_ref, wf3t_ref, bf3_ref,
                      y_ref, th_ref):
    BB, W, C = x_ref.shape
    n_blocks = w1t_ref.shape[0]

    # Loop-invariant selection constants (built once in the wrapper, loaded once here,
    # reused by every fused block).
    #   ltri[w, j] = 1 iff j < w  (for the exclusive prefix-count matmul)
    #   tie[j, w, 0] = 1 iff j < w (tie-break mask, already in the 4-D compare layout)
    ltri_b = jnp.broadcast_to(ltri_ref[...], (BB, W, W))          # [BB, W, W]
    tie4 = (tie_ref[...] > 0.5)[None]                             # [1, W_j, W_w, 1]

    x_cur = x_ref[...]                                            # [BB, W, 3]
    theta12 = jnp.zeros((BB, 12), jnp.float32)

    for blk in range(n_blocks):        # blocks fused: sample never leaves VMEM between blocks
        x2 = x_cur.reshape(BB * W, C)
        # conv1: Conv2d(1->64, kernel (1,3)) over the channel axis == [BB*W,3]@[3,64] + SELU
        h1 = _selu(jnp.dot(x2, w1t_ref[blk],
                           preferred_element_type=jnp.float32) + b1_ref[blk])    # [BB*W, 64]
        # conv2: Conv2d(64->128, kernel (1,1)) == [BB*W,64]@[64,128] + SELU
        h2 = _selu(jnp.dot(h1, w2t_ref[blk],
                           preferred_element_type=jnp.float32) + b2_ref[blk])    # [BB*W, 128]
        h2b = h2.reshape(BB, W, N_CONV2)                                          # [BB, W, 128]

        # ---- K-max pooling: top-8 per channel along W, kept in positional order ----
        # One-shot rank (replaces 8 dependent argmax reductions):
        #   rank[b,w,c] = #{j : h2[b,j,c] > h2[b,w,c]} + #{j < w : h2[b,j,c] == h2[b,w,c]}
        # (ties broken toward lower index, matching lax.top_k; counts are exact small ints)
        vals_j = h2b[:, :, None, :]                               # [BB, W_j, 1,   128]
        vals_w = h2b[:, None, :, :]                               # [BB, 1,   W_w, 128]
        before = (vals_j > vals_w) | ((vals_j == vals_w) & tie4)  # [BB, W_j, W_w, 128]
        rank = jnp.sum(before.astype(jnp.float32), axis=1)        # [BB, W, 128]
        sel = (rank < float(N_POOL)).astype(jnp.float32)          # 0/1 top-8 mask

        # pool-slot index = exclusive prefix count of selected rows (triangular matmul, MXU)
        cum = jnp.einsum("bwj,bjc->bwc", ltri_b, sel,
                         preferred_element_type=jnp.float32)      # [BB, W, 128], ints 0..8

        # scatter the 8 selected values per channel into a lane-dense [BB, 8*128] slab
        h2m = h2b * sel
        pooled = [jnp.sum(jnp.where(cum == float(p), h2m, 0.0), axis=1)   # [BB, 128]
                  for p in range(N_POOL)]
        flat = jnp.concatenate(pooled, axis=-1)                   # [BB, 1024] (order p*128+c)

        # fc_loc: three matmuls (fc1 weight rows were re-ordered in the wrapper to match
        # the p*128+c pooled layout, so this is a single [BB,1024]@[1024,64] dot)
        h3 = _selu(jnp.dot(flat, wf1_ref[blk],
                           preferred_element_type=jnp.float32) + bf1_ref[blk])   # [BB, 64]
        h4 = _selu(jnp.dot(h3, wf2t_ref[blk],
                           preferred_element_type=jnp.float32) + bf2_ref[blk])   # [BB, 32]
        theta12 = (jnp.dot(h4, wf3t_ref[blk],
                           preferred_element_type=jnp.float32) + bf3_ref[blk])   # [BB, 12]

        # affine transform y = [x | 1] @ theta (per sample), as lane-broadcast FMAs
        t0 = theta12[:, None, 0:3]                                # theta row 0   [BB, 1, 3]
        t1 = theta12[:, None, 3:6]
        t2 = theta12[:, None, 6:9]
        t3 = theta12[:, None, 9:12]
        x_cur = (x_cur[:, :, 0:1] * t0 + x_cur[:, :, 1:2] * t1
                 + x_cur[:, :, 2:3] * t2 + t3)                    # [BB, W, 3]

    y_ref[...] = x_cur
    th_ref[:, 0, :] = theta12            # theta of the last block (flat 12-vector per sample)


def generator_forward_pallas(x_nchw, block_params):
    """Fused Generator forward. x_nchw: [B, C=3, W, 1] -> (y [B, 3, W, 1], theta [B, 4, 3])."""
    B, C, W, _ = x_nchw.shape
    assert C == N_CHANNELS, "module is defined for 3 input channels (1x3 conv + 4x3 theta)"
    NB = len(block_params)
    x_bwc = jnp.transpose(x_nchw, (0, 3, 2, 1))[:, 0]             # [B, W, C]

    # Stack all blocks' weights along a leading block axis (block loop runs inside the kernel).
    stack = lambda k: jnp.stack([p[k] for p in block_params], axis=0)
    W1T, B1 = stack("w1t"), stack("b1")
    W2T, B2 = stack("w2t"), stack("b2")
    # fc1 weight rows re-ordered from PyTorch flatten order (c*8+p) to the kernel's
    # lane-dense pooled order (p*128+c), so fc1 is one matmul.
    WF1 = jnp.stack([p["wf1t"].reshape(N_CONV2, N_POOL, N_FC1)
                     .transpose(1, 0, 2).reshape(N_CONV2 * N_POOL, N_FC1)
                     for p in block_params], axis=0)
    BF1, WF2T, BF2 = stack("bf1"), stack("wf2t"), stack("bf2")
    WF3T, BF3 = stack("wf3t"), stack("bf3")

    # Batch tile: target ~256 MXU rows (BB*W), clamped by B and by keeping the one-shot-rank
    # intermediate [BB, W, W, 128] f32 within a few MiB of VMEM (v7x has only 64 MiB total).
    BB = max(1, min(max(1, 256 // W), B,
                    max(1, (8 << 20) // (W * W * N_CONV2 * 4))))
    B_pad = ((B + BB - 1) // BB) * BB
    if B_pad != B:
        x_bwc = jnp.pad(x_bwc, ((0, B_pad - B), (0, 0), (0, 0)))

    # Hoisted loop-invariant constants (grid steps are a sequential loop on one TC).
    r = jnp.arange(W, dtype=jnp.float32)
    ltri = (r[None, :] < r[:, None]).astype(jnp.float32)          # ltri[w, j] = 1 iff j < w
    tie = (r[:, None] < r[None, :]).astype(jnp.float32)[..., None]  # tie[j, w, 0] = 1 iff j < w

    c2 = lambda i: (0, 0)
    c3 = lambda i: (0, 0, 0)
    in_specs = [
        pl.BlockSpec((BB, W, C), lambda i: (i, 0, 0)),            # x (batch tile)
        pl.BlockSpec((W, W), c2),                                 # ltri
        pl.BlockSpec((W, W, 1), c3),                              # tie mask (4-D compare layout)
        pl.BlockSpec((NB, C, N_CONV1), c3),                       # conv1 weight^T, stacked
        pl.BlockSpec((NB, 1, N_CONV1), c3),                       # conv1 bias
        pl.BlockSpec((NB, N_CONV1, N_CONV2), c3),                 # conv2 weight^T
        pl.BlockSpec((NB, 1, N_CONV2), c3),                       # conv2 bias
        pl.BlockSpec((NB, N_CONV2 * N_POOL, N_FC1), c3),          # fc1 weight (re-ordered)
        pl.BlockSpec((NB, 1, N_FC1), c3),                         # fc1 bias
        pl.BlockSpec((NB, N_FC1, N_FC2), c3),                     # fc2 weight^T
        pl.BlockSpec((NB, 1, N_FC2), c3),                         # fc2 bias
        pl.BlockSpec((NB, N_FC2, 12), c3),                        # fc3 weight^T
        pl.BlockSpec((NB, 1, 12), c3),                            # fc3 bias
    ]
    # TODO(synk): for very large B*W a [C, BB*W] lane-dense output slab would avoid masked
    # stores; at these shapes the store cost is negligible so the natural layout is kept.
    out_specs = [
        pl.BlockSpec((BB, W, C), lambda i: (i, 0, 0)),            # transformed sample
        pl.BlockSpec((BB, 1, 12), lambda i: (i, 0, 0)),           # theta (flat, last block)
    ]
    out_shape = (jax.ShapeDtypeStruct((B_pad, W, C), jnp.float32),
                 jax.ShapeDtypeStruct((B_pad, 1, 12), jnp.float32))

    y_pad, th_pad = pl.pallas_call(
        _generator_kernel,
        out_shape=out_shape,
        grid_spec=pltpu.PrefetchScalarGridSpec(
            num_scalar_prefetch=0,
            grid=(B_pad // BB,),
            in_specs=in_specs,
            out_specs=out_specs),
        compiler_params=pltpu.CompilerParams(
            dimension_semantics=("parallel",)),   # independent batch tiles -> both TCs on v7x
    )(x_bwc, ltri, tie, W1T, B1, W2T, B2, WF1, BF1, WF2T, BF2, WF3T, BF3)

    y_bwc = y_pad[:B]
    theta = th_pad[:B, 0, :].reshape(B, 4, 3)
    y_nchw = jnp.transpose(y_bwc[:, None], (0, 3, 2, 1))          # back to [B, C, W, 1]
    return y_nchw, theta


# ----------------------------------------------------------------------------
# Pure-JAX reference (same math) for validation, plus parameter init.
# ----------------------------------------------------------------------------
def stb_block_ref(x_bwc, p):
    h1 = _selu(jnp.einsum("bwc,co->bwo", x_bwc, p["w1t"]) + p["b1"])
    h2 = _selu(jnp.einsum("bwk,ko->bwo", h1, p["w2t"]) + p["b2"])
    v = jnp.swapaxes(h2, 1, 2)                                    # [B, 128, W]
    idx = jnp.sort(jax.lax.top_k(v, N_POOL)[1], axis=-1)
    pooled = jnp.take_along_axis(v, idx, axis=-1)                 # [B, 128, 8]
    f = pooled.reshape(x_bwc.shape[0], -1)                        # [B, 1024] (flatten c*8+p)
    h3 = _selu(f @ p["wf1t"] + p["bf1"])
    h4 = _selu(h3 @ p["wf2t"] + p["bf2"])
    theta = (h4 @ p["wf3t"] + p["bf3"]).reshape(-1, 4, 3)
    # affine y = [x | 1] @ theta, written per theta-row (identical math to the matmul with
    # the augmented ones column; mirrors the kernel's element-wise formulation).
    y = (x_bwc[:, :, 0:1] * theta[:, None, 0, :]
         + x_bwc[:, :, 1:2] * theta[:, None, 1, :]
         + x_bwc[:, :, 2:3] * theta[:, None, 2, :]
         + theta[:, None, 3, :])
    return y, theta


def generator_forward_ref(x_nchw, block_params):
    # TODO(synk): PyTorch's nn.Sequential of tuple-returning blocks would crash for
    # n_blocks > 1; the intended stacking feeds the transformed sample into the next block
    # and returns the last block's theta, which is what both the kernel and this reference do.
    x_bwc = jnp.transpose(x_nchw, (0, 3, 2, 1))[:, 0]
    theta = None
    for p in block_params:
        x_bwc, theta = stb_block_ref(x_bwc, p)
    return jnp.transpose(x_bwc[:, None], (0, 3, 2, 1)), theta


def init_block_params(key):
    ks = jax.random.split(key, 9)
    return {
        "w1t": jax.random.normal(ks[0], (N_CHANNELS, N_CONV1), jnp.float32) / math.sqrt(3.0),
        "b1": jax.random.normal(ks[1], (1, N_CONV1), jnp.float32) * 0.1,
        "w2t": jax.random.normal(ks[2], (N_CONV1, N_CONV2), jnp.float32) / math.sqrt(64.0),
        "b2": jax.random.normal(ks[3], (1, N_CONV2), jnp.float32) * 0.1,
        "wf1t": jax.random.normal(ks[4], (N_CONV2 * N_POOL, N_FC1), jnp.float32) / math.sqrt(1024.0),
        "bf1": jax.random.normal(ks[5], (1, N_FC1), jnp.float32) * 0.1,
        "wf2t": jax.random.normal(ks[6], (N_FC1, N_FC2), jnp.float32) / math.sqrt(64.0),
        "bf2": jax.random.normal(ks[7], (1, N_FC2), jnp.float32) * 0.1,
        # fc_loc[4] is zero-weight + identity-affine bias in the PyTorch __init__; we keep the
        # zero weight and add a small bias perturbation so the affine path (and the chaining of
        # blocks) is exercised non-trivially in the test.
        "wf3t": jnp.zeros((N_FC2, 12), jnp.float32),
        "bf3": (jnp.array([[1, 0, 0, 0, 1, 0, 0, 0, 1, 0, 0, 0]], jnp.float32)
                + 0.2 * jax.random.normal(ks[8], (1, 12), jnp.float32)),
    }


if __name__ == "__main__":
    key = jax.random.PRNGKey(0)
    k_x, k_p = jax.random.split(key)

    B, W = 2, 16          # small shapes: batch=2, window=16, channels=3 (required by the 1x3 conv)
    n_blocks = 2
    x = jax.random.normal(k_x, (B, N_CHANNELS, W, 1), dtype=jnp.float32)   # PyTorch NCHW input
    params = [init_block_params(k) for k in jax.random.split(k_p, n_blocks)]

    y, theta = generator_forward_pallas(x, params)
    y = jax.block_until_ready(y)
    theta = jax.block_until_ready(theta)

    # validate against the pure-JAX reference
    y_ref, theta_ref = generator_forward_ref(x, params)
    assert y.shape == (B, N_CHANNELS, W, 1) and theta.shape == (B, 4, 3)
    assert jnp.allclose(y, y_ref, atol=1e-4, rtol=1e-4), "output mismatch vs reference"
    assert jnp.allclose(theta, theta_ref, atol=1e-4, rtol=1e-4), "theta mismatch vs reference"

    print("KERNEL_OK")
</pallas_src>

<mosaic_0001>
module attributes {stable_mosaic.version = 11 : i64} {
  func.func @_generator_kernel(%arg0: i32, %arg1: memref<2x16x3xf32, #tpu.memory_space<vmem>>, %arg2: memref<16x16xf32, #tpu.memory_space<vmem>>, %arg3: memref<16x16x1xf32, #tpu.memory_space<vmem>>, %arg4: memref<2x3x64xf32, #tpu.memory_space<vmem>>, %arg5: memref<2x1x64xf32, #tpu.memory_space<vmem>>, %arg6: memref<2x64x128xf32, #tpu.memory_space<vmem>>, %arg7: memref<2x1x128xf32, #tpu.memory_space<vmem>>, %arg8: memref<2x1024x64xf32, #tpu.memory_space<vmem>>, %arg9: memref<2x1x64xf32, #tpu.memory_space<vmem>>, %arg10: memref<2x64x32xf32, #tpu.memory_space<vmem>>, %arg11: memref<2x1x32xf32, #tpu.memory_space<vmem>>, %arg12: memref<2x32x12xf32, #tpu.memory_space<vmem>>, %arg13: memref<2x1x12xf32, #tpu.memory_space<vmem>>, %arg14: memref<2x16x3xf32, #tpu.memory_space<vmem>>, %arg15: memref<2x1x12xf32, #tpu.memory_space<vmem>>) attributes {dimension_semantics = [#tpu.dimension_semantics<parallel>], iteration_bounds = array<i64: 1>, scalar_prefetch = 0 : i64, scratch_operands = 0 : i64, tpu.core_type = #tpu.core_type<tc>, window_params = [{transform_indices = @transform_0, window_bounds = array<i64: 2, 16, 3>}, {pipeline_mode = #tpu.pipeline_mode<synchronous>, transform_indices = @transform_1, window_bounds = array<i64: 16, 16>}, {pipeline_mode = #tpu.pipeline_mode<synchronous>, transform_indices = @transform_2, window_bounds = array<i64: 16, 16, 1>}, {pipeline_mode = #tpu.pipeline_mode<synchronous>, transform_indices = @transform_3, window_bounds = array<i64: 2, 3, 64>}, {pipeline_mode = #tpu.pipeline_mode<synchronous>, transform_indices = @transform_4, window_bounds = array<i64: 2, 1, 64>}, {pipeline_mode = #tpu.pipeline_mode<synchronous>, transform_indices = @transform_5, window_bounds = array<i64: 2, 64, 128>}, {pipeline_mode = #tpu.pipeline_mode<synchronous>, transform_indices = @transform_6, window_bounds = array<i64: 2, 1, 128>}, {pipeline_mode = #tpu.pipeline_mode<synchronous>, transform_indices = @transform_7, window_bounds = array<i64: 2, 1024, 64>}, {pipeline_mode = #tpu.pipeline_mode<synchronous>, transform_indices = @transform_8, window_bounds = array<i64: 2, 1, 64>}, {pipeline_mode = #tpu.pipeline_mode<synchronous>, transform_indices = @transform_9, window_bounds = array<i64: 2, 64, 32>}, {pipeline_mode = #tpu.pipeline_mode<synchronous>, transform_indices = @transform_10, window_bounds = array<i64: 2, 1, 32>}, {pipeline_mode = #tpu.pipeline_mode<synchronous>, transform_indices = @transform_11, window_bounds = array<i64: 2, 32, 12>}, {pipeline_mode = #tpu.pipeline_mode<synchronous>, transform_indices = @transform_12, window_bounds = array<i64: 2, 1, 12>}, {transform_indices = @transform_13, window_bounds = array<i64: 2, 16, 3>}, {transform_indices = @transform_14, window_bounds = array<i64: 2, 1, 12>}]} {
    %c0 = arith.constant 0 : index
    %c0_0 = arith.constant 0 : index
    %0 = vector.load %arg2[%c0, %c0_0] : memref<16x16xf32, #tpu.memory_space<vmem>>, vector<16x16xf32>
    %1 = vector.shape_cast %0 : vector<16x16xf32> to vector<1x16x16xf32>
    %2 = vector.broadcast %1 : vector<1x16x16xf32> to vector<2x16x16xf32>
    %c0_1 = arith.constant 0 : index
    %c0_2 = arith.constant 0 : index
    %c0_3 = arith.constant 0 : index
    %3 = vector.load %arg3[%c0_1, %c0_2, %c0_3] : memref<16x16x1xf32, #tpu.memory_space<vmem>>, vector<16x16x1xf32>
    %cst = arith.constant 5.000000e-01 : f32
    %4 = vector.broadcast %cst : f32 to vector<16x16x1xf32>
    %5 = arith.cmpf ogt, %3, %4 : vector<16x16x1xf32>
    %6 = vector.shape_cast %5 : vector<16x16x1xi1> to vector<1x16x16x1xi1>
    %c0_4 = arith.constant 0 : index
    %c0_5 = arith.constant 0 : index
    %c0_6 = arith.constant 0 : index
    %7 = vector.load %arg1[%c0_4, %c0_5, %c0_6] : memref<2x16x3xf32, #tpu.memory_space<vmem>>, vector<2x16x3xf32>
    %8 = vector.shape_cast %7 : vector<2x16x3xf32> to vector<32x3xf32>
    %c0_7 = arith.constant 0 : index
    %c0_8 = arith.constant 0 : index
    %c0_9 = arith.constant 0 : index
    %9 = vector.load %arg4[%c0_7, %c0_8, %c0_9] : memref<2x3x64xf32, #tpu.memory_space<vmem>>, vector<1x3x64xf32>
    %10 = vector.shape_cast %9 : vector<1x3x64xf32> to vector<3x64xf32>
    %cst_10 = arith.constant dense<0.000000e+00> : vector<32x64xf32>
    %11 = tpu.matmul %8, %10, %cst_10 {dimension_numbers = #tpu.dot_dimension_numbers<[1], [0], [0], [1], [0, 0, 1, 1], [], []>} : vector<32x3xf32>, vector<3x64xf32>, vector<32x64xf32> -> vector<32x64xf32>
    %c0_11 = arith.constant 0 : index
    %c0_12 = arith.constant 0 : index
    %c0_13 = arith.constant 0 : index
    %12 = vector.load %arg5[%c0_11, %c0_12, %c0_13] : memref<2x1x64xf32, #tpu.memory_space<vmem>>, vector<1x1x64xf32>
    %13 = vector.shape_cast %12 : vector<1x1x64xf32> to vector<1x64xf32>
    %14 = vector.broadcast %13 : vector<1x64xf32> to vector<32x64xf32>
    %15 = arith.addf %11, %14 : vector<32x64xf32>
    %cst_14 = arith.constant 0.000000e+00 : f32
    %16 = vector.broadcast %cst_14 : f32 to vector<32x64xf32>
    %17 = arith.cmpf ogt, %15, %16 : vector<32x64xf32>
    %cst_15 = arith.constant 0.000000e+00 : f32
    %18 = vector.broadcast %cst_15 : f32 to vector<32x64xf32>
    %19 = arith.minimumf %15, %18 : vector<32x64xf32>
    %20 = math.exp %19 : vector<32x64xf32>
    %cst_16 = arith.constant 1.000000e+00 : f32
    %21 = vector.broadcast %cst_16 : f32 to vector<32x64xf32>
    %22 = arith.subf %20, %21 : vector<32x64xf32>
    %cst_17 = arith.constant 1.67326319 : f32
    %23 = vector.broadcast %cst_17 : f32 to vector<32x64xf32>
    %24 = arith.mulf %23, %22 : vector<32x64xf32>
    %25 = arith.select %17, %15, %24 : vector<32x64xi1>, vector<32x64xf32>
    %cst_18 = arith.constant 1.05070102 : f32
    %26 = vector.broadcast %cst_18 : f32 to vector<32x64xf32>
    %27 = arith.mulf %26, %25 : vector<32x64xf32>
    %c0_19 = arith.constant 0 : index
    %c0_20 = arith.constant 0 : index
    %c0_21 = arith.constant 0 : index
    %28 = vector.load %arg6[%c0_19, %c0_20, %c0_21] : memref<2x64x128xf32, #tpu.memory_space<vmem>>, vector<1x64x128xf32>
    %29 = vector.shape_cast %28 : vector<1x64x128xf32> to vector<64x128xf32>
    %cst_22 = arith.constant dense<0.000000e+00> : vector<32x128xf32>
    %30 = tpu.matmul %27, %29, %cst_22 {dimension_numbers = #tpu.dot_dimension_numbers<[1], [0], [0], [1], [0, 0, 1, 1], [], []>} : vector<32x64xf32>, vector<64x128xf32>, vector<32x128xf32> -> vector<32x128xf32>
    %c0_23 = arith.constant 0 : index
    %c0_24 = arith.constant 0 : index
    %c0_25 = arith.constant 0 : index
    %31 = vector.load %arg7[%c0_23, %c0_24, %c0_25] : memref<2x1x128xf32, #tpu.memory_space<vmem>>, vector<1x1x128xf32>
    %32 = vector.shape_cast %31 : vector<1x1x128xf32> to vector<1x128xf32>
    %33 = vector.broadcast %32 : vector<1x128xf32> to vector<32x128xf32>
    %34 = arith.addf %30, %33 : vector<32x128xf32>
    %cst_26 = arith.constant 0.000000e+00 : f32
    %35 = vector.broadcast %cst_26 : f32 to vector<32x128xf32>
    %36 = arith.cmpf ogt, %34, %35 : vector<32x128xf32>
    %cst_27 = arith.constant 0.000000e+00 : f32
    %37 = vector.broadcast %cst_27 : f32 to vector<32x128xf32>
    %38 = arith.minimumf %34, %37 : vector<32x128xf32>
    %39 = math.exp %38 : vector<32x128xf32>
    %cst_28 = arith.constant 1.000000e+00 : f32
    %40 = vector.broadcast %cst_28 : f32 to vector<32x128xf32>
    %41 = arith.subf %39, %40 : vector<32x128xf32>
    %cst_29 = arith.constant 1.67326319 : f32
    %42 = vector.broadcast %cst_29 : f32 to vector<32x128xf32>
    %43 = arith.mulf %42, %41 : vector<32x128xf32>
    %44 = arith.select %36, %34, %43 : vector<32x128xi1>, vector<32x128xf32>
    %cst_30 = arith.constant 1.05070102 : f32
    %45 = vector.broadcast %cst_30 : f32 to vector<32x128xf32>
    %46 = arith.mulf %45, %44 : vector<32x128xf32>
    %47 = vector.shape_cast %46 : vector<32x128xf32> to vector<2x16x128xf32>
    %48 = vector.shape_cast %47 : vector<2x16x128xf32> to vector<2x16x1x128xf32>
    %49 = vector.shape_cast %47 : vector<2x16x128xf32> to vector<2x1x16x128xf32>
    %50 = vector.broadcast %48 : vector<2x16x1x128xf32> to vector<2x16x16x128xf32>
    %51 = vector.broadcast %49 : vector<2x1x16x128xf32> to vector<2x16x16x128xf32>
    %52 = arith.cmpf ogt, %50, %51 : vector<2x16x16x128xf32>
    %53 = vector.broadcast %48 : vector<2x16x1x128xf32> to vector<2x16x16x128xf32>
    %54 = vector.broadcast %49 : vector<2x1x16x128xf32> to vector<2x16x16x128xf32>
    %55 = arith.cmpf oeq, %53, %54 : vector<2x16x16x128xf32>
    %56 = vector.broadcast %6 : vector<1x16x16x1xi1> to vector<2x16x16x128xi1>
    %57 = arith.andi %55, %56 : vector<2x16x16x128xi1>
    %58 = arith.ori %52, %57 : vector<2x16x16x128xi1>
    %59 = arith.extui %58 : vector<2x16x16x128xi1> to vector<2x16x16x128xi32>
    %60 = arith.sitofp %59 : vector<2x16x16x128xi32> to vector<2x16x16x128xf32>
    %cst_31 = arith.constant dense<0.000000e+00> : vector<2x16x128xf32>
    %61 = vector.multi_reduction <add>, %60, %cst_31 [1] : vector<2x16x16x128xf32> to vector<2x16x128xf32>
    %cst_32 = arith.constant 8.000000e+00 : f32
    %62 = vector.broadcast %cst_32 : f32 to vector<2x16x128xf32>
    %63 = arith.cmpf olt, %61, %62 : vector<2x16x128xf32>
    %64 = arith.extui %63 : vector<2x16x128xi1> to vector<2x16x128xi32>
    %65 = arith.sitofp %64 : vector<2x16x128xi32> to vector<2x16x128xf32>
    "tpu.trace_start"() <{level = 10 : i32, message = "bwj,bjc->bwc"}> : () -> ()
    %cst_33 = arith.constant dense<0.000000e+00> : vector<2x16x128xf32>
    %66 = tpu.matmul %2, %65, %cst_33 {dimension_numbers = #tpu.dot_dimension_numbers<[2], [1], [1], [2], [0, 0, 0, 1, 1, 2], [0], [0]>} : vector<2x16x16xf32>, vector<2x16x128xf32>, vector<2x16x128xf32> -> vector<2x16x128xf32>
    "tpu.trace_stop"() : () -> ()
    %67 = arith.mulf %47, %65 : vector<2x16x128xf32>
    %cst_34 = arith.constant 0.000000e+00 : f32
    %68 = vector.broadcast %cst_34 : f32 to vector<2x16x128xf32>
    %69 = arith.cmpf oeq, %66, %68 : vector<2x16x128xf32>
    %cst_35 = arith.constant 0.000000e+00 : f32
    %70 = vector.broadcast %cst_35 : f32 to vector<2x16x128xf32>
    %71 = arith.select %69, %67, %70 : vector<2x16x128xi1>, vector<2x16x128xf32>
    %cst_36 = arith.constant dense<0.000000e+00> : vector<2x128xf32>
    %72 = vector.multi_reduction <add>, %71, %cst_36 [1] : vector<2x16x128xf32> to vector<2x128xf32>
    %cst_37 = arith.constant 1.000000e+00 : f32
    %73 = vector.broadcast %cst_37 : f32 to vector<2x16x128xf32>
    %74 = arith.cmpf oeq, %66, %73 : vector<2x16x128xf32>
    %cst_38 = arith.constant 0.000000e+00 : f32
    %75 = vector.broadcast %cst_38 : f32 to vector<2x16x128xf32>
    %76 = arith.select %74, %67, %75 : vector<2x16x128xi1>, vector<2x16x128xf32>
    %cst_39 = arith.constant dense<0.000000e+00> : vector<2x128xf32>
    %77 = vector.multi_reduction <add>, %76, %cst_39 [1] : vector<2x16x128xf32> to vector<2x128xf32>
    %cst_40 = arith.constant 2.000000e+00 : f32
    %78 = vector.broadcast %cst_40 : f32 to vector<2x16x128xf32>
    %79 = arith.cmpf oeq, %66, %78 : vector<2x16x128xf32>
    %cst_41 = arith.constant 0.000000e+00 : f32
    %80 = vector.broadcast %cst_41 : f32 to vector<2x16x128xf32>
    %81 = arith.select %79, %67, %80 : vector<2x16x128xi1>, vector<2x16x128xf32>
    %cst_42 = arith.constant dense<0.000000e+00> : vector<2x128xf32>
    %82 = vector.multi_reduction <add>, %81, %cst_42 [1] : vector<2x16x128xf32> to vector<2x128xf32>
    %cst_43 = arith.constant 3.000000e+00 : f32
    %83 = vector.broadcast %cst_43 : f32 to vector<2x16x128xf32>
    %84 = arith.cmpf oeq, %66, %83 : vector<2x16x128xf32>
    %cst_44 = arith.constant 0.000000e+00 : f32
    %85 = vector.broadcast %cst_44 : f32 to vector<2x16x128xf32>
    %86 = arith.select %84, %67, %85 : vector<2x16x128xi1>, vector<2x16x128xf32>
    %cst_45 = arith.constant dense<0.000000e+00> : vector<2x128xf32>
    %87 = vector.multi_reduction <add>, %86, %cst_45 [1] : vector<2x16x128xf32> to vector<2x128xf32>
    %cst_46 = arith.constant 4.000000e+00 : f32
    %88 = vector.broadcast %cst_46 : f32 to vector<2x16x128xf32>
    %89 = arith.cmpf oeq, %66, %88 : vector<2x16x128xf32>
    %cst_47 = arith.constant 0.000000e+00 : f32
    %90 = vector.broadcast %cst_47 : f32 to vector<2x16x128xf32>
    %91 = arith.select %89, %67, %90 : vector<2x16x128xi1>, vector<2x16x128xf32>
    %cst_48 = arith.constant dense<0.000000e+00> : vector<2x128xf32>
    %92 = vector.multi_reduction <add>, %91, %cst_48 [1] : vector<2x16x128xf32> to vector<2x128xf32>
    %cst_49 = arith.constant 5.000000e+00 : f32
    %93 = vector.broadcast %cst_49 : f32 to vector<2x16x128xf32>
    %94 = arith.cmpf oeq, %66, %93 : vector<2x16x128xf32>
    %cst_50 = arith.constant 0.000000e+00 : f32
    %95 = vector.broadcast %cst_50 : f32 to vector<2x16x128xf32>
    %96 = arith.select %94, %67, %95 : vector<2x16x128xi1>, vector<2x16x128xf32>
    %cst_51 = arith.constant dense<0.000000e+00> : vector<2x128xf32>
    %97 = vector.multi_reduction <add>, %96, %cst_51 [1] : vector<2x16x128xf32> to vector<2x128xf32>
    %cst_52 = arith.constant 6.000000e+00 : f32
    %98 = vector.broadcast %cst_52 : f32 to vector<2x16x128xf32>
    %99 = arith.cmpf oeq, %66, %98 : vector<2x16x128xf32>
    %cst_53 = arith.constant 0.000000e+00 : f32
    %100 = vector.broadcast %cst_53 : f32 to vector<2x16x128xf32>
    %101 = arith.select %99, %67, %100 : vector<2x16x128xi1>, vector<2x16x128xf32>
    %cst_54 = arith.constant dense<0.000000e+00> : vector<2x128xf32>
    %102 = vector.multi_reduction <add>, %101, %cst_54 [1] : vector<2x16x128xf32> to vector<2x128xf32>
    %cst_55 = arith.constant 7.000000e+00 : f32
    %103 = vector.broadcast %cst_55 : f32 to vector<2x16x128xf32>
    %104 = arith.cmpf oeq, %66, %103 : vector<2x16x128xf32>
    %cst_56 = arith.constant 0.000000e+00 : f32
    %105 = vector.broadcast %cst_56 : f32 to vector<2x16x128xf32>
    %106 = arith.select %104, %67, %105 : vector<2x16x128xi1>, vector<2x16x128xf32>
    %cst_57 = arith.constant dense<0.000000e+00> : vector<2x128xf32>
    %107 = vector.multi_reduction <add>, %106, %cst_57 [1] : vector<2x16x128xf32> to vector<2x128xf32>
    %108 = tpu.concatenate %72, %77, %82, %87, %92, %97, %102, %107 in 1 : vector<2x128xf32>, vector<2x128xf32>, vector<2x128xf32>, vector<2x128xf32>, vector<2x128xf32>, vector<2x128xf32>, vector<2x128xf32>, vector<2x128xf32> -> vector<2x1024xf32>
    %c0_58 = arith.constant 0 : index
    %c0_59 = arith.constant 0 : index
    %c0_60 = arith.constant 0 : index
    %109 = vector.load %arg8[%c0_58, %c0_59, %c0_60] : memref<2x1024x64xf32, #tpu.memory_space<vmem>>, vector<1x1024x64xf32>
    %110 = vector.shape_cast %109 : vector<1x1024x64xf32> to vector<1024x64xf32>
    %cst_61 = arith.constant dense<0.000000e+00> : vector<2x64xf32>
    %111 = tpu.matmul %108, %110, %cst_61 {dimension_numbers = #tpu.dot_dimension_numbers<[1], [0], [0], [1], [0, 0, 1, 1], [], []>} : vector<2x1024xf32>, vector<1024x64xf32>, vector<2x64xf32> -> vector<2x64xf32>
    %c0_62 = arith.constant 0 : index
    %c0_63 = arith.constant 0 : index
    %c0_64 = arith.constant 0 : index
    %112 = vector.load %arg9[%c0_62, %c0_63, %c0_64] : memref<2x1x64xf32, #tpu.memory_space<vmem>>, vector<1x1x64xf32>
    %113 = vector.shape_cast %112 : vector<1x1x64xf32> to vector<1x64xf32>
    %114 = vector.broadcast %113 : vector<1x64xf32> to vector<2x64xf32>
    %115 = arith.addf %111, %114 : vector<2x64xf32>
    %cst_65 = arith.constant 0.000000e+00 : f32
    %116 = vector.broadcast %cst_65 : f32 to vector<2x64xf32>
    %117 = arith.cmpf ogt, %115, %116 : vector<2x64xf32>
    %cst_66 = arith.constant 0.000000e+00 : f32
    %118 = vector.broadcast %cst_66 : f32 to vector<2x64xf32>
    %119 = arith.minimumf %115, %118 : vector<2x64xf32>
    %120 = math.exp %119 : vector<2x64xf32>
    %cst_67 = arith.constant 1.000000e+00 : f32
    %121 = vector.broadcast %cst_67 : f32 to vector<2x64xf32>
    %122 = arith.subf %120, %121 : vector<2x64xf32>
    %cst_68 = arith.constant 1.67326319 : f32
    %123 = vector.broadcast %cst_68 : f32 to vector<2x64xf32>
    %124 = arith.mulf %123, %122 : vector<2x64xf32>
    %125 = arith.select %117, %115, %124 : vector<2x64xi1>, vector<2x64xf32>
    %cst_69 = arith.constant 1.05070102 : f32
    %126 = vector.broadcast %cst_69 : f32 to vector<2x64xf32>
    %127 = arith.mulf %126, %125 : vector<2x64xf32>
    %c0_70 = arith.constant 0 : index
    %c0_71 = arith.constant 0 : index
    %c0_72 = arith.constant 0 : index
    %128 = vector.load %arg10[%c0_70, %c0_71, %c0_72] : memref<2x64x32xf32, #tpu.memory_space<vmem>>, vector<1x64x32xf32>
    %129 = vector.shape_cast %128 : vector<1x64x32xf32> to vector<64x32xf32>
    %cst_73 = arith.constant dense<0.000000e+00> : vector<2x32xf32>
    %130 = tpu.matmul %127, %129, %cst_73 {dimension_numbers = #tpu.dot_dimension_numbers<[1], [0], [0], [1], [0, 0, 1, 1], [], []>} : vector<2x64xf32>, vector<64x32xf32>, vector<2x32xf32> -> vector<2x32xf32>
    %c0_74 = arith.constant 0 : index
    %c0_75 = arith.constant 0 : index
    %c0_76 = arith.constant 0 : index
    %131 = vector.load %arg11[%c0_74, %c0_75, %c0_76] : memref<2x1x32xf32, #tpu.memory_space<vmem>>, vector<1x1x32xf32>
    %132 = vector.shape_cast %131 : vector<1x1x32xf32> to vector<1x32xf32>
    %133 = vector.broadcast %132 : vector<1x32xf32> to vector<2x32xf32>
    %134 = arith.addf %130, %133 : vector<2x32xf32>
    %cst_77 = arith.constant 0.000000e+00 : f32
    %135 = vector.broadcast %cst_77 : f32 to vector<2x32xf32>
    %136 = arith.cmpf ogt, %134, %135 : vector<2x32xf32>
    %cst_78 = arith.constant 0.000000e+00 : f32
    %137 = vector.broadcast %cst_78 : f32 to vector<2x32xf32>
    %138 = arith.minimumf %134, %137 : vector<2x32xf32>
    %139 = math.exp %138 : vector<2x32xf32>
    %cst_79 = arith.constant 1.000000e+00 : f32
    %140 = vector.broadcast %cst_79 : f32 to vector<2x32xf32>
    %141 = arith.subf %139, %140 : vector<2x32xf32>
    %cst_80 = arith.constant 1.67326319 : f32
    %142 = vector.broadcast %cst_80 : f32 to vector<2x32xf32>
    %143 = arith.mulf %142, %141 : vector<2x32xf32>
    %144 = arith.select %136, %134, %143 : vector<2x32xi1>, vector<2x32xf32>
    %cst_81 = arith.constant 1.05070102 : f32
    %145 = vector.broadcast %cst_81 : f32 to vector<2x32xf32>
    %146 = arith.mulf %145, %144 : vector<2x32xf32>
    %c0_82 = arith.constant 0 : index
    %c0_83 = arith.constant 0 : index
    %c0_84 = arith.constant 0 : index
    %147 = vector.load %arg12[%c0_82, %c0_83, %c0_84] : memref<2x32x12xf32, #tpu.memory_space<vmem>>, vector<1x32x12xf32>
    %148 = vector.shape_cast %147 : vector<1x32x12xf32> to vector<32x12xf32>
    %cst_85 = arith.constant dense<0.000000e+00> : vector<2x12xf32>
    %149 = tpu.matmul %146, %148, %cst_85 {dimension_numbers = #tpu.dot_dimension_numbers<[1], [0], [0], [1], [0, 0, 1, 1], [], []>} : vector<2x32xf32>, vector<32x12xf32>, vector<2x12xf32> -> vector<2x12xf32>
    %c0_86 = arith.constant 0 : index
    %c0_87 = arith.constant 0 : index
    %c0_88 = arith.constant 0 : index
    %150 = vector.load %arg13[%c0_86, %c0_87, %c0_88] : memref<2x1x12xf32, #tpu.memory_space<vmem>>, vector<1x1x12xf32>
    %151 = vector.shape_cast %150 : vector<1x1x12xf32> to vector<1x12xf32>
    %152 = vector.broadcast %151 : vector<1x12xf32> to vector<2x12xf32>
    %153 = arith.addf %149, %152 : vector<2x12xf32>
    %154 = vector.extract_strided_slice %153 {offsets = [0, 0], sizes = [2, 3], strides = [1, 1]} : vector<2x12xf32> to vector<2x3xf32>
    %155 = vector.shape_cast %154 : vector<2x3xf32> to vector<2x1x3xf32>
    %156 = vector.extract_strided_slice %153 {offsets = [0, 3], sizes = [2, 3], strides = [1, 1]} : vector<2x12xf32> to vector<2x3xf32>
    %157 = vector.shape_cast %156 : vector<2x3xf32> to vector<2x1x3xf32>
    %158 = vector.extract_strided_slice %153 {offsets = [0, 6], sizes = [2, 3], strides = [1, 1]} : vector<2x12xf32> to vector<2x3xf32>
    %159 = vector.shape_cast %158 : vector<2x3xf32> to vector<2x1x3xf32>
    %160 = vector.extract_strided_slice %153 {offsets = [0, 9], sizes = [2, 3], strides = [1, 1]} : vector<2x12xf32> to vector<2x3xf32>
    %161 = vector.shape_cast %160 : vector<2x3xf32> to vector<2x1x3xf32>
    %162 = vector.extract_strided_slice %7 {offsets = [0, 0, 0], sizes = [2, 16, 1], strides = [1, 1, 1]} : vector<2x16x3xf32> to vector<2x16x1xf32>
    %163 = vector.broadcast %162 : vector<2x16x1xf32> to vector<2x16x3xf32>
    %164 = vector.broadcast %155 : vector<2x1x3xf32> to vector<2x16x3xf32>
    %165 = arith.mulf %163, %164 : vector<2x16x3xf32>
    %166 = vector.extract_strided_slice %7 {offsets = [0, 0, 1], sizes = [2, 16, 1], strides = [1, 1, 1]} : vector<2x16x3xf32> to vector<2x16x1xf32>
    %167 = vector.broadcast %166 : vector<2x16x1xf32> to vector<2x16x3xf32>
    %168 = vector.broadcast %157 : vector<2x1x3xf32> to vector<2x16x3xf32>
    %169 = arith.mulf %167, %168 : vector<2x16x3xf32>
    %170 = arith.addf %165, %169 : vector<2x16x3xf32>
    %171 = vector.extract_strided_slice %7 {offsets = [0, 0, 2], sizes = [2, 16, 1], strides = [1, 1, 1]} : vector<2x16x3xf32> to vector<2x16x1xf32>
    %172 = vector.broadcast %171 : vector<2x16x1xf32> to vector<2x16x3xf32>
    %173 = vector.broadcast %159 : vector<2x1x3xf32> to vector<2x16x3xf32>
    %174 = arith.mulf %172, %173 : vector<2x16x3xf32>
    %175 = arith.addf %170, %174 : vector<2x16x3xf32>
    %176 = vector.broadcast %161 : vector<2x1x3xf32> to vector<2x16x3xf32>
    %177 = arith.addf %175, %176 : vector<2x16x3xf32>
    %178 = vector.shape_cast %177 : vector<2x16x3xf32> to vector<32x3xf32>
    %c1 = arith.constant 1 : index
    %c0_89 = arith.constant 0 : index
    %c0_90 = arith.constant 0 : index
    %179 = vector.load %arg4[%c1, %c0_89, %c0_90] : memref<2x3x64xf32, #tpu.memory_space<vmem>>, vector<1x3x64xf32>
    %180 = vector.shape_cast %179 : vector<1x3x64xf32> to vector<3x64xf32>
    %cst_91 = arith.constant dense<0.000000e+00> : vector<32x64xf32>
    %181 = tpu.matmul %178, %180, %cst_91 {dimension_numbers = #tpu.dot_dimension_numbers<[1], [0], [0], [1], [0, 0, 1, 1], [], []>} : vector<32x3xf32>, vector<3x64xf32>, vector<32x64xf32> -> vector<32x64xf32>
    %c1_92 = arith.constant 1 : index
    %c0_93 = arith.constant 0 : index
    %c0_94 = arith.constant 0 : index
    %182 = vector.load %arg5[%c1_92, %c0_93, %c0_94] : memref<2x1x64xf32, #tpu.memory_space<vmem>>, vector<1x1x64xf32>
    %183 = vector.shape_cast %182 : vector<1x1x64xf32> to vector<1x64xf32>
    %184 = vector.broadcast %183 : vector<1x64xf32> to vector<32x64xf32>
    %185 = arith.addf %181, %184 : vector<32x64xf32>
    %cst_95 = arith.constant 0.000000e+00 : f32
    %186 = vector.broadcast %cst_95 : f32 to vector<32x64xf32>
    %187 = arith.cmpf ogt, %185, %186 : vector<32x64xf32>
    %cst_96 = arith.constant 0.000000e+00 : f32
    %188 = vector.broadcast %cst_96 : f32 to vector<32x64xf32>
    %189 = arith.minimumf %185, %188 : vector<32x64xf32>
    %190 = math.exp %189 : vector<32x64xf32>
    %cst_97 = arith.constant 1.000000e+00 : f32
    %191 = vector.broadcast %cst_97 : f32 to vector<32x64xf32>
    %192 = arith.subf %190, %191 : vector<32x64xf32>
    %cst_98 = arith.constant 1.67326319 : f32
    %193 = vector.broadcast %cst_98 : f32 to vector<32x64xf32>
    %194 = arith.mulf %193, %192 : vector<32x64xf32>
    %195 = arith.select %187, %185, %194 : vector<32x64xi1>, vector<32x64xf32>
    %cst_99 = arith.constant 1.05070102 : f32
    %196 = vector.broadcast %cst_99 : f32 to vector<32x64xf32>
    %197 = arith.mulf %196, %195 : vector<32x64xf32>
    %c1_100 = arith.constant 1 : index
    %c0_101 = arith.constant 0 : index
    %c0_102 = arith.constant 0 : index
    %198 = vector.load %arg6[%c1_100, %c0_101, %c0_102] : memref<2x64x128xf32, #tpu.memory_space<vmem>>, vector<1x64x128xf32>
    %199 = vector.shape_cast %198 : vector<1x64x128xf32> to vector<64x128xf32>
    %cst_103 = arith.constant dense<0.000000e+00> : vector<32x128xf32>
    %200 = tpu.matmul %197, %199, %cst_103 {dimension_numbers = #tpu.dot_dimension_numbers<[1], [0], [0], [1], [0, 0, 1, 1], [], []>} : vector<32x64xf32>, vector<64x128xf32>, vector<32x128xf32> -> vector<32x128xf32>
    %c1_104 = arith.constant 1 : index
    %c0_105 = arith.constant 0 : index
    %c0_106 = arith.constant 0 : index
    %201 = vector.load %arg7[%c1_104, %c0_105, %c0_106] : memref<2x1x128xf32, #tpu.memory_space<vmem>>, vector<1x1x128xf32>
    %202 = vector.shape_cast %201 : vector<1x1x128xf32> to vector<1x128xf32>
    %203 = vector.broadcast %202 : vector<1x128xf32> to vector<32x128xf32>
    %204 = arith.addf %200, %203 : vector<32x128xf32>
    %cst_107 = arith.constant 0.000000e+00 : f32
    %205 = vector.broadcast %cst_107 : f32 to vector<32x128xf32>
    %206 = arith.cmpf ogt, %204, %205 : vector<32x128xf32>
    %cst_108 = arith.constant 0.000000e+00 : f32
    %207 = vector.broadcast %cst_108 : f32 to vector<32x128xf32>
    %208 = arith.minimumf %204, %207 : vector<32x128xf32>
    %209 = math.exp %208 : vector<32x128xf32>
    %cst_109 = arith.constant 1.000000e+00 : f32
    %210 = vector.broadcast %cst_109 : f32 to vector<32x128xf32>
    %211 = arith.subf %209, %210 : vector<32x128xf32>
    %cst_110 = arith.constant 1.67326319 : f32
    %212 = vector.broadcast %cst_110 : f32 to vector<32x128xf32>
    %213 = arith.mulf %212, %211 : vector<32x128xf32>
    %214 = arith.select %206, %204, %213 : vector<32x128xi1>, vector<32x128xf32>
    %cst_111 = arith.constant 1.05070102 : f32
    %215 = vector.broadcast %cst_111 : f32 to vector<32x128xf32>
    %216 = arith.mulf %215, %214 : vector<32x128xf32>
    %217 = vector.shape_cast %216 : vector<32x128xf32> to vector<2x16x128xf32>
    %218 = vector.shape_cast %217 : vector<2x16x128xf32> to vector<2x16x1x128xf32>
    %219 = vector.shape_cast %217 : vector<2x16x128xf32> to vector<2x1x16x128xf32>
    %220 = vector.broadcast %218 : vector<2x16x1x128xf32> to vector<2x16x16x128xf32>
    %221 = vector.broadcast %219 : vector<2x1x16x128xf32> to vector<2x16x16x128xf32>
    %222 = arith.cmpf ogt, %220, %221 : vector<2x16x16x128xf32>
    %223 = vector.broadcast %218 : vector<2x16x1x128xf32> to vector<2x16x16x128xf32>
    %224 = vector.broadcast %219 : vector<2x1x16x128xf32> to vector<2x16x16x128xf32>
    %225 = arith.cmpf oeq, %223, %224 : vector<2x16x16x128xf32>
    %226 = vector.broadcast %6 : vector<1x16x16x1xi1> to vector<2x16x16x128xi1>
    %227 = arith.andi %225, %226 : vector<2x16x16x128xi1>
    %228 = arith.ori %222, %227 : vector<2x16x16x128xi1>
    %229 = arith.extui %228 : vector<2x16x16x128xi1> to vector<2x16x16x128xi32>
    %230 = arith.sitofp %229 : vector<2x16x16x128xi32> to vector<2x16x16x128xf32>
    %cst_112 = arith.constant dense<0.000000e+00> : vector<2x16x128xf32>
    %231 = vector.multi_reduction <add>, %230, %cst_112 [1] : vector<2x16x16x128xf32> to vector<2x16x128xf32>
    %cst_113 = arith.constant 8.000000e+00 : f32
    %232 = vector.broadcast %cst_113 : f32 to vector<2x16x128xf32>
    %233 = arith.cmpf olt, %231, %232 : vector<2x16x128xf32>
    %234 = arith.extui %233 : vector<2x16x128xi1> to vector<2x16x128xi32>
    %235 = arith.sitofp %234 : vector<2x16x128xi32> to vector<2x16x128xf32>
    "tpu.trace_start"() <{level = 10 : i32, message = "bwj,bjc->bwc"}> : () -> ()
    %cst_114 = arith.constant dense<0.000000e+00> : vector<2x16x128xf32>
    %236 = tpu.matmul %2, %235, %cst_114 {dimension_numbers = #tpu.dot_dimension_numbers<[2], [1], [1], [2], [0, 0, 0, 1, 1, 2], [0], [0]>} : vector<2x16x16xf32>, vector<2x16x128xf32>, vector<2x16x128xf32> -> vector<2x16x128xf32>
    "tpu.trace_stop"() : () -> ()
    %237 = arith.mulf %217, %235 : vector<2x16x128xf32>
    %cst_115 = arith.constant 0.000000e+00 : f32
    %238 = vector.broadcast %cst_115 : f32 to vector<2x16x128xf32>
    %239 = arith.cmpf oeq, %236, %238 : vector<2x16x128xf32>
    %cst_116 = arith.constant 0.000000e+00 : f32
    %240 = vector.broadcast %cst_116 : f32 to vector<2x16x128xf32>
    %241 = arith.select %239, %237, %240 : vector<2x16x128xi1>, vector<2x16x128xf32>
    %cst_117 = arith.constant dense<0.000000e+00> : vector<2x128xf32>
    %242 = vector.multi_reduction <add>, %241, %cst_117 [1] : vector<2x16x128xf32> to vector<2x128xf32>
    %cst_118 = arith.constant 1.000000e+00 : f32
    %243 = vector.broadcast %cst_118 : f32 to vector<2x16x128xf32>
    %244 = arith.cmpf oeq, %236, %243 : vector<2x16x128xf32>
    %cst_119 = arith.constant 0.000000e+00 : f32
    %245 = vector.broadcast %cst_119 : f32 to vector<2x16x128xf32>
    %246 = arith.select %244, %237, %245 : vector<2x16x128xi1>, vector<2x16x128xf32>
    %cst_120 = arith.constant dense<0.000000e+00> : vector<2x128xf32>
    %247 = vector.multi_reduction <add>, %246, %cst_120 [1] : vector<2x16x128xf32> to vector<2x128xf32>
    %cst_121 = arith.constant 2.000000e+00 : f32
    %248 = vector.broadcast %cst_121 : f32 to vector<2x16x128xf32>
    %249 = arith.cmpf oeq, %236, %248 : vector<2x16x128xf32>
    %cst_122 = arith.constant 0.000000e+00 : f32
    %250 = vector.broadcast %cst_122 : f32 to vector<2x16x128xf32>
    %251 = arith.select %249, %237, %250 : vector<2x16x128xi1>, vector<2x16x128xf32>
    %cst_123 = arith.constant dense<0.000000e+00> : vector<2x128xf32>
    %252 = vector.multi_reduction <add>, %251, %cst_123 [1] : vector<2x16x128xf32> to vector<2x128xf32>
    %cst_124 = arith.constant 3.000000e+00 : f32
    %253 = vector.broadcast %cst_124 : f32 to vector<2x16x128xf32>
    %254 = arith.cmpf oeq, %236, %253 : vector<2x16x128xf32>
    %cst_125 = arith.constant 0.000000e+00 : f32
    %255 = vector.broadcast %cst_125 : f32 to vector<2x16x128xf32>
    %256 = arith.select %254, %237, %255 : vector<2x16x128xi1>, vector<2x16x128xf32>
    %cst_126 = arith.constant dense<0.000000e+00> : vector<2x128xf32>
    %257 = vector.multi_reduction <add>, %256, %cst_126 [1] : vector<2x16x128xf32> to vector<2x128xf32>
    %cst_127 = arith.constant 4.000000e+00 : f32
    %258 = vector.broadcast %cst_127 : f32 to vector<2x16x128xf32>
    %259 = arith.cmpf oeq, %236, %258 : vector<2x16x128xf32>
    %cst_128 = arith.constant 0.000000e+00 : f32
    %260 = vector.broadcast %cst_128 : f32 to vector<2x16x128xf32>
    %261 = arith.select %259, %237, %260 : vector<2x16x128xi1>, vector<2x16x128xf32>
    %cst_129 = arith.constant dense<0.000000e+00> : vector<2x128xf32>
    %262 = vector.multi_reduction <add>, %261, %cst_129 [1] : vector<2x16x128xf32> to vector<2x128xf32>
    %cst_130 = arith.constant 5.000000e+00 : f32
    %263 = vector.broadcast %cst_130 : f32 to vector<2x16x128xf32>
    %264 = arith.cmpf oeq, %236, %263 : vector<2x16x128xf32>
    %cst_131 = arith.constant 0.000000e+00 : f32
    %265 = vector.broadcast %cst_131 : f32 to vector<2x16x128xf32>
    %266 = arith.select %264, %237, %265 : vector<2x16x128xi1>, vector<2x16x128xf32>
    %cst_132 = arith.constant dense<0.000000e+00> : vector<2x128xf32>
    %267 = vector.multi_reduction <add>, %266, %cst_132 [1] : vector<2x16x128xf32> to vector<2x128xf32>
    %cst_133 = arith.constant 6.000000e+00 : f32
    %268 = vector.broadcast %cst_133 : f32 to vector<2x16x128xf32>
    %269 = arith.cmpf oeq, %236, %268 : vector<2x16x128xf32>
    %cst_134 = arith.constant 0.000000e+00 : f32
    %270 = vector.broadcast %cst_134 : f32 to vector<2x16x128xf32>
    %271 = arith.select %269, %237, %270 : vector<2x16x128xi1>, vector<2x16x128xf32>
    %cst_135 = arith.constant dense<0.000000e+00> : vector<2x128xf32>
    %272 = vector.multi_reduction <add>, %271, %cst_135 [1] : vector<2x16x128xf32> to vector<2x128xf32>
    %cst_136 = arith.constant 7.000000e+00 : f32
    %273 = vector.broadcast %cst_136 : f32 to vector<2x16x128xf32>
    %274 = arith.cmpf oeq, %236, %273 : vector<2x16x128xf32>
    %cst_137 = arith.constant 0.000000e+00 : f32
    %275 = vector.broadcast %cst_137 : f32 to vector<2x16x128xf32>
    %276 = arith.select %274, %237, %275 : vector<2x16x128xi1>, vector<2x16x128xf32>
    %cst_138 = arith.constant dense<0.000000e+00> : vector<2x128xf32>
    %277 = vector.multi_reduction <add>, %276, %cst_138 [1] : vector<2x16x128xf32> to vector<2x128xf32>
    %278 = tpu.concatenate %242, %247, %252, %257, %262, %267, %272, %277 in 1 : vector<2x128xf32>, vector<2x128xf32>, vector<2x128xf32>, vector<2x128xf32>, vector<2x128xf32>, vector<2x128xf32>, vector<2x128xf32>, vector<2x128xf32> -> vector<2x1024xf32>
    %c1_139 = arith.constant 1 : index
    %c0_140 = arith.constant 0 : index
    %c0_141 = arith.constant 0 : index
    %279 = vector.load %arg8[%c1_139, %c0_140, %c0_141] : memref<2x1024x64xf32, #tpu.memory_space<vmem>>, vector<1x1024x64xf32>
    %280 = vector.shape_cast %279 : vector<1x1024x64xf32> to vector<1024x64xf32>
    %cst_142 = arith.constant dense<0.000000e+00> : vector<2x64xf32>
    %281 = tpu.matmul %278, %280, %cst_142 {dimension_numbers = #tpu.dot_dimension_numbers<[1], [0], [0], [1], [0, 0, 1, 1], [], []>} : vector<2x1024xf32>, vector<1024x64xf32>, vector<2x64xf32> -> vector<2x64xf32>
    %c1_143 = arith.constant 1 : index
    %c0_144 = arith.constant 0 : index
    %c0_145 = arith.constant 0 : index
    %282 = vector.load %arg9[%c1_143, %c0_144, %c0_145] : memref<2x1x64xf32, #tpu.memory_space<vmem>>, vector<1x1x64xf32>
    %283 = vector.shape_cast %282 : vector<1x1x64xf32> to vector<1x64xf32>
    %284 = vector.broadcast %283 : vector<1x64xf32> to vector<2x64xf32>
    %285 = arith.addf %281, %284 : vector<2x64xf32>
    %cst_146 = arith.constant 0.000000e+00 : f32
    %286 = vector.broadcast %cst_146 : f32 to vector<2x64xf32>
    %287 = arith.cmpf ogt, %285, %286 : vector<2x64xf32>
    %cst_147 = arith.constant 0.000000e+00 : f32
    %288 = vector.broadcast %cst_147 : f32 to vector<2x64xf32>
    %289 = arith.minimumf %285, %288 : vector<2x64xf32>
    %290 = math.exp %289 : vector<2x64xf32>
    %cst_148 = arith.constant 1.000000e+00 : f32
    %291 = vector.broadcast %cst_148 : f32 to vector<2x64xf32>
    %292 = arith.subf %290, %291 : vector<2x64xf32>
    %cst_149 = arith.constant 1.67326319 : f32
    %293 = vector.broadcast %cst_149 : f32 to vector<2x64xf32>
    %294 = arith.mulf %293, %292 : vector<2x64xf32>
    %295 = arith.select %287, %285, %294 : vector<2x64xi1>, vector<2x64xf32>
    %cst_150 = arith.constant 1.05070102 : f32
    %296 = vector.broadcast %cst_150 : f32 to vector<2x64xf32>
    %297 = arith.mulf %296, %295 : vector<2x64xf32>
    %c1_151 = arith.constant 1 : index
    %c0_152 = arith.constant 0 : index
    %c0_153 = arith.constant 0 : index
    %298 = vector.load %arg10[%c1_151, %c0_152, %c0_153] : memref<2x64x32xf32, #tpu.memory_space<vmem>>, vector<1x64x32xf32>
    %299 = vector.shape_cast %298 : vector<1x64x32xf32> to vector<64x32xf32>
    %cst_154 = arith.constant dense<0.000000e+00> : vector<2x32xf32>
    %300 = tpu.matmul %297, %299, %cst_154 {dimension_numbers = #tpu.dot_dimension_numbers<[1], [0], [0], [1], [0, 0, 1, 1], [], []>} : vector<2x64xf32>, vector<64x32xf32>, vector<2x32xf32> -> vector<2x32xf32>
    %c1_155 = arith.constant 1 : index
    %c0_156 = arith.constant 0 : index
    %c0_157 = arith.constant 0 : index
    %301 = vector.load %arg11[%c1_155, %c0_156, %c0_157] : memref<2x1x32xf32, #tpu.memory_space<vmem>>, vector<1x1x32xf32>
    %302 = vector.shape_cast %301 : vector<1x1x32xf32> to vector<1x32xf32>
    %303 = vector.broadcast %302 : vector<1x32xf32> to vector<2x32xf32>
    %304 = arith.addf %300, %303 : vector<2x32xf32>
    %cst_158 = arith.constant 0.000000e+00 : f32
    %305 = vector.broadcast %cst_158 : f32 to vector<2x32xf32>
    %306 = arith.cmpf ogt, %304, %305 : vector<2x32xf32>
    %cst_159 = arith.constant 0.000000e+00 : f32
    %307 = vector.broadcast %cst_159 : f32 to vector<2x32xf32>
    %308 = arith.minimumf %304, %307 : vector<2x32xf32>
    %309 = math.exp %308 : vector<2x32xf32>
    %cst_160 = arith.constant 1.000000e+00 : f32
    %310 = vector.broadcast %cst_160 : f32 to vector<2x32xf32>
    %311 = arith.subf %309, %310 : vector<2x32xf32>
    %cst_161 = arith.constant 1.67326319 : f32
    %312 = vector.broadcast %cst_161 : f32 to vector<2x32xf32>
    %313 = arith.mulf %312, %311 : vector<2x32xf32>
    %314 = arith.select %306, %304, %313 : vector<2x32xi1>, vector<2x32xf32>
    %cst_162 = arith.constant 1.05070102 : f32
    %315 = vector.broadcast %cst_162 : f32 to vector<2x32xf32>
    %316 = arith.mulf %315, %314 : vector<2x32xf32>
    %c1_163 = arith.constant 1 : index
    %c0_164 = arith.constant 0 : index
    %c0_165 = arith.constant 0 : index
    %317 = vector.load %arg12[%c1_163, %c0_164, %c0_165] : memref<2x32x12xf32, #tpu.memory_space<vmem>>, vector<1x32x12xf32>
    %318 = vector.shape_cast %317 : vector<1x32x12xf32> to vector<32x12xf32>
    %cst_166 = arith.constant dense<0.000000e+00> : vector<2x12xf32>
    %319 = tpu.matmul %316, %318, %cst_166 {dimension_numbers = #tpu.dot_dimension_numbers<[1], [0], [0], [1], [0, 0, 1, 1], [], []>} : vector<2x32xf32>, vector<32x12xf32>, vector<2x12xf32> -> vector<2x12xf32>
    %c1_167 = arith.constant 1 : index
    %c0_168 = arith.constant 0 : index
    %c0_169 = arith.constant 0 : index
    %320 = vector.load %arg13[%c1_167, %c0_168, %c0_169] : memref<2x1x12xf32, #tpu.memory_space<vmem>>, vector<1x1x12xf32>
    %321 = vector.shape_cast %320 : vector<1x1x12xf32> to vector<1x12xf32>
    %322 = vector.broadcast %321 : vector<1x12xf32> to vector<2x12xf32>
    %323 = arith.addf %319, %322 : vector<2x12xf32>
    %324 = vector.extract_strided_slice %323 {offsets = [0, 0], sizes = [2, 3], strides = [1, 1]} : vector<2x12xf32> to vector<2x3xf32>
    %325 = vector.shape_cast %324 : vector<2x3xf32> to vector<2x1x3xf32>
    %326 = vector.extract_strided_slice %323 {offsets = [0, 3], sizes = [2, 3], strides = [1, 1]} : vector<2x12xf32> to vector<2x3xf32>
    %327 = vector.shape_cast %326 : vector<2x3xf32> to vector<2x1x3xf32>
    %328 = vector.extract_strided_slice %323 {offsets = [0, 6], sizes = [2, 3], strides = [1, 1]} : vector<2x12xf32> to vector<2x3xf32>
    %329 = vector.shape_cast %328 : vector<2x3xf32> to vector<2x1x3xf32>
    %330 = vector.extract_strided_slice %323 {offsets = [0, 9], sizes = [2, 3], strides = [1, 1]} : vector<2x12xf32> to vector<2x3xf32>
    %331 = vector.shape_cast %330 : vector<2x3xf32> to vector<2x1x3xf32>
    %332 = vector.extract_strided_slice %177 {offsets = [0, 0, 0], sizes = [2, 16, 1], strides = [1, 1, 1]} : vector<2x16x3xf32> to vector<2x16x1xf32>
    %333 = vector.broadcast %332 : vector<2x16x1xf32> to vector<2x16x3xf32>
    %334 = vector.broadcast %325 : vector<2x1x3xf32> to vector<2x16x3xf32>
    %335 = arith.mulf %333, %334 : vector<2x16x3xf32>
    %336 = vector.extract_strided_slice %177 {offsets = [0, 0, 1], sizes = [2, 16, 1], strides = [1, 1, 1]} : vector<2x16x3xf32> to vector<2x16x1xf32>
    %337 = vector.broadcast %336 : vector<2x16x1xf32> to vector<2x16x3xf32>
    %338 = vector.broadcast %327 : vector<2x1x3xf32> to vector<2x16x3xf32>
    %339 = arith.mulf %337, %338 : vector<2x16x3xf32>
    %340 = arith.addf %335, %339 : vector<2x16x3xf32>
    %341 = vector.extract_strided_slice %177 {offsets = [0, 0, 2], sizes = [2, 16, 1], strides = [1, 1, 1]} : vector<2x16x3xf32> to vector<2x16x1xf32>
    %342 = vector.broadcast %341 : vector<2x16x1xf32> to vector<2x16x3xf32>
    %343 = vector.broadcast %329 : vector<2x1x3xf32> to vector<2x16x3xf32>
    %344 = arith.mulf %342, %343 : vector<2x16x3xf32>
    %345 = arith.addf %340, %344 : vector<2x16x3xf32>
    %346 = vector.broadcast %331 : vector<2x1x3xf32> to vector<2x16x3xf32>
    %347 = arith.addf %345, %346 : vector<2x16x3xf32>
    %c0_170 = arith.constant 0 : index
    %c0_171 = arith.constant 0 : index
    %c0_172 = arith.constant 0 : index
    %348 = vector.load %arg14[%c0_170, %c0_171, %c0_172] : memref<2x16x3xf32, #tpu.memory_space<vmem>>, vector<2x16x3xf32>
    tpu.vector_store %arg14[%c0_170, %c0_171, %c0_172], %347 {strides = array<i32>} : memref<2x16x3xf32, #tpu.memory_space<vmem>>, vector<2x16x3xf32>,
    %c0_173 = arith.constant 0 : index
    %c0_174 = arith.constant 0 : index
    %c0_175 = arith.constant 0 : index
    %349 = vector.load %arg15[%c0_173, %c0_174, %c0_175] : memref<2x1x12xf32, #tpu.memory_space<vmem>>, vector<2x1x12xf32>
    %350 = vector.shape_cast %349 : vector<2x1x12xf32> to vector<2x12xf32>
    %351 = vector.shape_cast %323 : vector<2x12xf32> to vector<2x1x12xf32>
    tpu.vector_store %arg15[%c0_173, %c0_174, %c0_175], %351 {strides = array<i32>} : memref<2x1x12xf32, #tpu.memory_space<vmem>>, vector<2x1x12xf32>,
    return
  }
  func.func @transform_0(%arg0: i32) -> (i32, i32, i32) {
    %c0_i32 = arith.constant 0 : i32
    %c0_i32_0 = arith.constant 0 : i32
    %c0_i32_1 = arith.constant 0 : i32
    return %arg0, %c0_i32, %c0_i32_0 : i32, i32, i32
  }
  func.func @transform_1(%arg0: i32) -> (i32, i32) {
    %c0_i32 = arith.constant 0 : i32
    %c0_i32_0 = arith.constant 0 : i32
    %c0_i32_1 = arith.constant 0 : i32
    return %c0_i32, %c0_i32_0 : i32, i32
  }
  func.func @transform_2(%arg0: i32) -> (i32, i32, i32) {
    %c0_i32 = arith.constant 0 : i32
    %c0_i32_0 = arith.constant 0 : i32
    %c0_i32_1 = arith.constant 0 : i32
    %c0_i32_2 = arith.constant 0 : i32
    return %c0_i32, %c0_i32_0, %c0_i32_1 : i32, i32, i32
  }
  func.func @transform_3(%arg0: i32) -> (i32, i32, i32) {
    %c0_i32 = arith.constant 0 : i32
    %c0_i32_0 = arith.constant 0 : i32
    %c0_i32_1 = arith.constant 0 : i32
    %c0_i32_2 = arith.constant 0 : i32
    return %c0_i32, %c0_i32_0, %c0_i32_1 : i32, i32, i32
  }
  func.func @transform_4(%arg0: i32) -> (i32, i32, i32) {
    %c0_i32 = arith.constant 0 : i32
    %c0_i32_0 = arith.constant 0 : i32
    %c0_i32_1 = arith.constant 0 : i32
    %c0_i32_2 = arith.constant 0 : i32
    return %c0_i32, %c0_i32_0, %c0_i32_1 : i32, i32, i32
  }
  func.func @transform_5(%arg0: i32) -> (i32, i32, i32) {
    %c0_i32 = arith.constant 0 : i32
    %c0_i32_0 = arith.constant 0 : i32
    %c0_i32_1 = arith.constant 0 : i32
    %c0_i32_2 = arith.constant 0 : i32
    return %c0_i32, %c0_i32_0, %c0_i32_1 : i32, i32, i32
  }
  func.func @transform_6(%arg0: i32) -> (i32, i32, i32) {
    %c0_i32 = arith.constant 0 : i32
    %c0_i32_0 = arith.constant 0 : i32
    %c0_i32_1 = arith.constant 0 : i32
    %c0_i32_2 = arith.constant 0 : i32
    return %c0_i32, %c0_i32_0, %c0_i32_1 : i32, i32, i32
  }
  func.func @transform_7(%arg0: i32) -> (i32, i32, i32) {
    %c0_i32 = arith.constant 0 : i32
    %c0_i32_0 = arith.constant 0 : i32
    %c0_i32_1 = arith.constant 0 : i32
    %c0_i32_2 = arith.constant 0 : i32
    return %c0_i32, %c0_i32_0, %c0_i32_1 : i32, i32, i32
  }
  func.func @transform_8(%arg0: i32) -> (i32, i32, i32) {
    %c0_i32 = arith.constant 0 : i32
    %c0_i32_0 = arith.constant 0 : i32
    %c0_i32_1 = arith.constant 0 : i32
    %c0_i32_2 = arith.constant 0 : i32
    return %c0_i32, %c0_i32_0, %c0_i32_1 : i32, i32, i32
  }
  func.func @transform_9(%arg0: i32) -> (i32, i32, i32) {
    %c0_i32 = arith.constant 0 : i32
    %c0_i32_0 = arith.constant 0 : i32
    %c0_i32_1 = arith.constant 0 : i32
    %c0_i32_2 = arith.constant 0 : i32
    return %c0_i32, %c0_i32_0, %c0_i32_1 : i32, i32, i32
  }
  func.func @transform_10(%arg0: i32) -> (i32, i32, i32) {
    %c0_i32 = arith.constant 0 : i32
    %c0_i32_0 = arith.constant 0 : i32
    %c0_i32_1 = arith.constant 0 : i32
    %c0_i32_2 = arith.constant 0 : i32
    return %c0_i32, %c0_i32_0, %c0_i32_1 : i32, i32, i32
  }
  func.func @transform_11(%arg0: i32) -> (i32, i32, i32) {
    %c0_i32 = arith.constant 0 : i32
    %c0_i32_0 = arith.constant 0 : i32
    %c0_i32_1 = arith.constant 0 : i32
    %c0_i32_2 = arith.constant 0 : i32
    return %c0_i32, %c0_i32_0, %c0_i32_1 : i32, i32, i32
  }
  func.func @transform_12(%arg0: i32) -> (i32, i32, i32) {
    %c0_i32 = arith.constant 0 : i32
    %c0_i32_0 = arith.constant 0 : i32
    %c0_i32_1 = arith.constant 0 : i32
    %c0_i32_2 = arith.constant 0 : i32
    return %c0_i32, %c0_i32_0, %c0_i32_1 : i32, i32, i32
  }
  func.func @transform_13(%arg0: i32) -> (i32, i32, i32) {
    %c0_i32 = arith.constant 0 : i32
    %c0_i32_0 = arith.constant 0 : i32
    %c0_i32_1 = arith.constant 0 : i32
    return %arg0, %c0_i32, %c0_i32_0 : i32, i32, i32
  }
  func.func @transform_14(%arg0: i32) -> (i32, i32, i32) {
    %c0_i32 = arith.constant 0 : i32
    %c0_i32_0 = arith.constant 0 : i32
    %c0_i32_1 = arith.constant 0 : i32
    return %arg0, %c0_i32, %c0_i32_0 : i32, i32, i32
  }
}

</mosaic_0001>

<llo_original>
// kernel: tpu_custom_call.1
$region0: #{tpu_custom_call.1}
  #allocation0 [shape = 'u32[]', space=smem, size = 0x4, offset = 0x4, fixed_abs, tag = 'smem constant byte address 0x4 - core index']
  #allocation1 [shape = 'u32[144,128]{1,0:T(1,128)}', space=vmem, size = 0x12000, scoped, tag = 'internal scratch']
  %s0 = inlined_call_operand.vmem [shape: f32[2,16,3], index: 0, kind: input, shape index: {}]
  %s1 = inlined_call_operand.vmem [shape: f32[16,16], index: 1, kind: input, shape index: {}]
  %s2 = inlined_call_operand.vmem [shape: f32[16,16,1], index: 2, kind: input, shape index: {}]
  %s3 = inlined_call_operand.vmem [shape: f32[2,3,64], index: 3, kind: input, shape index: {}]
  %s4 = inlined_call_operand.vmem [shape: f32[2,1,64], index: 4, kind: input, shape index: {}]
  %s5 = inlined_call_operand.vmem [shape: f32[2,64,128], index: 5, kind: input, shape index: {}]
  %s6 = inlined_call_operand.vmem [shape: f32[2,1,128], index: 6, kind: input, shape index: {}]
  %s7 = inlined_call_operand.vmem [shape: f32[2,1024,64], index: 7, kind: input, shape index: {}]
  %s8 = inlined_call_operand.vmem [shape: f32[2,1,64], index: 8, kind: input, shape index: {}]
  %s9 = inlined_call_operand.vmem [shape: f32[2,64,32], index: 9, kind: input, shape index: {}]
  %s10 = inlined_call_operand.vmem [shape: f32[2,1,32], index: 10, kind: input, shape index: {}]
  %s11 = inlined_call_operand.vmem [shape: f32[2,32,12], index: 11, kind: input, shape index: {}]
  %s12 = inlined_call_operand.vmem [shape: f32[2,1,12], index: 12, kind: input, shape index: {}]
  %s13 = inlined_call_operand.vmem [shape: f32[2,16,3], index: 13, kind: output, shape index: {0}]
  %s14 = inlined_call_operand.hbm [shape: f32[2,1,12], index: 14, kind: output, shape index: {1}]
  %15 = xla_tuple %s13, %s14
  %s16 = sld [smem:[#allocation0]]
  $region70: #{tpu_custom_call.1} parent=0
    _
  %s18 = ssub.s32 1, %s16
  %s19 = scalar_select 0, %s18, %s16
  $region1: #{tpu_custom_call.1} parent=0
    #allocation2 [shape = 'u8[1024]{0}', space=vmem, size = 0x400, scoped, tag = 'output window, operand 1, single buffered']
    #allocation3 [shape = 's32[1]{0}', space=sflag, size = 0x4, scoped, tag = 'scoped memory for tpu_custom_call.1']
    %20 = vsyncpa [#allocation3], 0
    // Predicated region
    $region2: #{tpu_custom_call.1} parent=1 // pred_check
      _
    $region3: #{tpu_custom_call.1} parent=1 // pred_check_branch
      %22 = sbr.rel (0) target = $region5
    $region4: #{tpu_custom_call.1} parent=1 // pred_region
      _
    $region5: #{tpu_custom_call.1} parent=1 // pred_fallthru
      _
    // Predicated region
    $region6: #{tpu_custom_call.1} parent=1 // pred_check
      _
    $region7: #{tpu_custom_call.1} parent=1 // pred_check_branch
      %24 = sbr.rel (0) target = $region9
    $region8: #{tpu_custom_call.1} parent=1 // pred_region
      _
    $region9: #{tpu_custom_call.1} parent=1 // pred_fallthru
      _
    // Predicated region
    $region10: #{tpu_custom_call.1} parent=1 // pred_check
      _
    $region11: #{tpu_custom_call.1} parent=1 // pred_check_branch
      %26 = sbr.rel (0) target = $region13
    $region12: #{tpu_custom_call.1} parent=1 // pred_region
      _
    $region13: #{tpu_custom_call.1} parent=1 // pred_fallthru
      _
    // Predicated region
    $region14: #{tpu_custom_call.1} parent=1 // pred_check
      _
    $region15: #{tpu_custom_call.1} parent=1 // pred_check_branch
      %28 = sbr.rel (0) target = $region17
    $region16: #{tpu_custom_call.1} parent=1 // pred_region
      _
    $region17: #{tpu_custom_call.1} parent=1 // pred_fallthru
      _
    // Predicated region
    $region18: #{tpu_custom_call.1} parent=1 // pred_check
      _
    $region19: #{tpu_custom_call.1} parent=1 // pred_check_branch
      %30 = sbr.rel (0) target = $region21
    $region20: #{tpu_custom_call.1} parent=1 // pred_region
      _
    $region21: #{tpu_custom_call.1} parent=1 // pred_fallthru
      _
    // Predicated region
    $region22: #{tpu_custom_call.1} parent=1 // pred_check
      _
    $region23: #{tpu_custom_call.1} parent=1 // pred_check_branch
      %32 = sbr.rel (0) target = $region25
    $region24: #{tpu_custom_call.1} parent=1 // pred_region
      _
    $region25: #{tpu_custom_call.1} parent=1 // pred_fallthru
      _
    // Predicated region
    $region26: #{tpu_custom_call.1} parent=1 // pred_check
      _
    $region27: #{tpu_custom_call.1} parent=1 // pred_check_branch
      %34 = sbr.rel (0) target = $region29
    $region28: #{tpu_custom_call.1} parent=1 // pred_region
      _
    $region29: #{tpu_custom_call.1} parent=1 // pred_fallthru
      _
    // Predicated region
    $region30: #{tpu_custom_call.1} parent=1 // pred_check
      _
    $region31: #{tpu_custom_call.1} parent=1 // pred_check_branch
      %36 = sbr.rel (0) target = $region33
    $region32: #{tpu_custom_call.1} parent=1 // pred_region
      _
    $region33: #{tpu_custom_call.1} parent=1 // pred_fallthru
      _
    // Predicated region
    $region34: #{tpu_custom_call.1} parent=1 // pred_check
      _
    $region35: #{tpu_custom_call.1} parent=1 // pred_check_branch
      %38 = sbr.rel (0) target = $region37
    $region36: #{tpu_custom_call.1} parent=1 // pred_region
      _
    $region37: #{tpu_custom_call.1} parent=1 // pred_fallthru
      _
    // Predicated region
    $region38: #{tpu_custom_call.1} parent=1 // pred_check
      _
    $region39: #{tpu_custom_call.1} parent=1 // pred_check_branch
      %40 = sbr.rel (0) target = $region41
    $region40: #{tpu_custom_call.1} parent=1 // pred_region
      _
    $region41: #{tpu_custom_call.1} parent=1 // pred_fallthru
      _
    // Predicated region
    $region42: #{tpu_custom_call.1} parent=1 // pred_check
      _
    $region43: #{tpu_custom_call.1} parent=1 // pred_check_branch
      %42 = sbr.rel (0) target = $region45
    $region44: #{tpu_custom_call.1} parent=1 // pred_region
      _
    $region45: #{tpu_custom_call.1} parent=1 // pred_fallthru
      _
    // Predicated region
    $region46: #{tpu_custom_call.1} parent=1 // pred_check
      _
    $region47: #{tpu_custom_call.1} parent=1 // pred_check_branch
      %44 = sbr.rel (0) target = $region49
    $region48: #{tpu_custom_call.1} parent=1 // pred_region
      _
    $region49: #{tpu_custom_call.1} parent=1 // pred_fallthru
      _
    // Predicated region
    $region50: #{tpu_custom_call.1} parent=1 // pred_check
      _
    $region51: #{tpu_custom_call.1} parent=1 // pred_check_branch
      %46 = sbr.rel (0) target = $region53
    $region52: #{tpu_custom_call.1} parent=1 // pred_region
      _
    $region53: #{tpu_custom_call.1} parent=1 // pred_fallthru
      _
    %v47 = vld [vmem:[%s1] sm:$0xff]
    %v48 = vld [vmem:[%s1 + $0x8] sm:$0xff]
    %v49 = vld [vmem:[%s2] sm:$0xff]
    %v50 = vld [vmem:[%s2 + $0x8] sm:$0xff]
    %v51 = vld [vmem:[%s2 + $0x10] sm:$0xff]
    %v52 = vld [vmem:[%s2 + $0x18] sm:$0xff]
    %v53 = vld [vmem:[%s2 + $0x20] sm:$0xff]
    %v54 = vld [vmem:[%s2 + $0x28] sm:$0xff]
    %v55 = vld [vmem:[%s2 + $0x30] sm:$0xff]
    %v56 = vld [vmem:[%s2 + $0x38] sm:$0xff]
    %v57 = vld [vmem:[%s2 + $0x40] sm:$0xff]
    %v58 = vld [vmem:[%s2 + $0x48] sm:$0xff]
    %v59 = vld [vmem:[%s2 + $0x50] sm:$0xff]
    %v60 = vld [vmem:[%s2 + $0x58] sm:$0xff]
    %v61 = vld [vmem:[%s2 + $0x60] sm:$0xff]
    %v62 = vld [vmem:[%s2 + $0x68] sm:$0xff]
    %v63 = vld [vmem:[%s2 + $0x70] sm:$0xff]
    %v64 = vld [vmem:[%s2 + $0x78] sm:$0xff]
    %v65 = vld [vmem:[%s2 + $0x80] sm:$0xff]
    %v66 = vld [vmem:[%s2 + $0x88] sm:$0xff]
    %v67 = vld [vmem:[%s2 + $0x90] sm:$0xff]
    %v68 = vld [vmem:[%s2 + $0x98] sm:$0xff]
    %v69 = vld [vmem:[%s2 + $0xa0] sm:$0xff]
    %v70 = vld [vmem:[%s2 + $0xa8] sm:$0xff]
    %v71 = vld [vmem:[%s2 + $0xb0] sm:$0xff]
    %v72 = vld [vmem:[%s2 + $0xb8] sm:$0xff]
    %v73 = vld [vmem:[%s2 + $0xc0] sm:$0xff]
    %v74 = vld [vmem:[%s2 + $0xc8] sm:$0xff]
    %v75 = vld [vmem:[%s2 + $0xd0] sm:$0xff]
    %v76 = vld [vmem:[%s2 + $0xd8] sm:$0xff]
    %v77 = vld [vmem:[%s2 + $0xe0] sm:$0xff]
    %v78 = vld [vmem:[%s2 + $0xe8] sm:$0xff]
    %v79 = vld [vmem:[%s2 + $0xf0] sm:$0xff]
    %v80 = vld [vmem:[%s2 + $0xf8] sm:$0xff]
    %vm81 = vcmp.gt.f32.partialorder %v49, 0.5
    %vm82 = vcmp.gt.f32.partialorder %v50, 0.5
    %vm83 = vcmp.gt.f32.partialorder %v51, 0.5
    %vm84 = vcmp.gt.f32.partialorder %v52, 0.5
    %vm85 = vcmp.gt.f32.partialorder %v53, 0.5
    %vm86 = vcmp.gt.f32.partialorder %v54, 0.5
    %vm87 = vcmp.gt.f32.partialorder %v55, 0.5
    %vm88 = vcmp.gt.f32.partialorder %v56, 0.5
    %vm89 = vcmp.gt.f32.partialorder %v57, 0.5
    %vm90 = vcmp.gt.f32.partialorder %v58, 0.5
    %vm91 = vcmp.gt.f32.partialorder %v59, 0.5
    %vm92 = vcmp.gt.f32.partialorder %v60, 0.5
    %vm93 = vcmp.gt.f32.partialorder %v61, 0.5
    %vm94 = vcmp.gt.f32.partialorder %v62, 0.5
    %vm95 = vcmp.gt.f32.partialorder %v63, 0.5
    %vm96 = vcmp.gt.f32.partialorder %v64, 0.5
    %vm97 = vcmp.gt.f32.partialorder %v65, 0.5
    %vm98 = vcmp.gt.f32.partialorder %v66, 0.5
    %vm99 = vcmp.gt.f32.partialorder %v67, 0.5
    %vm100 = vcmp.gt.f32.partialorder %v68, 0.5
    %vm101 = vcmp.gt.f32.partialorder %v69, 0.5
    %vm102 = vcmp.gt.f32.partialorder %v70, 0.5
    %vm103 = vcmp.gt.f32.partialorder %v71, 0.5
    %vm104 = vcmp.gt.f32.partialorder %v72, 0.5
    %vm105 = vcmp.gt.f32.partialorder %v73, 0.5
    %vm106 = vcmp.gt.f32.partialorder %v74, 0.5
    %vm107 = vcmp.gt.f32.partialorder %v75, 0.5
    %vm108 = vcmp.gt.f32.partialorder %v76, 0.5
    %vm109 = vcmp.gt.f32.partialorder %v77, 0.5
    %vm110 = vcmp.gt.f32.partialorder %v78, 0.5
    %vm111 = vcmp.gt.f32.partialorder %v79, 0.5
    %vm112 = vcmp.gt.f32.partialorder %v80, 0.5
    %v113 = vld [vmem:[%s0] sm:$0xff]
    %v114 = vld [vmem:[%s0 + $0x8] sm:$0xff]
    %v115 = vld [vmem:[%s0 + $0x10] sm:$0xff]
    %v116 = vld [vmem:[%s0 + $0x18] sm:$0xff]
    %v117 = vld [vmem:[%s3] sm:$0x7]
    %v118 = vld [vmem:[%s4] sm:$0x1]
    %v120 = vlaneseq
    %v121 = vshrl.u32 %v120, 7
    %v122 = vsub.s32 0, %v121
    %v123 = vrot.slane %v118, %v122
    %vm125 = vcmask 23552
    %v127 = vsel %vm125, %v113, 0
    %v130 = vsel %vm125, %v114, 0
    %v133 = vsel %vm125, %v115, 0
    %v136 = vsel %vm125, %v116, 0
    %vm138 = vcmask 1042432
    %v140 = vsel %vm138, %v117, 0
    %142 = vmatprep.subr.mxu0 0.0
    %143 = vmatpush1.msra.mxu0 0.0
    %144 = vmatprep.subr.mxu0 0.0
    %145 = vmatpush1.msra.mxu0 0.0
    %146 = vmatprep.subr.mxu0 0.0
    %147 = vmatpush1.msra.mxu0 0.0
    %148 = vmatprep.subr.mxu0 0.0
    %149 = vmatpush1.msra.mxu0 0.0
    %150 = vmatprep.subr.mxu0 0.0
    %151 = vmatpush1.msra.mxu0 0.0
    %152 = vmatprep.subr.mxu0 0.0
    %153 = vmatpush1.msra.mxu0 0.0
    %154 = vmatprep.subr.mxu0 0.0
    %155 = vmatpush1.msra.mxu0 0.0
    %156 = vmatprep.subr.mxu0 0.0
    %157 = vmatpush1.msra.mxu0 0.0
    %158 = vmatprep.subr.mxu0 0.0
    %159 = vmatpush1.msra.mxu0 0.0
    %160 = vmatprep.subr.mxu0 0.0
    %161 = vmatpush1.msra.mxu0 0.0
    %162 = vmatprep.subr.mxu0 0.0
    %163 = vmatpush1.msra.mxu0 0.0
    %164 = vmatprep.subr.mxu0 0.0
    %165 = vmatpush1.msra.mxu0 0.0
    %166 = vmatprep.subr.mxu0 0.0
    %167 = vmatpush1.msra.mxu0 0.0
    %168 = vmatprep.subr.mxu0 0.0
    %169 = vmatpush1.msra.mxu0 0.0
    %170 = vmatprep.subr.mxu0 0.0
    %171 = vmatpush1.msra.mxu0 0.0
    %172 = vmatprep.subr.mxu0 0.0
    %173 = vmatpush1.msra.mxu0 %v140
    %174 = vmatprep.subr.mxu0 0.0
    %175 = vmatpush2.msra.mxu0 0.0
    %176 = vmatprep.subr.mxu0 0.0
    %177 = vmatpush2.msra.mxu0 0.0
    %178 = vmatprep.subr.mxu0 0.0
    %179 = vmatpush2.msra.mxu0 0.0
    %180 = vmatprep.subr.mxu0 0.0
    %181 = vmatpush2.msra.mxu0 0.0
    %182 = vmatprep.subr.mxu0 0.0
    %183 = vmatpush2.msra.mxu0 0.0
    %184 = vmatprep.subr.mxu0 0.0
    %185 = vmatpush2.msra.mxu0 0.0
    %186 = vmatprep.subr.mxu0 0.0
    %187 = vmatpush2.msra.mxu0 0.0
    %188 = vmatprep.subr.mxu0 0.0
    %189 = vmatpush2.msra.mxu0 0.0
    %190 = vmatprep.subr.mxu0 0.0
    %191 = vmatpush2.msra.mxu0 0.0
    %192 = vmatprep.subr.mxu0 0.0
    %193 = vmatpush2.msra.mxu0 0.0
    %194 = vmatprep.subr.mxu0 0.0
    %195 = vmatpush2.msra.mxu0 0.0
    %196 = vmatprep.subr.mxu0 0.0
    %197 = vmatpush2.msra.mxu0 0.0
    %198 = vmatprep.subr.mxu0 0.0
    %199 = vmatpush2.msra.mxu0 0.0
    %200 = vmatprep.subr.mxu0 0.0
    %201 = vmatpush2.msra.mxu0 0.0
    %202 = vmatprep.subr.mxu0 0.0
    %203 = vmatpush2.msra.mxu0 0.0
    %204 = vmatprep.subr.mxu0 0.0
    %205 = vmatpush2.msra.mxu0 0.0
    %206 = vmatprep.mubr.f32.mxu0 0.0
    %207 = vmatmul.mubr.f32.gmra.mxu0 %v127
    %v208 = vpop.f32.mrf.mxu0
    %v209 = vadd.f32 %v123, %v208
    %v210 = vpop.f32.mrf.mxu0
    %211 = vmatprep.mubr.f32.mxu0 0.0
    %212 = vmatmul.mubr.f32.gmra.mxu0 %v130
    %v213 = vpop.f32.mrf.mxu0
    %v214 = vadd.f32 %v123, %v213
    %v215 = vpop.f32.mrf.mxu0
    %216 = vmatprep.mubr.f32.mxu0 0.0
    %217 = vmatmul.mubr.f32.gmra.mxu0 %v133
    %v218 = vpop.f32.mrf.mxu0
    %v219 = vadd.f32 %v123, %v218
    %v220 = vpop.f32.mrf.mxu0
    %221 = vmatprep.mubr.f32.mxu0 0.0
    %222 = vmatmul.mubr.f32.gmra.mxu0 %v136
    %v223 = vpop.f32.mrf.mxu0
    %v224 = vadd.f32 %v123, %v223
    %v225 = vpop.f32.mrf.mxu0
    %226 = vdwg.mxu0
    %vm227 = vcmp.gt.f32.partialorder %v209, 0.0
    %vm228 = vcmp.gt.f32.partialorder %v214, 0.0
    %vm229 = vcmp.gt.f32.partialorder %v219, 0.0
    %vm230 = vcmp.gt.f32.partialorder %v224, 0.0
    %v231 = vmin.f32 %v209, 0.0
    %v232 = vmin.f32 %v214, 0.0
    %v233 = vmin.f32 %v219, 0.0
    %v234 = vmin.f32 %v224, 0.0
    %v235 = vmul.f32 %v231, 1.442695
    %v236 = vpow.pop %v235
    %v237 = vmul.f32 %v232, 1.442695
    %v238 = vpow.pop %v237
    %v239 = vmul.f32 %v233, 1.442695
    %v240 = vpow.pop %v239
    %v241 = vmul.f32 %v234, 1.442695
    %v242 = vpow.pop %v241
    %v243 = vsub.f32 %v236, 1.0
    %v244 = vsub.f32 %v238, 1.0
    %v245 = vsub.f32 %v240, 1.0
    %v246 = vsub.f32 %v242, 1.0
    %v247 = vmul.f32 %v243, 1.6732632
    %v248 = vmul.f32 %v244, 1.6732632
    %v249 = vmul.f32 %v245, 1.6732632
    %v250 = vmul.f32 %v246, 1.6732632
    %v251 = vsel %vm227, %v209, %v247
    %v252 = vsel %vm228, %v214, %v248
    %v253 = vsel %vm229, %v219, %v249
    %v254 = vsel %vm230, %v224, %v250
    %v255 = vmul.f32 %v251, 1.050701
    %v256 = vmul.f32 %v252, 1.050701
    %v257 = vmul.f32 %v253, 1.050701
    %v258 = vmul.f32 %v254, 1.050701
    %v259 = vld [vmem:[%s5] sm:$0xff]
    %v260 = vld [vmem:[%s5 + $0x8] sm:$0xff]
    %v261 = vld [vmem:[%s5 + $0x10] sm:$0xff]
    %v262 = vld [vmem:[%s5 + $0x18] sm:$0xff]
    %v263 = vld [vmem:[%s5 + $0x20] sm:$0xff]
    %v264 = vld [vmem:[%s5 + $0x28] sm:$0xff]
    %v265 = vld [vmem:[%s5 + $0x30] sm:$0xff]
    %v266 = vld [vmem:[%s5 + $0x38] sm:$0xff]
    %v267 = vld [vmem:[%s6] sm:$0x1]
    %v269 = vlaneseq
    %v270 = vshrl.u32 %v269, 7
    %v271 = vsub.s32 0, %v270
    %v272 = vrot.slane %v267, %v271
    %vm274 = vcmask 523264
    %v276 = vsel %vm274, %v255, 0
    %v279 = vsel %vm274, %v256, 0
    %v282 = vsel %vm274, %v257, 0
    %v285 = vsel %vm274, %v258, 0
    %287 = vmatprep.subr.mxu0 0.0
    %288 = vmatpush1.msra.mxu0 0.0
    %289 = vmatprep.subr.mxu0 0.0
    %290 = vmatpush1.msra.mxu0 0.0
    %291 = vmatprep.subr.mxu0 0.0
    %292 = vmatpush1.msra.mxu0 0.0
    %293 = vmatprep.subr.mxu0 0.0
    %294 = vmatpush1.msra.mxu0 0.0
    %295 = vmatprep.subr.mxu0 0.0
    %296 = vmatpush1.msra.mxu0 0.0
    %297 = vmatprep.subr.mxu0 0.0
    %298 = vmatpush1.msra.mxu0 0.0
    %299 = vmatprep.subr.mxu0 0.0
    %300 = vmatpush1.msra.mxu0 0.0
    %301 = vmatprep.subr.mxu0 0.0
    %302 = vmatpush1.msra.mxu0 0.0
    %303 = vmatprep.subr.mxu0 0.0
    %304 = vmatpush1.msra.mxu0 %v266
    %305 = vmatprep.subr.mxu0 0.0
    %306 = vmatpush1.msra.mxu0 %v265
    %307 = vmatprep.subr.mxu0 0.0
    %308 = vmatpush1.msra.mxu0 %v264
    %309 = vmatprep.subr.mxu0 0.0
    %310 = vmatpush1.msra.mxu0 %v263
    %311 = vmatprep.subr.mxu0 0.0
    %312 = vmatpush1.msra.mxu0 %v262
    %313 = vmatprep.subr.mxu0 0.0
    %314 = vmatpush1.msra.mxu0 %v261
    %315 = vmatprep.subr.mxu0 0.0
    %316 = vmatpush1.msra.mxu0 %v260
    %317 = vmatprep.subr.mxu0 0.0
    %318 = vmatpush1.msra.mxu0 %v259
    %319 = vmatprep.subr.mxu0 0.0
    %320 = vmatpush2.msra.mxu0 0.0
    %321 = vmatprep.subr.mxu0 0.0
    %322 = vmatpush2.msra.mxu0 0.0
    %323 = vmatprep.subr.mxu0 0.0
    %324 = vmatpush2.msra.mxu0 0.0
    %325 = vmatprep.subr.mxu0 0.0
    %326 = vmatpush2.msra.mxu0 0.0
    %327 = vmatprep.subr.mxu0 0.0
    %328 = vmatpush2.msra.mxu0 0.0
    %329 = vmatprep.subr.mxu0 0.0
    %330 = vmatpush2.msra.mxu0 0.0
    %331 = vmatprep.subr.mxu0 0.0
    %332 = vmatpush2.msra.mxu0 0.0
    %333 = vmatprep.subr.mxu0 0.0
    %334 = vmatpush2.msra.mxu0 0.0
    %335 = vmatprep.subr.mxu0 0.0
    %336 = vmatpush2.msra.mxu0 0.0
    %337 = vmatprep.subr.mxu0 0.0
    %338 = vmatpush2.msra.mxu0 0.0
    %339 = vmatprep.subr.mxu0 0.0
    %340 = vmatpush2.msra.mxu0 0.0
    %341 = vmatprep.subr.mxu0 0.0
    %342 = vmatpush2.msra.mxu0 0.0
    %343 = vmatprep.subr.mxu0 0.0
    %344 = vmatpush2.msra.mxu0 0.0
    %345 = vmatprep.subr.mxu0 0.0
    %346 = vmatpush2.msra.mxu0 0.0
    %347 = vmatprep.subr.mxu0 0.0
    %348 = vmatpush2.msra.mxu0 0.0
    %349 = vmatprep.subr.mxu0 0.0
    %350 = vmatpush2.msra.mxu0 0.0
    %351 = vmatprep.mubr.f32.mxu0 0.0
    %352 = vmatmul.mubr.f32.gmra.mxu0 %v276
    %v353 = vpop.f32.mrf.mxu0
    %v354 = vadd.f32 %v272, %v353
    %v355 = vpop.f32.mrf.mxu0
    %356 = vmatprep.mubr.f32.mxu0 0.0
    %357 = vmatmul.mubr.f32.gmra.mxu0 %v279
    %v358 = vpop.f32.mrf.mxu0
    %v359 = vadd.f32 %v272, %v358
    %v360 = vpop.f32.mrf.mxu0
    %361 = vmatprep.mubr.f32.mxu0 0.0
    %362 = vmatmul.mubr.f32.gmra.mxu0 %v282
    %v363 = vpop.f32.mrf.mxu0
    %v364 = vadd.f32 %v272, %v363
    %v365 = vpop.f32.mrf.mxu0
    %366 = vmatprep.mubr.f32.mxu0 0.0
    %367 = vmatmul.mubr.f32.gmra.mxu0 %v285
    %v368 = vpop.f32.mrf.mxu0
    %v369 = vadd.f32 %v272, %v368
    %v370 = vpop.f32.mrf.mxu0
    %371 = vdwg.mxu0
    %vm372 = vcmp.gt.f32.partialorder %v354, 0.0
    %vm373 = vcmp.gt.f32.partialorder %v359, 0.0
    %vm374 = vcmp.gt.f32.partialorder %v364, 0.0
    %vm375 = vcmp.gt.f32.partialorder %v369, 0.0
    %v376 = vmin.f32 %v354, 0.0
    %v377 = vmin.f32 %v359, 0.0
    %v378 = vmin.f32 %v364, 0.0
    %v379 = vmin.f32 %v369, 0.0
    %v380 = vmul.f32 %v376, 1.442695
    %v381 = vpow.pop %v380
    %v382 = vmul.f32 %v377, 1.442695
    %v383 = vpow.pop %v382
    %v384 = vmul.f32 %v378, 1.442695
    %v385 = vpow.pop %v384
    %v386 = vmul.f32 %v379, 1.442695
    %v387 = vpow.pop %v386
    %v388 = vsub.f32 %v381, 1.0
    %v389 = vsub.f32 %v383, 1.0
    %v390 = vsub.f32 %v385, 1.0
    %v391 = vsub.f32 %v387, 1.0
    %v392 = vmul.f32 %v388, 1.6732632
    %v393 = vmul.f32 %v389, 1.6732632
    %v394 = vmul.f32 %v390, 1.6732632
    %v395 = vmul.f32 %v391, 1.6732632
    %v396 = vsel %vm372, %v354, %v392
    %v397 = vsel %vm373, %v359, %v393
    %v398 = vsel %vm374, %v364, %v394
    %v399 = vsel %vm375, %v369, %v395
    %v400 = vmul.f32 %v396, 1.050701
    %v401 = vmul.f32 %v397, 1.050701
    %v402 = vmul.f32 %v398, 1.050701
    %v403 = vmul.f32 %v399, 1.050701
    %v408 = vcombine.high %v400, %v400
    %v410 = vunpack.c.l.s4 1966171168
    %v411 = vunpack.c.0.s8 %v410
    %v412 = vlaneseq
    %v413 = vshrl.u32 %v412, 7
    %v414 = vsub.s32 %v411, %v413
    %v415 = vrot.slane %v400, %v414
    %v417 = vunpack.c.l.s4 1966171168
    %v418 = vunpack.c.0.s8 %v417
    %v419 = vlaneseq
    %v420 = vshrl.u32 %v419, 7
    %v421 = vsub.s32 %v418, %v420
    %v422 = vrot.slane %v408, %v421
    %v423 = vcombine.high %v415, %v415
    %v424 = vcombine.high %v422, %v422
    %v426 = vunpack.c.l.s4 1966171168
    %v427 = vunpack.c.0.s8 %v426
    %v428 = vlaneseq
    %v429 = vshrl.u32 %v428, 7
    %v430 = vsub.s32 %v427, %v429
    %v431 = vrot.slane %v415, %v430
    %v433 = vunpack.c.l.s4 1966171168
    %v434 = vunpack.c.0.s8 %v433
    %v435 = vlaneseq
    %v436 = vshrl.u32 %v435, 7
    %v437 = vsub.s32 %v434, %v436
    %v438 = vrot.slane %v422, %v437
    %v440 = vunpack.c.l.s4 1966171168
    %v441 = vunpack.c.0.s8 %v440
    %v442 = vlaneseq
    %v443 = vshrl.u32 %v442, 7
    %v444 = vsub.s32 %v441, %v443
    %v445 = vrot.slane %v423, %v444
    %v447 = vunpack.c.l.s4 1966171168
    %v448 = vunpack.c.0.s8 %v447
    %v449 = vlaneseq
    %v450 = vshrl.u32 %v449, 7
    %v451 = vsub.s32 %v448, %v450
    %v452 = vrot.slane %v424, %v451
    %v453 = vcombine.high %v431, %v431
    %v454 = vcombine.high %v438, %v438
    %v455 = vcombine.high %v445, %v445
    %v456 = vcombine.high %v452, %v452
    %v457 = vcombine.high %v401, %v401
    %v459 = vunpack.c.l.s4 1966171168
    %v460 = vunpack.c.0.s8 %v459
    %v461 = vlaneseq
    %v462 = vshrl.u32 %v461, 7
    %v463 = vsub.s32 %v460, %v462
    %v464 = vrot.slane %v401, %v463
    %v466 = vunpack.c.l.s4 1966171168
    %v467 = vunpack.c.0.s8 %v466
    %v468 = vlaneseq
    %v469 = vshrl.u32 %v468, 7
    %v470 = vsub.s32 %v467, %v469
    %v471 = vrot.slane %v457, %v470
    %v472 = vcombine.high %v464, %v464
    %v473 = vcombine.high %v471, %v471
    %v475 = vunpack.c.l.s4 1966171168
    %v476 = vunpack.c.0.s8 %v475
    %v477 = vlaneseq
    %v478 = vshrl.u32 %v477, 7
    %v479 = vsub.s32 %v476, %v478
    %v480 = vrot.slane %v464, %v479
    %v482 = vunpack.c.l.s4 1966171168
    %v483 = vunpack.c.0.s8 %v482
    %v484 = vlaneseq
    %v485 = vshrl.u32 %v484, 7
    %v486 = vsub.s32 %v483, %v485
    %v487 = vrot.slane %v471, %v486
    %v489 = vunpack.c.l.s4 1966171168
    %v490 = vunpack.c.0.s8 %v489
    %v491 = vlaneseq
    %v492 = vshrl.u32 %v491, 7
    %v493 = vsub.s32 %v490, %v492
    %v494 = vrot.slane %v472, %v493
    %v496 = vunpack.c.l.s4 1966171168
    %v497 = vunpack.c.0.s8 %v496
    %v498 = vlaneseq
    %v499 = vshrl.u32 %v498, 7
    %v500 = vsub.s32 %v497, %v499
    %v501 = vrot.slane %v473, %v500
    %v502 = vcombine.high %v480, %v480
    %v503 = vcombine.high %v487, %v487
    %v504 = vcombine.high %v494, %v494
    %v505 = vcombine.high %v501, %v501
    %v506 = vcombine.high %v402, %v402
    %v508 = vunpack.c.l.s4 1966171168
    %v509 = vunpack.c.0.s8 %v508
    %v510 = vlaneseq
    %v511 = vshrl.u32 %v510, 7
    %v512 = vsub.s32 %v509, %v511
    %v513 = vrot.slane %v402, %v512
    %v515 = vunpack.c.l.s4 1966171168
    %v516 = vunpack.c.0.s8 %v515
    %v517 = vlaneseq
    %v518 = vshrl.u32 %v517, 7
    %v519 = vsub.s32 %v516, %v518
    %v520 = vrot.slane %v506, %v519
    %v521 = vcombine.high %v513, %v513
    %v522 = vcombine.high %v520, %v520
    %v524 = vunpack.c.l.s4 1966171168
    %v525 = vunpack.c.0.s8 %v524
    %v526 = vlaneseq
    %v527 = vshrl.u32 %v526, 7
    %v528 = vsub.s32 %v525, %v527
    %v529 = vrot.slane %v513, %v528
    %v531 = vunpack.c.l.s4 1966171168
    %v532 = vunpack.c.0.s8 %v531
    %v533 = vlaneseq
    %v534 = vshrl.u32 %v533, 7
    %v535 = vsub.s32 %v532, %v534
    %v536 = vrot.slane %v520, %v535
    %v538 = vunpack.c.l.s4 1966171168
    %v539 = vunpack.c.0.s8 %v538
    %v540 = vlaneseq
    %v541 = vshrl.u32 %v540, 7
    %v542 = vsub.s32 %v539, %v541
    %v543 = vrot.slane %v521, %v542
    %v545 = vunpack.c.l.s4 1966171168
    %v546 = vunpack.c.0.s8 %v545
    %v547 = vlaneseq
    %v548 = vshrl.u32 %v547, 7
    %v549 = vsub.s32 %v546, %v548
    %v550 = vrot.slane %v522, %v549
    %v551 = vcombine.high %v529, %v529
    %v552 = vcombine.high %v536, %v536
    %v553 = vcombine.high %v543, %v543
    %v554 = vcombine.high %v550, %v550
    %v555 = vcombine.high %v403, %v403
    %v557 = vunpack.c.l.s4 1966171168
    %v558 = vunpack.c.0.s8 %v557
    %v559 = vlaneseq
    %v560 = vshrl.u32 %v559, 7
    %v561 = vsub.s32 %v558, %v560
    %v562 = vrot.slane %v403, %v561
    %v564 = vunpack.c.l.s4 1966171168
    %v565 = vunpack.c.0.s8 %v564
    %v566 = vlaneseq
    %v567 = vshrl.u32 %v566, 7
    %v568 = vsub.s32 %v565, %v567
    %v569 = vrot.slane %v555, %v568
    %v570 = vcombine.high %v562, %v562
    %v571 = vcombine.high %v569, %v569
    %v573 = vunpack.c.l.s4 1966171168
    %v574 = vunpack.c.0.s8 %v573
    %v575 = vlaneseq
    %v576 = vshrl.u32 %v575, 7
    %v577 = vsub.s32 %v574, %v576
    %v578 = vrot.slane %v562, %v577
    %v580 = vunpack.c.l.s4 1966171168
    %v581 = vunpack.c.0.s8 %v580
    %v582 = vlaneseq
    %v583 = vshrl.u32 %v582, 7
    %v584 = vsub.s32 %v581, %v583
    %v585 = vrot.slane %v569, %v584
    %v587 = vunpack.c.l.s4 1966171168
    %v588 = vunpack.c.0.s8 %v587
    %v589 = vlaneseq
    %v590 = vshrl.u32 %v589, 7
    %v591 = vsub.s32 %v588, %v590
    %v592 = vrot.slane %v570, %v591
    %v594 = vunpack.c.l.s4 1966171168
    %v595 = vunpack.c.0.s8 %v594
    %v596 = vlaneseq
    %v597 = vshrl.u32 %v596, 7
    %v598 = vsub.s32 %v595, %v597
    %v599 = vrot.slane %v571, %v598
    %v600 = vcombine.high %v578, %v578
    %v601 = vcombine.high %v585, %v585
    %v602 = vcombine.high %v592, %v592
    %v603 = vcombine.high %v599, %v599
    %v604 = vlaneseq
    %v605 = vshrl.u32 %v604, 7
    %v606 = vsub.s32 0, %v605
    %v607 = vrot.slane %v431, %v606
    %v608 = vlaneseq
    %v609 = vshrl.u32 %v608, 7
    %v610 = vsub.s32 0, %v609
    %v611 = vrot.slane %v445, %v610
    %v612 = vlaneseq
    %v613 = vshrl.u32 %v612, 7
    %v614 = vsub.s32 0, %v613
    %v615 = vrot.slane %v453, %v614
    %v616 = vlaneseq
    %v617 = vshrl.u32 %v616, 7
    %v618 = vsub.s32 0, %v617
    %v619 = vrot.slane %v455, %v618
    %v620 = vlaneseq
    %v621 = vshrl.u32 %v620, 7
    %v622 = vsub.s32 0, %v621
    %v623 = vrot.slane %v438, %v622
    %v624 = vlaneseq
    %v625 = vshrl.u32 %v624, 7
    %v626 = vsub.s32 0, %v625
    %v627 = vrot.slane %v452, %v626
    %v628 = vlaneseq
    %v629 = vshrl.u32 %v628, 7
    %v630 = vsub.s32 0, %v629
    %v631 = vrot.slane %v454, %v630
    %v632 = vlaneseq
    %v633 = vshrl.u32 %v632, 7
    %v634 = vsub.s32 0, %v633
    %v635 = vrot.slane %v456, %v634
    %v636 = vlaneseq
    %v637 = vshrl.u32 %v636, 7
    %v638 = vsub.s32 0, %v637
    %v639 = vrot.slane %v480, %v638
    %v640 = vlaneseq
    %v641 = vshrl.u32 %v640, 7
    %v642 = vsub.s32 0, %v641
    %v643 = vrot.slane %v494, %v642
    %v644 = vlaneseq
    %v645 = vshrl.u32 %v644, 7
    %v646 = vsub.s32 0, %v645
    %v647 = vrot.slane %v502, %v646
    %v648 = vlaneseq
    %v649 = vshrl.u32 %v648, 7
    %v650 = vsub.s32 0, %v649
    %v651 = vrot.slane %v504, %v650
    %v652 = vlaneseq
    %v653 = vshrl.u32 %v652, 7
    %v654 = vsub.s32 0, %v653
    %v655 = vrot.slane %v487, %v654
    %v656 = vlaneseq
    %v657 = vshrl.u32 %v656, 7
    %v658 = vsub.s32 0, %v657
    %v659 = vrot.slane %v501, %v658
    %v660 = vlaneseq
    %v661 = vshrl.u32 %v660, 7
    %v662 = vsub.s32 0, %v661
    %v663 = vrot.slane %v503, %v662
    %v664 = vlaneseq
    %v665 = vshrl.u32 %v664, 7
    %v666 = vsub.s32 0, %v665
    %v667 = vrot.slane %v505, %v666
    %v668 = vlaneseq
    %v669 = vshrl.u32 %v668, 7
    %v670 = vsub.s32 0, %v669
    %v671 = vrot.slane %v529, %v670
    %v672 = vlaneseq
    %v673 = vshrl.u32 %v672, 7
    %v674 = vsub.s32 0, %v673
    %v675 = vrot.slane %v543, %v674
    %v676 = vlaneseq
    %v677 = vshrl.u32 %v676, 7
    %v678 = vsub.s32 0, %v677
    %v679 = vrot.slane %v551, %v678
    %v680 = vlaneseq
    %v681 = vshrl.u32 %v680, 7
    %v682 = vsub.s32 0, %v681
    %v683 = vrot.slane %v553, %v682
    %v684 = vlaneseq
    %v685 = vshrl.u32 %v684, 7
    %v686 = vsub.s32 0, %v685
    %v687 = vrot.slane %v536, %v686
    %v688 = vlaneseq
    %v689 = vshrl.u32 %v688, 7
    %v690 = vsub.s32 0, %v689
    %v691 = vrot.slane %v550, %v690
    %v692 = vlaneseq
    %v693 = vshrl.u32 %v692, 7
    %v694 = vsub.s32 0, %v693
    %v695 = vrot.slane %v552, %v694
    %v696 = vlaneseq
    %v697 = vshrl.u32 %v696, 7
    %v698 = vsub.s32 0, %v697
    %v699 = vrot.slane %v554, %v698
    %v700 = vlaneseq
    %v701 = vshrl.u32 %v700, 7
    %v702 = vsub.s32 0, %v701
    %v703 = vrot.slane %v578, %v702
    %v704 = vlaneseq
    %v705 = vshrl.u32 %v704, 7
    %v706 = vsub.s32 0, %v705
    %v707 = vrot.slane %v592, %v706
    %v708 = vlaneseq
    %v709 = vshrl.u32 %v708, 7
    %v710 = vsub.s32 0, %v709
    %v711 = vrot.slane %v600, %v710
    %v712 = vlaneseq
    %v713 = vshrl.u32 %v712, 7
    %v714 = vsub.s32 0, %v713
    %v715 = vrot.slane %v602, %v714
    %v716 = vlaneseq
    %v717 = vshrl.u32 %v716, 7
    %v718 = vsub.s32 0, %v717
    %v719 = vrot.slane %v585, %v718
    %v720 = vlaneseq
    %v721 = vshrl.u32 %v720, 7
    %v722 = vsub.s32 0, %v721
    %v723 = vrot.slane %v599, %v722
    %v724 = vlaneseq
    %v725 = vshrl.u32 %v724, 7
    %v726 = vsub.s32 0, %v725
    %v727 = vrot.slane %v601, %v726
    %v728 = vlaneseq
    %v729 = vshrl.u32 %v728, 7
    %v730 = vsub.s32 0, %v729
    %v731 = vrot.slane %v603, %v730
    %vm764 = vcmp.gt.f32.partialorder %v607, %v400
    %vm765 = vcmp.gt.f32.partialorder %v607, %v401
    %vm766 = vcmp.gt.f32.partialorder %v611, %v400
    %vm767 = vcmp.gt.f32.partialorder %v611, %v401
    %vm768 = vcmp.gt.f32.partialorder %v615, %v400
    %vm769 = vcmp.gt.f32.partialorder %v615, %v401
    %vm770 = vcmp.gt.f32.partialorder %v619, %v400
    %vm771 = vcmp.gt.f32.partialorder %v619, %v401
    %vm772 = vcmp.gt.f32.partialorder %v623, %v400
    %vm773 = vcmp.gt.f32.partialorder %v623, %v401
    %vm774 = vcmp.gt.f32.partialorder %v627, %v400
    %vm775 = vcmp.gt.f32.partialorder %v627, %v401
    %vm776 = vcmp.gt.f32.partialorder %v631, %v400
    %vm777 = vcmp.gt.f32.partialorder %v631, %v401
    %vm778 = vcmp.gt.f32.partialorder %v635, %v400
    %vm779 = vcmp.gt.f32.partialorder %v635, %v401
    %vm780 = vcmp.gt.f32.partialorder %v639, %v400
    %vm781 = vcmp.gt.f32.partialorder %v639, %v401
    %vm782 = vcmp.gt.f32.partialorder %v643, %v400
    %vm783 = vcmp.gt.f32.partialorder %v643, %v401
    %vm784 = vcmp.gt.f32.partialorder %v647, %v400
    %vm785 = vcmp.gt.f32.partialorder %v647, %v401
    %vm786 = vcmp.gt.f32.partialorder %v651, %v400
    %vm787 = vcmp.gt.f32.partialorder %v651, %v401
    %vm788 = vcmp.gt.f32.partialorder %v655, %v400
    %vm789 = vcmp.gt.f32.partialorder %v655, %v401
    %vm790 = vcmp.gt.f32.partialorder %v659, %v400
    %vm791 = vcmp.gt.f32.partialorder %v659, %v401
    %vm792 = vcmp.gt.f32.partialorder %v663, %v400
    %vm793 = vcmp.gt.f32.partialorder %v663, %v401
    %vm794 = vcmp.gt.f32.partialorder %v667, %v400
    %vm795 = vcmp.gt.f32.partialorder %v667, %v401
    %vm796 = vcmp.gt.f32.partialorder %v671, %v402
    %vm797 = vcmp.gt.f32.partialorder %v671, %v403
    %vm798 = vcmp.gt.f32.partialorder %v675, %v402
    %vm799 = vcmp.gt.f32.partialorder %v675, %v403
    %vm800 = vcmp.gt.f32.partialorder %v679, %v402
    %vm801 = vcmp.gt.f32.partialorder %v679, %v403
    %vm802 = vcmp.gt.f32.partialorder %v683, %v402
    %vm803 = vcmp.gt.f32.partialorder %v683, %v403
    %vm804 = vcmp.gt.f32.partialorder %v687, %v402
    %vm805 = vcmp.gt.f32.partialorder %v687, %v403
    %vm806 = vcmp.gt.f32.partialorder %v691, %v402
    %vm807 = vcmp.gt.f32.partialorder %v691, %v403
    %vm808 = vcmp.gt.f32.partialorder %v695, %v402
    %vm809 = vcmp.gt.f32.partialorder %v695, %v403
    %vm810 = vcmp.gt.f32.partialorder %v699, %v402
    %vm811 = vcmp.gt.f32.partialorder %v699, %v403
    %vm812 = vcmp.gt.f32.partialorder %v703, %v402
    %vm813 = vcmp.gt.f32.partialorder %v703, %v403
    %vm814 = vcmp.gt.f32.partialorder %v707, %v402
    %vm815 = vcmp.gt.f32.partialorder %v707, %v403
    %vm816 = vcmp.gt.f32.partialorder %v711, %v402
    %vm817 = vcmp.gt.f32.partialorder %v711, %v403
    %vm818 = vcmp.gt.f32.partialorder %v715, %v402
    %vm819 = vcmp.gt.f32.partialorder %v715, %v403
    %vm820 = vcmp.gt.f32.partialorder %v719, %v402
    %vm821 = vcmp.gt.f32.partialorder %v719, %v403
    %vm822 = vcmp.gt.f32.partialorder %v723, %v402
    %vm823 = vcmp.gt.f32.partialorder %v723, %v403
    %vm824 = vcmp.gt.f32.partialorder %v727, %v402
    %vm825 = vcmp.gt.f32.partialorder %v727, %v403
    %vm826 = vcmp.gt.f32.partialorder %v731, %v402
    %vm827 = vcmp.gt.f32.partialorder %v731, %v403
    %vm828 = vcmp.eq.f32.partialorder %v607, %v400
    %vm829 = vcmp.eq.f32.partialorder %v607, %v401
    %vm830 = vcmp.eq.f32.partialorder %v611, %v400
    %vm831 = vcmp.eq.f32.partialorder %v611, %v401
    %vm832 = vcmp.eq.f32.partialorder %v615, %v400
    %vm833 = vcmp.eq.f32.partialorder %v615, %v401
    %vm834 = vcmp.eq.f32.partialorder %v619, %v400
    %vm835 = vcmp.eq.f32.partialorder %v619, %v401
    %vm836 = vcmp.eq.f32.partialorder %v623, %v400
    %vm837 = vcmp.eq.f32.partialorder %v623, %v401
    %vm838 = vcmp.eq.f32.partialorder %v627, %v400
    %vm839 = vcmp.eq.f32.partialorder %v627, %v401
    %vm840 = vcmp.eq.f32.partialorder %v631, %v400
    %vm841 = vcmp.eq.f32.partialorder %v631, %v401
    %vm842 = vcmp.eq.f32.partialorder %v635, %v400
    %vm843 = vcmp.eq.f32.partialorder %v635, %v401
    %vm844 = vcmp.eq.f32.partialorder %v639, %v400
    %vm845 = vcmp.eq.f32.partialorder %v639, %v401
    %vm846 = vcmp.eq.f32.partialorder %v643, %v400
    %vm847 = vcmp.eq.f32.partialorder %v643, %v401
    %vm848 = vcmp.eq.f32.partialorder %v647, %v400
    %vm849 = vcmp.eq.f32.partialorder %v647, %v401
    %vm850 = vcmp.eq.f32.partialorder %v651, %v400
    %vm851 = vcmp.eq.f32.partialorder %v651, %v401
    %vm852 = vcmp.eq.f32.partialorder %v655, %v400
    %vm853 = vcmp.eq.f32.partialorder %v655, %v401
    %vm854 = vcmp.eq.f32.partialorder %v659, %v400
    %vm855 = vcmp.eq.f32.partialorder %v659, %v401
    %vm856 = vcmp.eq.f32.partialorder %v663, %v400
    %vm857 = vcmp.eq.f32.partialorder %v663, %v401
    %vm858 = vcmp.eq.f32.partialorder %v667, %v400
    %vm859 = vcmp.eq.f32.partialorder %v667, %v401
    %vm860 = vcmp.eq.f32.partialorder %v671, %v402
    %vm861 = vcmp.eq.f32.partialorder %v671, %v403
    %vm862 = vcmp.eq.f32.partialorder %v675, %v402
    %vm863 = vcmp.eq.f32.partialorder %v675, %v403
    %vm864 = vcmp.eq.f32.partialorder %v679, %v402
    %vm865 = vcmp.eq.f32.partialorder %v679, %v403
    %vm866 = vcmp.eq.f32.partialorder %v683, %v402
    %vm867 = vcmp.eq.f32.partialorder %v683, %v403
    %vm868 = vcmp.eq.f32.partialorder %v687, %v402
    %vm869 = vcmp.eq.f32.partialorder %v687, %v403
    %vm870 = vcmp.eq.f32.partialorder %v691, %v402
    %vm871 = vcmp.eq.f32.partialorder %v691, %v403
    %vm872 = vcmp.eq.f32.partialorder %v695, %v402
    %vm873 = vcmp.eq.f32.partialorder %v695, %v403
    %vm874 = vcmp.eq.f32.partialorder %v699, %v402
    %vm875 = vcmp.eq.f32.partialorder %v699, %v403
    %vm876 = vcmp.eq.f32.partialorder %v703, %v402
    %vm877 = vcmp.eq.f32.partialorder %v703, %v403
    %vm878 = vcmp.eq.f32.partialorder %v707, %v402
    %vm879 = vcmp.eq.f32.partialorder %v707, %v403
    %vm880 = vcmp.eq.f32.partialorder %v711, %v402
    %vm881 = vcmp.eq.f32.partialorder %v711, %v403
    %vm882 = vcmp.eq.f32.partialorder %v715, %v402
    %vm883 = vcmp.eq.f32.partialorder %v715, %v403
    %vm884 = vcmp.eq.f32.partialorder %v719, %v402
    %vm885 = vcmp.eq.f32.partialorder %v719, %v403
    %vm886 = vcmp.eq.f32.partialorder %v723, %v402
    %vm887 = vcmp.eq.f32.partialorder %v723, %v403
    %vm888 = vcmp.eq.f32.partialorder %v727, %v402
    %vm889 = vcmp.eq.f32.partialorder %v727, %v403
    %vm890 = vcmp.eq.f32.partialorder %v731, %v402
    %vm891 = vcmp.eq.f32.partialorder %v731, %v403
    %v892 = vsel %vm81, 1, 0
    %v893 = vsel %vm82, 1, 0
    %v894 = vsel %vm83, 1, 0
    %v895 = vsel %vm84, 1, 0
    %v896 = vsel %vm85, 1, 0
    %v897 = vsel %vm86, 1, 0
    %v898 = vsel %vm87, 1, 0
    %v899 = vsel %vm88, 1, 0
    %v900 = vsel %vm89, 1, 0
    %v901 = vsel %vm90, 1, 0
    %v902 = vsel %vm91, 1, 0
    %v903 = vsel %vm92, 1, 0
    %v904 = vsel %vm93, 1, 0
    %v905 = vsel %vm94, 1, 0
    %v906 = vsel %vm95, 1, 0
    %v907 = vsel %vm96, 1, 0
    %v908 = vsel %vm97, 1, 0
    %v909 = vsel %vm98, 1, 0
    %v910 = vsel %vm99, 1, 0
    %v911 = vsel %vm100, 1, 0
    %v912 = vsel %vm101, 1, 0
    %v913 = vsel %vm102, 1, 0
    %v914 = vsel %vm103, 1, 0
    %v915 = vsel %vm104, 1, 0
    %v916 = vsel %vm105, 1, 0
    %v917 = vsel %vm106, 1, 0
    %v918 = vsel %vm107, 1, 0
    %v919 = vsel %vm108, 1, 0
    %v920 = vsel %vm109, 1, 0
    %v921 = vsel %vm110, 1, 0
    %v922 = vsel %vm111, 1, 0
    %v923 = vsel %vm112, 1, 0
    %924 = vset.pattern.permute.xlu0 0
    %925 = vperm.xlu0 %924, %v892
    %v926 = vpop.permute.xlu0 %925
    %927 = vset.pattern.permute.xlu0 0
    %928 = vperm.xlu0 %927, %v893
    %v929 = vpop.permute.xlu0 %928
    %930 = vset.pattern.permute.xlu0 0
    %931 = vperm.xlu0 %930, %v894
    %v932 = vpop.permute.xlu0 %931
    %933 = vset.pattern.permute.xlu0 0
    %934 = vperm.xlu0 %933, %v895
    %v935 = vpop.permute.xlu0 %934
    %936 = vset.pattern.permute.xlu0 0
    %937 = vperm.xlu0 %936, %v896
    %v938 = vpop.permute.xlu0 %937
    %939 = vset.pattern.permute.xlu0 0
    %940 = vperm.xlu0 %939, %v897
    %v941 = vpop.permute.xlu0 %940
    %942 = vset.pattern.permute.xlu0 0
    %943 = vperm.xlu0 %942, %v898
    %v944 = vpop.permute.xlu0 %943
    %945 = vset.pattern.permute.xlu0 0
    %946 = vperm.xlu0 %945, %v899
    %v947 = vpop.permute.xlu0 %946
    %948 = vset.pattern.permute.xlu0 0
    %949 = vperm.xlu0 %948, %v900
    %v950 = vpop.permute.xlu0 %949
    %951 = vset.pattern.permute.xlu0 0
    %952 = vperm.xlu0 %951, %v901
    %v953 = vpop.permute.xlu0 %952
    %954 = vset.pattern.permute.xlu0 0
    %955 = vperm.xlu0 %954, %v902
    %v956 = vpop.permute.xlu0 %955
    %957 = vset.pattern.permute.xlu0 0
    %958 = vperm.xlu0 %957, %v903
    %v959 = vpop.permute.xlu0 %958
    %960 = vset.pattern.permute.xlu0 0
    %961 = vperm.xlu0 %960, %v904
    %v962 = vpop.permute.xlu0 %961
    %963 = vset.pattern.permute.xlu0 0
    %964 = vperm.xlu0 %963, %v905
    %v965 = vpop.permute.xlu0 %964
    %966 = vset.pattern.permute.xlu0 0
    %967 = vperm.xlu0 %966, %v906
    %v968 = vpop.permute.xlu0 %967
    %969 = vset.pattern.permute.xlu0 0
    %970 = vperm.xlu0 %969, %v907
    %v971 = vpop.permute.xlu0 %970
    %972 = vset.pattern.permute.xlu0 0
    %973 = vperm.xlu0 %972, %v908
    %v974 = vpop.permute.xlu0 %973
    %975 = vset.pattern.permute.xlu0 0
    %976 = vperm.xlu0 %975, %v909
    %v977 = vpop.permute.xlu0 %976
    %978 = vset.pattern.permute.xlu0 0
    %979 = vperm.xlu0 %978, %v910
    %v980 = vpop.permute.xlu0 %979
    %981 = vset.pattern.permute.xlu0 0
    %982 = vperm.xlu0 %981, %v911
    %v983 = vpop.permute.xlu0 %982
    %984 = vset.pattern.permute.xlu0 0
    %985 = vperm.xlu0 %984, %v912
    %v986 = vpop.permute.xlu0 %985
    %987 = vset.pattern.permute.xlu0 0
    %988 = vperm.xlu0 %987, %v913
    %v989 = vpop.permute.xlu0 %988
    %990 = vset.pattern.permute.xlu0 0
    %991 = vperm.xlu0 %990, %v914
    %v992 = vpop.permute.xlu0 %991
    %993 = vset.pattern.permute.xlu0 0
    %994 = vperm.xlu0 %993, %v915
    %v995 = vpop.permute.xlu0 %994
    %996 = vset.pattern.permute.xlu0 0
    %997 = vperm.xlu0 %996, %v916
    %v998 = vpop.permute.xlu0 %997
    %999 = vset.pattern.permute.xlu0 0
    %1000 = vperm.xlu0 %999, %v917
    %v1001 = vpop.permute.xlu0 %1000
    %1002 = vset.pattern.permute.xlu0 0
    %1003 = vperm.xlu0 %1002, %v918
    %v1004 = vpop.permute.xlu0 %1003
    %1005 = vset.pattern.permute.xlu0 0
    %1006 = vperm.xlu0 %1005, %v919
    %v1007 = vpop.permute.xlu0 %1006
    %1008 = vset.pattern.permute.xlu0 0
    %1009 = vperm.xlu0 %1008, %v920
    %v1010 = vpop.permute.xlu0 %1009
    %1011 = vset.pattern.permute.xlu0 0
    %1012 = vperm.xlu0 %1011, %v921
    %v1013 = vpop.permute.xlu0 %1012
    %1014 = vset.pattern.permute.xlu0 0
    %1015 = vperm.xlu0 %1014, %v922
    %v1016 = vpop.permute.xlu0 %1015
    %1017 = vset.pattern.permute.xlu0 0
    %1018 = vperm.xlu0 %1017, %v923
    %v1019 = vpop.permute.xlu0 %1018
    %vm1020 = vcmp.eq.s32.totalorder %v926, 1
    %vm1021 = vcmp.eq.s32.totalorder %v929, 1
    %vm1022 = vcmp.eq.s32.totalorder %v932, 1
    %vm1023 = vcmp.eq.s32.totalorder %v935, 1
    %vm1024 = vcmp.eq.s32.totalorder %v938, 1
    %vm1025 = vcmp.eq.s32.totalorder %v941, 1
    %vm1026 = vcmp.eq.s32.totalorder %v944, 1
    %vm1027 = vcmp.eq.s32.totalorder %v947, 1
    %vm1028 = vcmp.eq.s32.totalorder %v950, 1
    %vm1029 = vcmp.eq.s32.totalorder %v953, 1
    %vm1030 = vcmp.eq.s32.totalorder %v956, 1
    %vm1031 = vcmp.eq.s32.totalorder %v959, 1
    %vm1032 = vcmp.eq.s32.totalorder %v962, 1
    %vm1033 = vcmp.eq.s32.totalorder %v965, 1
    %vm1034 = vcmp.eq.s32.totalorder %v968, 1
    %vm1035 = vcmp.eq.s32.totalorder %v971, 1
    %vm1036 = vcmp.eq.s32.totalorder %v974, 1
    %vm1037 = vcmp.eq.s32.totalorder %v977, 1
    %vm1038 = vcmp.eq.s32.totalorder %v980, 1
    %vm1039 = vcmp.eq.s32.totalorder %v983, 1
    %vm1040 = vcmp.eq.s32.totalorder %v986, 1
    %vm1041 = vcmp.eq.s32.totalorder %v989, 1
    %vm1042 = vcmp.eq.s32.totalorder %v992, 1
    %vm1043 = vcmp.eq.s32.totalorder %v995, 1
    %vm1044 = vcmp.eq.s32.totalorder %v998, 1
    %vm1045 = vcmp.eq.s32.totalorder %v1001, 1
    %vm1046 = vcmp.eq.s32.totalorder %v1004, 1
    %vm1047 = vcmp.eq.s32.totalorder %v1007, 1
    %vm1048 = vcmp.eq.s32.totalorder %v1010, 1
    %vm1049 = vcmp.eq.s32.totalorder %v1013, 1
    %vm1050 = vcmp.eq.s32.totalorder %v1016, 1
    %vm1051 = vcmp.eq.s32.totalorder %v1019, 1
    %vm1052 = vmand %vm828, %vm1020
    %vm1053 = vmand %vm829, %vm1021
    %vm1054 = vmand %vm830, %vm1022
    %vm1055 = vmand %vm831, %vm1023
    %vm1056 = vmand %vm832, %vm1024
    %vm1057 = vmand %vm833, %vm1025
    %vm1058 = vmand %vm834, %vm1026
    %vm1059 = vmand %vm835, %vm1027
    %vm1060 = vmand %vm836, %vm1028
    %vm1061 = vmand %vm837, %vm1029
    %vm1062 = vmand %vm838, %vm1030
    %vm1063 = vmand %vm839, %vm1031
    %vm1064 = vmand %vm840, %vm1032
    %vm1065 = vmand %vm841, %vm1033
    %vm1066 = vmand %vm842, %vm1034
    %vm1067 = vmand %vm843, %vm1035
    %vm1068 = vmand %vm844, %vm1036
    %vm1069 = vmand %vm845, %vm1037
    %vm1070 = vmand %vm846, %vm1038
    %vm1071 = vmand %vm847, %vm1039
    %vm1072 = vmand %vm848, %vm1040
    %vm1073 = vmand %vm849, %vm1041
    %vm1074 = vmand %vm850, %vm1042
    %vm1075 = vmand %vm851, %vm1043
    %vm1076 = vmand %vm852, %vm1044
    %vm1077 = vmand %vm853, %vm1045
    %vm1078 = vmand %vm854, %vm1046
    %vm1079 = vmand %vm855, %vm1047
    %vm1080 = vmand %vm856, %vm1048
    %vm1081 = vmand %vm857, %vm1049
    %vm1082 = vmand %vm858, %vm1050
    %vm1083 = vmand %vm859, %vm1051
    %vm1084 = vmand %vm860, %vm1020
    %vm1085 = vmand %vm861, %vm1021
    %vm1086 = vmand %vm862, %vm1022
    %vm1087 = vmand %vm863, %vm1023
    %vm1088 = vmand %vm864, %vm1024
    %vm1089 = vmand %vm865, %vm1025
    %vm1090 = vmand %vm866, %vm1026
    %vm1091 = vmand %vm867, %vm1027
    %vm1092 = vmand %vm868, %vm1028
    %vm1093 = vmand %vm869, %vm1029
    %vm1094 = vmand %vm870, %vm1030
    %vm1095 = vmand %vm871, %vm1031
    %vm1096 = vmand %vm872, %vm1032
    %vm1097 = vmand %vm873, %vm1033
    %vm1098 = vmand %vm874, %vm1034
    %vm1099 = vmand %vm875, %vm1035
    %vm1100 = vmand %vm876, %vm1036
    %vm1101 = vmand %vm877, %vm1037
    %vm1102 = vmand %vm878, %vm1038
    %vm1103 = vmand %vm879, %vm1039
    %vm1104 = vmand %vm880, %vm1040
    %vm1105 = vmand %vm881, %vm1041
    %vm1106 = vmand %vm882, %vm1042
    %vm1107 = vmand %vm883, %vm1043
    %vm1108 = vmand %vm884, %vm1044
    %vm1109 = vmand %vm885, %vm1045
    %vm1110 = vmand %vm886, %vm1046
    %vm1111 = vmand %vm887, %vm1047
    %vm1112 = vmand %vm888, %vm1048
    %vm1113 = vmand %vm889, %vm1049
    %vm1114 = vmand %vm890, %vm1050
    %vm1115 = vmand %vm891, %vm1051
    %vm1116 = vmor %vm764, %vm1052
    %vm1117 = vmor %vm765, %vm1053
    %vm1118 = vmor %vm766, %vm1054
    %vm1119 = vmor %vm767, %vm1055
    %vm1120 = vmor %vm768, %vm1056
    %vm1121 = vmor %vm769, %vm1057
    %vm1122 = vmor %vm770, %vm1058
    %vm1123 = vmor %vm771, %vm1059
    %vm1124 = vmor %vm772, %vm1060
    %vm1125 = vmor %vm773, %vm1061
    %vm1126 = vmor %vm774, %vm1062
    %vm1127 = vmor %vm775, %vm1063
    %vm1128 = vmor %vm776, %vm1064
    %vm1129 = vmor %vm777, %vm1065
    %vm1130 = vmor %vm778, %vm1066
    %vm1131 = vmor %vm779, %vm1067
    %vm1132 = vmor %vm780, %vm1068
    %vm1133 = vmor %vm781, %vm1069
    %vm1134 = vmor %vm782, %vm1070
    %vm1135 = vmor %vm783, %vm1071
    %vm1136 = vmor %vm784, %vm1072
    %vm1137 = vmor %vm785, %vm1073
    %vm1138 = vmor %vm786, %vm1074
    %vm1139 = vmor %vm787, %vm1075
    %vm1140 = vmor %vm788, %vm1076
    %vm1141 = vmor %vm789, %vm1077
    %vm1142 = vmor %vm790, %vm1078
    %vm1143 = vmor %vm791, %vm1079
    %vm1144 = vmor %vm792, %vm1080
    %vm1145 = vmor %vm793, %vm1081
    %vm1146 = vmor %vm794, %vm1082
    %vm1147 = vmor %vm795, %vm1083
    %vm1148 = vmor %vm796, %vm1084
    %vm1149 = vmor %vm797, %vm1085
    %vm1150 = vmor %vm798, %vm1086
    %vm1151 = vmor %vm799, %vm1087
    %vm1152 = vmor %vm800, %vm1088
    %vm1153 = vmor %vm801, %vm1089
    %vm1154 = vmor %vm802, %vm1090
    %vm1155 = vmor %vm803, %vm1091
    %vm1156 = vmor %vm804, %vm1092
    %vm1157 = vmor %vm805, %vm1093
    %vm1158 = vmor %vm806, %vm1094
    %vm1159 = vmor %vm807, %vm1095
    %vm1160 = vmor %vm808, %vm1096
    %vm1161 = vmor %vm809, %vm1097
    %vm1162 = vmor %vm810, %vm1098
    %vm1163 = vmor %vm811, %vm1099
    %vm1164 = vmor %vm812, %vm1100
    %vm1165 = vmor %vm813, %vm1101
    %vm1166 = vmor %vm814, %vm1102
    %vm1167 = vmor %vm815, %vm1103
    %vm1168 = vmor %vm816, %vm1104
    %vm1169 = vmor %vm817, %vm1105
    %vm1170 = vmor %vm818, %vm1106
    %vm1171 = vmor %vm819, %vm1107
    %vm1172 = vmor %vm820, %vm1108
    %vm1173 = vmor %vm821, %vm1109
    %vm1174 = vmor %vm822, %vm1110
    %vm1175 = vmor %vm823, %vm1111
    %vm1176 = vmor %vm824, %vm1112
    %vm1177 = vmor %vm825, %vm1113
    %vm1178 = vmor %vm826, %vm1114
    %vm1179 = vmor %vm827, %vm1115
    %v1180 = vsel %vm1116, 1, 0
    %v1181 = vsel %vm1117, 1, 0
    %v1182 = vsel %vm1118, 1, 0
    %v1183 = vsel %vm1119, 1, 0
    %v1184 = vsel %vm1120, 1, 0
    %v1185 = vsel %vm1121, 1, 0
    %v1186 = vsel %vm1122, 1, 0
    %v1187 = vsel %vm1123, 1, 0
    %v1188 = vsel %vm1124, 1, 0
    %v1189 = vsel %vm1125, 1, 0
    %v1190 = vsel %vm1126, 1, 0
    %v1191 = vsel %vm1127, 1, 0
    %v1192 = vsel %vm1128, 1, 0
    %v1193 = vsel %vm1129, 1, 0
    %v1194 = vsel %vm1130, 1, 0
    %v1195 = vsel %vm1131, 1, 0
    %v1196 = vsel %vm1132, 1, 0
    %v1197 = vsel %vm1133, 1, 0
    %v1198 = vsel %vm1134, 1, 0
    %v1199 = vsel %vm1135, 1, 0
    %v1200 = vsel %vm1136, 1, 0
    %v1201 = vsel %vm1137, 1, 0
    %v1202 = vsel %vm1138, 1, 0
    %v1203 = vsel %vm1139, 1, 0
    %v1204 = vsel %vm1140, 1, 0
    %v1205 = vsel %vm1141, 1, 0
    %v1206 = vsel %vm1142, 1, 0
    %v1207 = vsel %vm1143, 1, 0
    %v1208 = vsel %vm1144, 1, 0
    %v1209 = vsel %vm1145, 1, 0
    %v1210 = vsel %vm1146, 1, 0
    %v1211 = vsel %vm1147, 1, 0
    %v1212 = vsel %vm1148, 1, 0
    %v1213 = vsel %vm1149, 1, 0
    %v1214 = vsel %vm1150, 1, 0
    %v1215 = vsel %vm1151, 1, 0
    %v1216 = vsel %vm1152, 1, 0
    %v1217 = vsel %vm1153, 1, 0
    %v1218 = vsel %vm1154, 1, 0
    %v1219 = vsel %vm1155, 1, 0
    %v1220 = vsel %vm1156, 1, 0
    %v1221 = vsel %vm1157, 1, 0
    %v1222 = vsel %vm1158, 1, 0
    %v1223 = vsel %vm1159, 1, 0
    %v1224 = vsel %vm1160, 1, 0
    %v1225 = vsel %vm1161, 1, 0
    %v1226 = vsel %vm1162, 1, 0
    %v1227 = vsel %vm1163, 1, 0
    %v1228 = vsel %vm1164, 1, 0
    %v1229 = vsel %vm1165, 1, 0
    %v1230 = vsel %vm1166, 1, 0
    %v1231 = vsel %vm1167, 1, 0
    %v1232 = vsel %vm1168, 1, 0
    %v1233 = vsel %vm1169, 1, 0
    %v1234 = vsel %vm1170, 1, 0
    %v1235 = vsel %vm1171, 1, 0
    %v1236 = vsel %vm1172, 1, 0
    %v1237 = vsel %vm1173, 1, 0
    %v1238 = vsel %vm1174, 1, 0
    %v1239 = vsel %vm1175, 1, 0
    %v1240 = vsel %vm1176, 1, 0
    %v1241 = vsel %vm1177, 1, 0
    %v1242 = vsel %vm1178, 1, 0
    %v1243 = vsel %vm1179, 1, 0
    %v1244 = vcvt.s32.f32 %v1180
    %v1245 = vcvt.s32.f32 %v1181
    %v1246 = vcvt.s32.f32 %v1182
    %v1247 = vcvt.s32.f32 %v1183
    %v1248 = vcvt.s32.f32 %v1184
    %v1249 = vcvt.s32.f32 %v1185
    %v1250 = vcvt.s32.f32 %v1186
    %v1251 = vcvt.s32.f32 %v1187
    %v1252 = vcvt.s32.f32 %v1188
    %v1253 = vcvt.s32.f32 %v1189
    %v1254 = vcvt.s32.f32 %v1190
    %v1255 = vcvt.s32.f32 %v1191
    %v1256 = vcvt.s32.f32 %v1192
    %v1257 = vcvt.s32.f32 %v1193
    %v1258 = vcvt.s32.f32 %v1194
    %v1259 = vcvt.s32.f32 %v1195
    %v1260 = vcvt.s32.f32 %v1196
    %v1261 = vcvt.s32.f32 %v1197
    %v1262 = vcvt.s32.f32 %v1198
    %v1263 = vcvt.s32.f32 %v1199
    %v1264 = vcvt.s32.f32 %v1200
    %v1265 = vcvt.s32.f32 %v1201
    %v1266 = vcvt.s32.f32 %v1202
    %v1267 = vcvt.s32.f32 %v1203
    %v1268 = vcvt.s32.f32 %v1204
    %v1269 = vcvt.s32.f32 %v1205
    %v1270 = vcvt.s32.f32 %v1206
    %v1271 = vcvt.s32.f32 %v1207
    %v1272 = vcvt.s32.f32 %v1208
    %v1273 = vcvt.s32.f32 %v1209
    %v1274 = vcvt.s32.f32 %v1210
    %v1275 = vcvt.s32.f32 %v1211
    %v1276 = vcvt.s32.f32 %v1212
    %v1277 = vcvt.s32.f32 %v1213
    %v1278 = vcvt.s32.f32 %v1214
    %v1279 = vcvt.s32.f32 %v1215
    %v1280 = vcvt.s32.f32 %v1216
    %v1281 = vcvt.s32.f32 %v1217
    %v1282 = vcvt.s32.f32 %v1218
    %v1283 = vcvt.s32.f32 %v1219
    %v1284 = vcvt.s32.f32 %v1220
    %v1285 = vcvt.s32.f32 %v1221
    %v1286 = vcvt.s32.f32 %v1222
    %v1287 = vcvt.s32.f32 %v1223
    %v1288 = vcvt.s32.f32 %v1224
    %v1289 = vcvt.s32.f32 %v1225
    %v1290 = vcvt.s32.f32 %v1226
    %v1291 = vcvt.s32.f32 %v1227
    %v1292 = vcvt.s32.f32 %v1228
    %v1293 = vcvt.s32.f32 %v1229
    %v1294 = vcvt.s32.f32 %v1230
    %v1295 = vcvt.s32.f32 %v1231
    %v1296 = vcvt.s32.f32 %v1232
    %v1297 = vcvt.s32.f32 %v1233
    %v1298 = vcvt.s32.f32 %v1234
    %v1299 = vcvt.s32.f32 %v1235
    %v1300 = vcvt.s32.f32 %v1236
    %v1301 = vcvt.s32.f32 %v1237
    %v1302 = vcvt.s32.f32 %v1238
    %v1303 = vcvt.s32.f32 %v1239
    %v1304 = vcvt.s32.f32 %v1240
    %v1305 = vcvt.s32.f32 %v1241
    %v1306 = vcvt.s32.f32 %v1242
    %v1307 = vcvt.s32.f32 %v1243
    %v1308 = vadd.f32 %v1244, %v1246
    %v1309 = vadd.f32 %v1308, %v1248
    %v1310 = vadd.f32 %v1309, %v1250
    %v1311 = vadd.f32 %v1310, %v1252
    %v1312 = vadd.f32 %v1311, %v1254
    %v1313 = vadd.f32 %v1312, %v1256
    %v1314 = vadd.f32 %v1313, %v1258
    %v1315 = vadd.f32 %v1314, %v1260
    %v1316 = vadd.f32 %v1315, %v1262
    %v1317 = vadd.f32 %v1316, %v1264
    %v1318 = vadd.f32 %v1317, %v1266
    %v1319 = vadd.f32 %v1318, %v1268
    %v1320 = vadd.f32 %v1319, %v1270
    %v1321 = vadd.f32 %v1320, %v1272
    %v1322 = vadd.f32 %v1321, %v1274
    %v1323 = vadd.f32 %v1245, %v1247
    %v1324 = vadd.f32 %v1323, %v1249
    %v1325 = vadd.f32 %v1324, %v1251
    %v1326 = vadd.f32 %v1325, %v1253
    %v1327 = vadd.f32 %v1326, %v1255
    %v1328 = vadd.f32 %v1327, %v1257
    %v1329 = vadd.f32 %v1328, %v1259
    %v1330 = vadd.f32 %v1329, %v1261
    %v1331 = vadd.f32 %v1330, %v1263
    %v1332 = vadd.f32 %v1331, %v1265
    %v1333 = vadd.f32 %v1332, %v1267
    %v1334 = vadd.f32 %v1333, %v1269
    %v1335 = vadd.f32 %v1334, %v1271
    %v1336 = vadd.f32 %v1335, %v1273
    %v1337 = vadd.f32 %v1336, %v1275
    %v1338 = vadd.f32 %v1276, %v1278
    %v1339 = vadd.f32 %v1338, %v1280
    %v1340 = vadd.f32 %v1339, %v1282
    %v1341 = vadd.f32 %v1340, %v1284
    %v1342 = vadd.f32 %v1341, %v1286
    %v1343 = vadd.f32 %v1342, %v1288
    %v1344 = vadd.f32 %v1343, %v1290
    %v1345 = vadd.f32 %v1344, %v1292
    %v1346 = vadd.f32 %v1345, %v1294
    %v1347 = vadd.f32 %v1346, %v1296
    %v1348 = vadd.f32 %v1347, %v1298
    %v1349 = vadd.f32 %v1348, %v1300
    %v1350 = vadd.f32 %v1349, %v1302
    %v1351 = vadd.f32 %v1350, %v1304
    %v1352 = vadd.f32 %v1351, %v1306
    %v1353 = vadd.f32 %v1277, %v1279
    %v1354 = vadd.f32 %v1353, %v1281
    %v1355 = vadd.f32 %v1354, %v1283
    %v1356 = vadd.f32 %v1355, %v1285
    %v1357 = vadd.f32 %v1356, %v1287
    %v1358 = vadd.f32 %v1357, %v1289
    %v1359 = vadd.f32 %v1358, %v1291
    %v1360 = vadd.f32 %v1359, %v1293
    %v1361 = vadd.f32 %v1360, %v1295
    %v1362 = vadd.f32 %v1361, %v1297
    %v1363 = vadd.f32 %v1362, %v1299
    %v1364 = vadd.f32 %v1363, %v1301
    %v1365 = vadd.f32 %v1364, %v1303
    %v1366 = vadd.f32 %v1365, %v1305
    %v1367 = vadd.f32 %v1366, %v1307
    %vm1368 = vcmp.lt.f32.partialorder %v1322, 8.0
    %vm1369 = vcmp.lt.f32.partialorder %v1337, 8.0
    %vm1370 = vcmp.lt.f32.partialorder %v1352, 8.0
    %vm1371 = vcmp.lt.f32.partialorder %v1367, 8.0
    %v1372 = vsel %vm1368, 1, 0
    %v1373 = vsel %vm1369, 1, 0
    %v1374 = vsel %vm1370, 1, 0
    %v1375 = vsel %vm1371, 1, 0
    %v1376 = vcvt.s32.f32 %v1372
    %v1377 = vcvt.s32.f32 %v1373
    %v1378 = vcvt.s32.f32 %v1374
    %v1379 = vcvt.s32.f32 %v1375
    %vm1380 = vcmask 130048
    %v1382 = vsel %vm1380, %v47, 0
    %v1385 = vsel %vm1380, %v48, 0
    %1387 = vmatprep.subr.mxu0 0.0
    %1388 = vmatpush1.msra.mxu0 0.0
    %1389 = vmatprep.subr.mxu0 0.0
    %1390 = vmatpush1.msra.mxu0 0.0
    %1391 = vmatprep.subr.mxu0 0.0
    %1392 = vmatpush1.msra.mxu0 0.0
    %1393 = vmatprep.subr.mxu0 0.0
    %1394 = vmatpush1.msra.mxu0 0.0
    %1395 = vmatprep.subr.mxu0 0.0
    %1396 = vmatpush1.msra.mxu0 0.0
    %1397 = vmatprep.subr.mxu0 0.0
    %1398 = vmatpush1.msra.mxu0 0.0
    %1399 = vmatprep.subr.mxu0 0.0
    %1400 = vmatpush1.msra.mxu0 0.0
    %1401 = vmatprep.subr.mxu0 0.0
    %1402 = vmatpush1.msra.mxu0 0.0
    %1403 = vmatprep.subr.mxu0 0.0
    %1404 = vmatpush1.msra.mxu0 0.0
    %1405 = vmatprep.subr.mxu0 0.0
    %1406 = vmatpush1.msra.mxu0 0.0
    %1407 = vmatprep.subr.mxu0 0.0
    %1408 = vmatpush1.msra.mxu0 0.0
    %1409 = vmatprep.subr.mxu0 0.0
    %1410 = vmatpush1.msra.mxu0 0.0
    %1411 = vmatprep.subr.mxu0 0.0
    %1412 = vmatpush1.msra.mxu0 0.0
    %1413 = vmatprep.subr.mxu0 0.0
    %1414 = vmatpush1.msra.mxu0 0.0
    %1415 = vmatprep.subr.mxu0 0.0
    %1416 = vmatpush1.msra.mxu0 %v1377
    %1417 = vmatprep.subr.mxu0 0.0
    %1418 = vmatpush1.msra.mxu0 %v1376
    %1419 = vmatprep.subr.mxu0 0.0
    %1420 = vmatpush2.msra.mxu0 0.0
    %1421 = vmatprep.subr.mxu0 0.0
    %1422 = vmatpush2.msra.mxu0 0.0
    %1423 = vmatprep.subr.mxu0 0.0
    %1424 = vmatpush2.msra.mxu0 0.0
    %1425 = vmatprep.subr.mxu0 0.0
    %1426 = vmatpush2.msra.mxu0 0.0
    %1427 = vmatprep.subr.mxu0 0.0
    %1428 = vmatpush2.msra.mxu0 0.0
    %1429 = vmatprep.subr.mxu0 0.0
    %1430 = vmatpush2.msra.mxu0 0.0
    %1431 = vmatprep.subr.mxu0 0.0
    %1432 = vmatpush2.msra.mxu0 0.0
    %1433 = vmatprep.subr.mxu0 0.0
    %1434 = vmatpush2.msra.mxu0 0.0
    %1435 = vmatprep.subr.mxu0 0.0
    %1436 = vmatpush2.msra.mxu0 0.0
    %1437 = vmatprep.subr.mxu0 0.0
    %1438 = vmatpush2.msra.mxu0 0.0
    %1439 = vmatprep.subr.mxu0 0.0
    %1440 = vmatpush2.msra.mxu0 0.0
    %1441 = vmatprep.subr.mxu0 0.0
    %1442 = vmatpush2.msra.mxu0 0.0
    %1443 = vmatprep.subr.mxu0 0.0
    %1444 = vmatpush2.msra.mxu0 0.0
    %1445 = vmatprep.subr.mxu0 0.0
    %1446 = vmatpush2.msra.mxu0 0.0
    %1447 = vmatprep.subr.mxu0 0.0
    %1448 = vmatpush2.msra.mxu0 0.0
    %1449 = vmatprep.subr.mxu0 0.0
    %1450 = vmatpush2.msra.mxu0 0.0
    %1451 = vmatprep.mubr.f32.mxu0 0.0
    %1452 = vmatmul.mubr.f32.gmra.mxu0 %v1382
    %v1453 = vpop.f32.mrf.mxu0
    %v1454 = vadd.f32 0.0, %v1453
    %v1455 = vpop.f32.mrf.mxu0
    %1456 = vmatprep.mubr.f32.mxu0 0.0
    %1457 = vmatmul.mubr.f32.gmra.mxu0 %v1385
    %v1458 = vpop.f32.mrf.mxu0
    %v1459 = vadd.f32 0.0, %v1458
    %v1460 = vpop.f32.mrf.mxu0
    %1461 = vdwg.mxu0
    %1462 = vmatprep.subr.mxu0 0.0
    %1463 = vmatpush1.msra.mxu0 0.0
    %1464 = vmatprep.subr.mxu0 0.0
    %1465 = vmatpush1.msra.mxu0 0.0
    %1466 = vmatprep.subr.mxu0 0.0
    %1467 = vmatpush1.msra.mxu0 0.0
    %1468 = vmatprep.subr.mxu0 0.0
    %1469 = vmatpush1.msra.mxu0 0.0
    %1470 = vmatprep.subr.mxu0 0.0
    %1471 = vmatpush1.msra.mxu0 0.0
    %1472 = vmatprep.subr.mxu0 0.0
    %1473 = vmatpush1.msra.mxu0 0.0
    %1474 = vmatprep.subr.mxu0 0.0
    %1475 = vmatpush1.msra.mxu0 0.0
    %1476 = vmatprep.subr.mxu0 0.0
    %1477 = vmatpush1.msra.mxu0 0.0
    %1478 = vmatprep.subr.mxu0 0.0
    %1479 = vmatpush1.msra.mxu0 0.0
    %1480 = vmatprep.subr.mxu0 0.0
    %1481 = vmatpush1.msra.mxu0 0.0
    %1482 = vmatprep.subr.mxu0 0.0
    %1483 = vmatpush1.msra.mxu0 0.0
    %1484 = vmatprep.subr.mxu0 0.0
    %1485 = vmatpush1.msra.mxu0 0.0
    %1486 = vmatprep.subr.mxu0 0.0
    %1487 = vmatpush1.msra.mxu0 0.0
    %1488 = vmatprep.subr.mxu0 0.0
    %1489 = vmatpush1.msra.mxu0 0.0
    %1490 = vmatprep.subr.mxu0 0.0
    %1491 = vmatpush1.msra.mxu0 %v1379
    %1492 = vmatprep.subr.mxu0 0.0
    %1493 = vmatpush1.msra.mxu0 %v1378
    %1494 = vmatprep.subr.mxu0 0.0
    %1495 = vmatpush2.msra.mxu0 0.0
    %1496 = vmatprep.subr.mxu0 0.0
    %1497 = vmatpush2.msra.mxu0 0.0
    %1498 = vmatprep.subr.mxu0 0.0
    %1499 = vmatpush2.msra.mxu0 0.0
    %1500 = vmatprep.subr.mxu0 0.0
    %1501 = vmatpush2.msra.mxu0 0.0
    %1502 = vmatprep.subr.mxu0 0.0
    %1503 = vmatpush2.msra.mxu0 0.0
    %1504 = vmatprep.subr.mxu0 0.0
    %1505 = vmatpush2.msra.mxu0 0.0
    %1506 = vmatprep.subr.mxu0 0.0
    %1507 = vmatpush2.msra.mxu0 0.0
    %1508 = vmatprep.subr.mxu0 0.0
    %1509 = vmatpush2.msra.mxu0 0.0
    %1510 = vmatprep.subr.mxu0 0.0
    %1511 = vmatpush2.msra.mxu0 0.0
    %1512 = vmatprep.subr.mxu0 0.0
    %1513 = vmatpush2.msra.mxu0 0.0
    %1514 = vmatprep.subr.mxu0 0.0
    %1515 = vmatpush2.msra.mxu0 0.0
    %1516 = vmatprep.subr.mxu0 0.0
    %1517 = vmatpush2.msra.mxu0 0.0
    %1518 = vmatprep.subr.mxu0 0.0
    %1519 = vmatpush2.msra.mxu0 0.0
    %1520 = vmatprep.subr.mxu0 0.0
    %1521 = vmatpush2.msra.mxu0 0.0
    %1522 = vmatprep.subr.mxu0 0.0
    %1523 = vmatpush2.msra.mxu0 0.0
    %1524 = vmatprep.subr.mxu0 0.0
    %1525 = vmatpush2.msra.mxu0 0.0
    %1526 = vmatprep.mubr.f32.mxu0 0.0
    %1527 = vmatmul.mubr.f32.gmra.mxu0 %v1382
    %v1528 = vpop.f32.mrf.mxu0
    %v1529 = vadd.f32 0.0, %v1528
    %v1530 = vpop.f32.mrf.mxu0
    %1531 = vmatprep.mubr.f32.mxu0 0.0
    %1532 = vmatmul.mubr.f32.gmra.mxu0 %v1385
    %v1533 = vpop.f32.mrf.mxu0
    %v1534 = vadd.f32 0.0, %v1533
    %v1535 = vpop.f32.mrf.mxu0
    %1536 = vdwg.mxu0
    %v1537 = vmul.f32 %v400, %v1376
    %v1538 = vmul.f32 %v401, %v1377
    %v1539 = vmul.f32 %v402, %v1378
    %v1540 = vmul.f32 %v403, %v1379
    %vm1541 = vcmp.eq.f32.partialorder %v1454, 0.0
    %vm1542 = vcmp.eq.f32.partialorder %v1459, 0.0
    %vm1543 = vcmp.eq.f32.partialorder %v1529, 0.0
    %vm1544 = vcmp.eq.f32.partialorder %v1534, 0.0
    %v1545 = vsel %vm1541, %v1537, 0.0
    %v1546 = vsel %vm1542, %v1538, 0.0
    %v1547 = vsel %vm1543, %v1539, 0.0
    %v1548 = vsel %vm1544, %v1540, 0.0
    %v1549 = vadd.f32 %v1545, %v1546
    %v1550 = vrot.slane %v1549, 4
    %v1551 = vadd.f32 %v1549, %v1550
    %v1552 = vrot.slane %v1551, 2
    %v1553 = vadd.f32 %v1551, %v1552
    %v1554 = vrot.slane %v1553, 1
    %v1555 = vadd.f32 %v1553, %v1554
    %v1556 = vadd.f32 %v1547, %v1548
    %v1557 = vrot.slane %v1556, 4
    %v1558 = vadd.f32 %v1556, %v1557
    %v1559 = vrot.slane %v1558, 2
    %v1560 = vadd.f32 %v1558, %v1559
    %v1561 = vrot.slane %v1560, 1
    %v1562 = vadd.f32 %v1560, %v1561
    %vm1563 = vcmp.eq.f32.partialorder %v1454, 1.0
    %vm1564 = vcmp.eq.f32.partialorder %v1459, 1.0
    %vm1565 = vcmp.eq.f32.partialorder %v1529, 1.0
    %vm1566 = vcmp.eq.f32.partialorder %v1534, 1.0
    %v1567 = vsel %vm1563, %v1537, 0.0
    %v1568 = vsel %vm1564, %v1538, 0.0
    %v1569 = vsel %vm1565, %v1539, 0.0
    %v1570 = vsel %vm1566, %v1540, 0.0
    %v1571 = vadd.f32 %v1567, %v1568
    %v1572 = vrot.slane %v1571, 4
    %v1573 = vadd.f32 %v1571, %v1572
    %v1574 = vrot.slane %v1573, 2
    %v1575 = vadd.f32 %v1573, %v1574
    %v1576 = vrot.slane %v1575, 1
    %v1577 = vadd.f32 %v1575, %v1576
    %v1578 = vadd.f32 %v1569, %v1570
    %v1579 = vrot.slane %v1578, 4
    %v1580 = vadd.f32 %v1578, %v1579
    %v1581 = vrot.slane %v1580, 2
    %v1582 = vadd.f32 %v1580, %v1581
    %v1583 = vrot.slane %v1582, 1
    %v1584 = vadd.f32 %v1582, %v1583
    %vm1585 = vcmp.eq.f32.partialorder %v1454, 2.0
    %vm1586 = vcmp.eq.f32.partialorder %v1459, 2.0
    %vm1587 = vcmp.eq.f32.partialorder %v1529, 2.0
    %vm1588 = vcmp.eq.f32.partialorder %v1534, 2.0
    %v1589 = vsel %vm1585, %v1537, 0.0
    %v1590 = vsel %vm1586, %v1538, 0.0
    %v1591 = vsel %vm1587, %v1539, 0.0
    %v1592 = vsel %vm1588, %v1540, 0.0
    %v1593 = vadd.f32 %v1589, %v1590
    %v1594 = vrot.slane %v1593, 4
    %v1595 = vadd.f32 %v1593, %v1594
    %v1596 = vrot.slane %v1595, 2
    %v1597 = vadd.f32 %v1595, %v1596
    %v1598 = vrot.slane %v1597, 1
    %v1599 = vadd.f32 %v1597, %v1598
    %v1600 = vadd.f32 %v1591, %v1592
    %v1601 = vrot.slane %v1600, 4
    %v1602 = vadd.f32 %v1600, %v1601
    %v1603 = vrot.slane %v1602, 2
    %v1604 = vadd.f32 %v1602, %v1603
    %v1605 = vrot.slane %v1604, 1
    %v1606 = vadd.f32 %v1604, %v1605
    %vm1607 = vcmp.eq.f32.partialorder %v1454, 3.0
    %vm1608 = vcmp.eq.f32.partialorder %v1459, 3.0
    %vm1609 = vcmp.eq.f32.partialorder %v1529, 3.0
    %vm1610 = vcmp.eq.f32.partialorder %v1534, 3.0
    %v1611 = vsel %vm1607, %v1537, 0.0
    %v1612 = vsel %vm1608, %v1538, 0.0
    %v1613 = vsel %vm1609, %v1539, 0.0
    %v1614 = vsel %vm1610, %v1540, 0.0
    %v1615 = vadd.f32 %v1611, %v1612
    %v1616 = vrot.slane %v1615, 4
    %v1617 = vadd.f32 %v1615, %v1616
    %v1618 = vrot.slane %v1617, 2
    %v1619 = vadd.f32 %v1617, %v1618
    %v1620 = vrot.slane %v1619, 1
    %v1621 = vadd.f32 %v1619, %v1620
    %v1622 = vadd.f32 %v1613, %v1614
    %v1623 = vrot.slane %v1622, 4
    %v1624 = vadd.f32 %v1622, %v1623
    %v1625 = vrot.slane %v1624, 2
    %v1626 = vadd.f32 %v1624, %v1625
    %v1627 = vrot.slane %v1626, 1
    %v1628 = vadd.f32 %v1626, %v1627
    %vm1629 = vcmp.eq.f32.partialorder %v1454, 4.0
    %vm1630 = vcmp.eq.f32.partialorder %v1459, 4.0
    %vm1631 = vcmp.eq.f32.partialorder %v1529, 4.0
    %vm1632 = vcmp.eq.f32.partialorder %v1534, 4.0
    %v1633 = vsel %vm1629, %v1537, 0.0
    %v1634 = vsel %vm1630, %v1538, 0.0
    %v1635 = vsel %vm1631, %v1539, 0.0
    %v1636 = vsel %vm1632, %v1540, 0.0
    %v1637 = vadd.f32 %v1633, %v1634
    %v1638 = vrot.slane %v1637, 4
    %v1639 = vadd.f32 %v1637, %v1638
    %v1640 = vrot.slane %v1639, 2
    %v1641 = vadd.f32 %v1639, %v1640
    %v1642 = vrot.slane %v1641, 1
    %v1643 = vadd.f32 %v1641, %v1642
    %v1644 = vadd.f32 %v1635, %v1636
    %v1645 = vrot.slane %v1644, 4
    %v1646 = vadd.f32 %v1644, %v1645
    %v1647 = vrot.slane %v1646, 2
    %v1648 = vadd.f32 %v1646, %v1647
    %v1649 = vrot.slane %v1648, 1
    %v1650 = vadd.f32 %v1648, %v1649
    %vm1651 = vcmp.eq.f32.partialorder %v1454, 5.0
    %vm1652 = vcmp.eq.f32.partialorder %v1459, 5.0
    %vm1653 = vcmp.eq.f32.partialorder %v1529, 5.0
    %vm1654 = vcmp.eq.f32.partialorder %v1534, 5.0
    %v1655 = vsel %vm1651, %v1537, 0.0
    %v1656 = vsel %vm1652, %v1538, 0.0
    %v1657 = vsel %vm1653, %v1539, 0.0
    %v1658 = vsel %vm1654, %v1540, 0.0
    %v1659 = vadd.f32 %v1655, %v1656
    %v1660 = vrot.slane %v1659, 4
    %v1661 = vadd.f32 %v1659, %v1660
    %v1662 = vrot.slane %v1661, 2
    %v1663 = vadd.f32 %v1661, %v1662
    %v1664 = vrot.slane %v1663, 1
    %v1665 = vadd.f32 %v1663, %v1664
    %v1666 = vadd.f32 %v1657, %v1658
    %v1667 = vrot.slane %v1666, 4
    %v1668 = vadd.f32 %v1666, %v1667
    %v1669 = vrot.slane %v1668, 2
    %v1670 = vadd.f32 %v1668, %v1669
    %v1671 = vrot.slane %v1670, 1
    %v1672 = vadd.f32 %v1670, %v1671
    %vm1673 = vcmp.eq.f32.partialorder %v1454, 6.0
    %vm1674 = vcmp.eq.f32.partialorder %v1459, 6.0
    %vm1675 = vcmp.eq.f32.partialorder %v1529, 6.0
    %vm1676 = vcmp.eq.f32.partialorder %v1534, 6.0
    %v1677 = vsel %vm1673, %v1537, 0.0
    %v1678 = vsel %vm1674, %v1538, 0.0
    %v1679 = vsel %vm1675, %v1539, 0.0
    %v1680 = vsel %vm1676, %v1540, 0.0
    %v1681 = vadd.f32 %v1677, %v1678
    %v1682 = vrot.slane %v1681, 4
    %v1683 = vadd.f32 %v1681, %v1682
    %v1684 = vrot.slane %v1683, 2
    %v1685 = vadd.f32 %v1683, %v1684
    %v1686 = vrot.slane %v1685, 1
    %v1687 = vadd.f32 %v1685, %v1686
    %v1688 = vadd.f32 %v1679, %v1680
    %v1689 = vrot.slane %v1688, 4
    %v1690 = vadd.f32 %v1688, %v1689
    %v1691 = vrot.slane %v1690, 2
    %v1692 = vadd.f32 %v1690, %v1691
    %v1693 = vrot.slane %v1692, 1
    %v1694 = vadd.f32 %v1692, %v1693
    %vm1695 = vcmp.eq.f32.partialorder %v1454, 7.0
    %vm1696 = vcmp.eq.f32.partialorder %v1459, 7.0
    %vm1697 = vcmp.eq.f32.partialorder %v1529, 7.0
    %vm1698 = vcmp.eq.f32.partialorder %v1534, 7.0
    %v1699 = vsel %vm1695, %v1537, 0.0
    %v1700 = vsel %vm1696, %v1538, 0.0
    %v1701 = vsel %vm1697, %v1539, 0.0
    %v1702 = vsel %vm1698, %v1540, 0.0
    %v1703 = vadd.f32 %v1699, %v1700
    %v1704 = vrot.slane %v1703, 4
    %v1705 = vadd.f32 %v1703, %v1704
    %v1706 = vrot.slane %v1705, 2
    %v1707 = vadd.f32 %v1705, %v1706
    %v1708 = vrot.slane %v1707, 1
    %v1709 = vadd.f32 %v1707, %v1708
    %v1710 = vadd.f32 %v1701, %v1702
    %v1711 = vrot.slane %v1710, 4
    %v1712 = vadd.f32 %v1710, %v1711
    %v1713 = vrot.slane %v1712, 2
    %v1714 = vadd.f32 %v1712, %v1713
    %v1715 = vrot.slane %v1714, 1
    %v1716 = vadd.f32 %v1714, %v1715
    %vm1719 = vcmask 1041409
    %v1720 = vsel %vm1719, %v1562, %v1555
    %v1724 = vsel %vm1719, %v1584, %v1577
    %v1728 = vsel %vm1719, %v1606, %v1599
    %v1732 = vsel %vm1719, %v1628, %v1621
    %v1736 = vsel %vm1719, %v1650, %v1643
    %v1740 = vsel %vm1719, %v1672, %v1665
    %v1744 = vsel %vm1719, %v1694, %v1687
    %v1748 = vsel %vm1719, %v1716, %v1709
    %v1750 = vld [vmem:[%s7] sm:$0xff]
    %v1751 = vld [vmem:[%s7 + $0x8] sm:$0xff]
    %v1752 = vld [vmem:[%s7 + $0x10] sm:$0xff]
    %v1753 = vld [vmem:[%s7 + $0x18] sm:$0xff]
    %v1754 = vld [vmem:[%s7 + $0x20] sm:$0xff]
    %v1755 = vld [vmem:[%s7 + $0x28] sm:$0xff]
    %v1756 = vld [vmem:[%s7 + $0x30] sm:$0xff]
    %v1757 = vld [vmem:[%s7 + $0x38] sm:$0xff]
    %v1758 = vld [vmem:[%s7 + $0x40] sm:$0xff]
    %v1759 = vld [vmem:[%s7 + $0x48] sm:$0xff]
    %v1760 = vld [vmem:[%s7 + $0x50] sm:$0xff]
    %v1761 = vld [vmem:[%s7 + $0x58] sm:$0xff]
    %v1762 = vld [vmem:[%s7 + $0x60] sm:$0xff]
    %v1763 = vld [vmem:[%s7 + $0x68] sm:$0xff]
    %v1764 = vld [vmem:[%s7 + $0x70] sm:$0xff]
    %v1765 = vld [vmem:[%s7 + $0x78] sm:$0xff]
    %v1766 = vld [vmem:[%s7 + $0x80] sm:$0xff]
    %v1767 = vld [vmem:[%s7 + $0x88] sm:$0xff]
    %v1768 = vld [vmem:[%s7 + $0x90] sm:$0xff]
    %v1769 = vld [vmem:[%s7 + $0x98] sm:$0xff]
    %v1770 = vld [vmem:[%s7 + $0xa0] sm:$0xff]
    %v1771 = vld [vmem:[%s7 + $0xa8] sm:$0xff]
    %v1772 = vld [vmem:[%s7 + $0xb0] sm:$0xff]
    %v1773 = vld [vmem:[%s7 + $0xb8] sm:$0xff]
    %v1774 = vld [vmem:[%s7 + $0xc0] sm:$0xff]
    %v1775 = vld [vmem:[%s7 + $0xc8] sm:$0xff]
    %v1776 = vld [vmem:[%s7 + $0xd0] sm:$0xff]
    %v1777 = vld [vmem:[%s7 + $0xd8] sm:$0xff]
    %v1778 = vld [vmem:[%s7 + $0xe0] sm:$0xff]
    %v1779 = vld [vmem:[%s7 + $0xe8] sm:$0xff]
    %v1780 = vld [vmem:[%s7 + $0xf0] sm:$0xff]
    %v1781 = vld [vmem:[%s7 + $0xf8] sm:$0xff]
    %v1782 = vld [vmem:[%s7 + $0x100] sm:$0xff]
    %v1783 = vld [vmem:[%s7 + $0x108] sm:$0xff]
    %v1784 = vld [vmem:[%s7 + $0x110] sm:$0xff]
    %v1785 = vld [vmem:[%s7 + $0x118] sm:$0xff]
    %v1786 = vld [vmem:[%s7 + $0x120] sm:$0xff]
    %v1787 = vld [vmem:[%s7 + $0x128] sm:$0xff]
    %v1788 = vld [vmem:[%s7 + $0x130] sm:$0xff]
    %v1789 = vld [vmem:[%s7 + $0x138] sm:$0xff]
    %v1790 = vld [vmem:[%s7 + $0x140] sm:$0xff]
    %v1791 = vld [vmem:[%s7 + $0x148] sm:$0xff]
    %v1792 = vld [vmem:[%s7 + $0x150] sm:$0xff]
    %v1793 = vld [vmem:[%s7 + $0x158] sm:$0xff]
    %v1794 = vld [vmem:[%s7 + $0x160] sm:$0xff]
    %v1795 = vld [vmem:[%s7 + $0x168] sm:$0xff]
    %v1796 = vld [vmem:[%s7 + $0x170] sm:$0xff]
    %v1797 = vld [vmem:[%s7 + $0x178] sm:$0xff]
    %v1798 = vld [vmem:[%s7 + $0x180] sm:$0xff]
    %v1799 = vld [vmem:[%s7 + $0x188] sm:$0xff]
    %v1800 = vld [vmem:[%s7 + $0x190] sm:$0xff]
    %v1801 = vld [vmem:[%s7 + $0x198] sm:$0xff]
    %v1802 = vld [vmem:[%s7 + $0x1a0] sm:$0xff]
    %v1803 = vld [vmem:[%s7 + $0x1a8] sm:$0xff]
    %v1804 = vld [vmem:[%s7 + $0x1b0] sm:$0xff]
    %v1805 = vld [vmem:[%s7 + $0x1b8] sm:$0xff]
    %v1806 = vld [vmem:[%s7 + $0x1c0] sm:$0xff]
    %v1807 = vld [vmem:[%s7 + $0x1c8] sm:$0xff]
    %v1808 = vld [vmem:[%s7 + $0x1d0] sm:$0xff]
    %v1809 = vld [vmem:[%s7 + $0x1d8] sm:$0xff]
    %v1810 = vld [vmem:[%s7 + $0x1e0] sm:$0xff]
    %v1811 = vld [vmem:[%s7 + $0x1e8] sm:$0xff]
    %v1812 = vld [vmem:[%s7 + $0x1f0] sm:$0xff]
    %v1813 = vld [vmem:[%s7 + $0x1f8] sm:$0xff]
    %v1814 = vld [vmem:[%s7 + $0x200] sm:$0xff]
    %v1815 = vld [vmem:[%s7 + $0x208] sm:$0xff]
    %v1816 = vld [vmem:[%s7 + $0x210] sm:$0xff]
    %v1817 = vld [vmem:[%s7 + $0x218] sm:$0xff]
    %v1818 = vld [vmem:[%s7 + $0x220] sm:$0xff]
    %v1819 = vld [vmem:[%s7 + $0x228] sm:$0xff]
    %v1820 = vld [vmem:[%s7 + $0x230] sm:$0xff]
    %v1821 = vld [vmem:[%s7 + $0x238] sm:$0xff]
    %v1822 = vld [vmem:[%s7 + $0x240] sm:$0xff]
    %v1823 = vld [vmem:[%s7 + $0x248] sm:$0xff]
    %v1824 = vld [vmem:[%s7 + $0x250] sm:$0xff]
    %v1825 = vld [vmem:[%s7 + $0x258] sm:$0xff]
    %v1826 = vld [vmem:[%s7 + $0x260] sm:$0xff]
    %v1827 = vld [vmem:[%s7 + $0x268] sm:$0xff]
    %v1828 = vld [vmem:[%s7 + $0x270] sm:$0xff]
    %v1829 = vld [vmem:[%s7 + $0x278] sm:$0xff]
    %v1830 = vld [vmem:[%s7 + $0x280] sm:$0xff]
    %v1831 = vld [vmem:[%s7 + $0x288] sm:$0xff]
    %v1832 = vld [vmem:[%s7 + $0x290] sm:$0xff]
    %v1833 = vld [vmem:[%s7 + $0x298] sm:$0xff]
    %v1834 = vld [vmem:[%s7 + $0x2a0] sm:$0xff]
    %v1835 = vld [vmem:[%s7 + $0x2a8] sm:$0xff]
    %v1836 = vld [vmem:[%s7 + $0x2b0] sm:$0xff]
    %v1837 = vld [vmem:[%s7 + $0x2b8] sm:$0xff]
    %v1838 = vld [vmem:[%s7 + $0x2c0] sm:$0xff]
    %v1839 = vld [vmem:[%s7 + $0x2c8] sm:$0xff]
    %v1840 = vld [vmem:[%s7 + $0x2d0] sm:$0xff]
    %v1841 = vld [vmem:[%s7 + $0x2d8] sm:$0xff]
    %v1842 = vld [vmem:[%s7 + $0x2e0] sm:$0xff]
    %v1843 = vld [vmem:[%s7 + $0x2e8] sm:$0xff]
    %v1844 = vld [vmem:[%s7 + $0x2f0] sm:$0xff]
    %v1845 = vld [vmem:[%s7 + $0x2f8] sm:$0xff]
    %v1846 = vld [vmem:[%s7 + $0x300] sm:$0xff]
    %v1847 = vld [vmem:[%s7 + $0x308] sm:$0xff]
    %v1848 = vld [vmem:[%s7 + $0x310] sm:$0xff]
    %v1849 = vld [vmem:[%s7 + $0x318] sm:$0xff]
    %v1850 = vld [vmem:[%s7 + $0x320] sm:$0xff]
    %v1851 = vld [vmem:[%s7 + $0x328] sm:$0xff]
    %v1852 = vld [vmem:[%s7 + $0x330] sm:$0xff]
    %v1853 = vld [vmem:[%s7 + $0x338] sm:$0xff]
    %v1854 = vld [vmem:[%s7 + $0x340] sm:$0xff]
    %v1855 = vld [vmem:[%s7 + $0x348] sm:$0xff]
    %v1856 = vld [vmem:[%s7 + $0x350] sm:$0xff]
    %v1857 = vld [vmem:[%s7 + $0x358] sm:$0xff]
    %v1858 = vld [vmem:[%s7 + $0x360] sm:$0xff]
    %v1859 = vld [vmem:[%s7 + $0x368] sm:$0xff]
    %v1860 = vld [vmem:[%s7 + $0x370] sm:$0xff]
    %v1861 = vld [vmem:[%s7 + $0x378] sm:$0xff]
    %v1862 = vld [vmem:[%s7 + $0x380] sm:$0xff]
    %v1863 = vld [vmem:[%s7 + $0x388] sm:$0xff]
    %v1864 = vld [vmem:[%s7 + $0x390] sm:$0xff]
    %v1865 = vld [vmem:[%s7 + $0x398] sm:$0xff]
    %v1866 = vld [vmem:[%s7 + $0x3a0] sm:$0xff]
    %v1867 = vld [vmem:[%s7 + $0x3a8] sm:$0xff]
    %v1868 = vld [vmem:[%s7 + $0x3b0] sm:$0xff]
    %v1869 = vld [vmem:[%s7 + $0x3b8] sm:$0xff]
    %v1870 = vld [vmem:[%s7 + $0x3c0] sm:$0xff]
    %v1871 = vld [vmem:[%s7 + $0x3c8] sm:$0xff]
    %v1872 = vld [vmem:[%s7 + $0x3d0] sm:$0xff]
    %v1873 = vld [vmem:[%s7 + $0x3d8] sm:$0xff]
    %v1874 = vld [vmem:[%s7 + $0x3e0] sm:$0xff]
    %v1875 = vld [vmem:[%s7 + $0x3e8] sm:$0xff]
    %v1876 = vld [vmem:[%s7 + $0x3f0] sm:$0xff]
    %v1877 = vld [vmem:[%s7 + $0x3f8] sm:$0xff]
    %v1878 = vld [vmem:[%s8] sm:$0x1]
    %v1880 = vlaneseq
    %v1881 = vshrl.u32 %v1880, 7
    %v1882 = vsub.s32 0, %v1881
    %v1883 = vrot.slane %v1878, %v1882
    %1885 = vmatprep.subr.mxu0 0.0
    %1886 = vmatpush1.msra.mxu0 %v1765
    %1887 = vmatprep.subr.mxu0 0.0
    %1888 = vmatpush1.msra.mxu0 %v1764
    %1889 = vmatprep.subr.mxu0 0.0
    %1890 = vmatpush1.msra.mxu0 %v1763
    %1891 = vmatprep.subr.mxu0 0.0
    %1892 = vmatpush1.msra.mxu0 %v1762
    %1893 = vmatprep.subr.mxu0 0.0
    %1894 = vmatpush1.msra.mxu0 %v1761
    %1895 = vmatprep.subr.mxu0 0.0
    %1896 = vmatpush1.msra.mxu0 %v1760
    %1897 = vmatprep.subr.mxu0 0.0
    %1898 = vmatpush1.msra.mxu0 %v1759
    %1899 = vmatprep.subr.mxu0 0.0
    %1900 = vmatpush1.msra.mxu0 %v1758
    %1901 = vmatprep.subr.mxu0 0.0
    %1902 = vmatpush1.msra.mxu0 %v1757
    %1903 = vmatprep.subr.mxu0 0.0
    %1904 = vmatpush1.msra.mxu0 %v1756
    %1905 = vmatprep.subr.mxu0 0.0
    %1906 = vmatpush1.msra.mxu0 %v1755
    %1907 = vmatprep.subr.mxu0 0.0
    %1908 = vmatpush1.msra.mxu0 %v1754
    %1909 = vmatprep.subr.mxu0 0.0
    %1910 = vmatpush1.msra.mxu0 %v1753
    %1911 = vmatprep.subr.mxu0 0.0
    %1912 = vmatpush1.msra.mxu0 %v1752
    %1913 = vmatprep.subr.mxu0 0.0
    %1914 = vmatpush1.msra.mxu0 %v1751
    %1915 = vmatprep.subr.mxu0 0.0
    %1916 = vmatpush1.msra.mxu0 %v1750
    %1917 = vmatprep.subr.mxu0 0.0
    %1918 = vmatpush2.msra.mxu0 %v1781
    %1919 = vmatprep.subr.mxu0 0.0
    %1920 = vmatpush2.msra.mxu0 %v1780
    %1921 = vmatprep.subr.mxu0 0.0
    %1922 = vmatpush2.msra.mxu0 %v1779
    %1923 = vmatprep.subr.mxu0 0.0
    %1924 = vmatpush2.msra.mxu0 %v1778
    %1925 = vmatprep.subr.mxu0 0.0
    %1926 = vmatpush2.msra.mxu0 %v1777
    %1927 = vmatprep.subr.mxu0 0.0
    %1928 = vmatpush2.msra.mxu0 %v1776
    %1929 = vmatprep.subr.mxu0 0.0
    %1930 = vmatpush2.msra.mxu0 %v1775
    %1931 = vmatprep.subr.mxu0 0.0
    %1932 = vmatpush2.msra.mxu0 %v1774
    %1933 = vmatprep.subr.mxu0 0.0
    %1934 = vmatpush2.msra.mxu0 %v1773
    %1935 = vmatprep.subr.mxu0 0.0
    %1936 = vmatpush2.msra.mxu0 %v1772
    %1937 = vmatprep.subr.mxu0 0.0
    %1938 = vmatpush2.msra.mxu0 %v1771
    %1939 = vmatprep.subr.mxu0 0.0
    %1940 = vmatpush2.msra.mxu0 %v1770
    %1941 = vmatprep.subr.mxu0 0.0
    %1942 = vmatpush2.msra.mxu0 %v1769
    %1943 = vmatprep.subr.mxu0 0.0
    %1944 = vmatpush2.msra.mxu0 %v1768
    %1945 = vmatprep.subr.mxu0 0.0
    %1946 = vmatpush2.msra.mxu0 %v1767
    %1947 = vmatprep.subr.mxu0 0.0
    %1948 = vmatpush2.msra.mxu0 %v1766
    %1949 = vmatprep.mubr.f32.mxu0 %v1724
    %1950 = vmatmul.mubr.f32.gmra.mxu0 %v1720
    %v1951 = vpop.f32.mrf.mxu0
    %v1952 = vadd.f32 %v1883, %v1951
    %v1953 = vpop.f32.mrf.mxu0
    %1954 = vdwg.mxu0
    %1955 = vmatprep.subr.mxu0 0.0
    %1956 = vmatpush1.msra.mxu0 %v1797
    %1957 = vmatprep.subr.mxu0 0.0
    %1958 = vmatpush1.msra.mxu0 %v1796
    %1959 = vmatprep.subr.mxu0 0.0
    %1960 = vmatpush1.msra.mxu0 %v1795
    %1961 = vmatprep.subr.mxu0 0.0
    %1962 = vmatpush1.msra.mxu0 %v1794
    %1963 = vmatprep.subr.mxu0 0.0
    %1964 = vmatpush1.msra.mxu0 %v1793
    %1965 = vmatprep.subr.mxu0 0.0
    %1966 = vmatpush1.msra.mxu0 %v1792
    %1967 = vmatprep.subr.mxu0 0.0
    %1968 = vmatpush1.msra.mxu0 %v1791
    %1969 = vmatprep.subr.mxu0 0.0
    %1970 = vmatpush1.msra.mxu0 %v1790
    %1971 = vmatprep.subr.mxu0 0.0
    %1972 = vmatpush1.msra.mxu0 %v1789
    %1973 = vmatprep.subr.mxu0 0.0
    %1974 = vmatpush1.msra.mxu0 %v1788
    %1975 = vmatprep.subr.mxu0 0.0
    %1976 = vmatpush1.msra.mxu0 %v1787
    %1977 = vmatprep.subr.mxu0 0.0
    %1978 = vmatpush1.msra.mxu0 %v1786
    %1979 = vmatprep.subr.mxu0 0.0
    %1980 = vmatpush1.msra.mxu0 %v1785
    %1981 = vmatprep.subr.mxu0 0.0
    %1982 = vmatpush1.msra.mxu0 %v1784
    %1983 = vmatprep.subr.mxu0 0.0
    %1984 = vmatpush1.msra.mxu0 %v1783
    %1985 = vmatprep.subr.mxu0 0.0
    %1986 = vmatpush1.msra.mxu0 %v1782
    %1987 = vmatprep.subr.mxu0 0.0
    %1988 = vmatpush2.msra.mxu0 %v1813
    %1989 = vmatprep.subr.mxu0 0.0
    %1990 = vmatpush2.msra.mxu0 %v1812
    %1991 = vmatprep.subr.mxu0 0.0
    %1992 = vmatpush2.msra.mxu0 %v1811
    %1993 = vmatprep.subr.mxu0 0.0
    %1994 = vmatpush2.msra.mxu0 %v1810
    %1995 = vmatprep.subr.mxu0 0.0
    %1996 = vmatpush2.msra.mxu0 %v1809
    %1997 = vmatprep.subr.mxu0 0.0
    %1998 = vmatpush2.msra.mxu0 %v1808
    %1999 = vmatprep.subr.mxu0 0.0
    %2000 = vmatpush2.msra.mxu0 %v1807
    %2001 = vmatprep.subr.mxu0 0.0
    %2002 = vmatpush2.msra.mxu0 %v1806
    %2003 = vmatprep.subr.mxu0 0.0
    %2004 = vmatpush2.msra.mxu0 %v1805
    %2005 = vmatprep.subr.mxu0 0.0
    %2006 = vmatpush2.msra.mxu0 %v1804
    %2007 = vmatprep.subr.mxu0 0.0
    %2008 = vmatpush2.msra.mxu0 %v1803
    %2009 = vmatprep.subr.mxu0 0.0
    %2010 = vmatpush2.msra.mxu0 %v1802
    %2011 = vmatprep.subr.mxu0 0.0
    %2012 = vmatpush2.msra.mxu0 %v1801
    %2013 = vmatprep.subr.mxu0 0.0
    %2014 = vmatpush2.msra.mxu0 %v1800
    %2015 = vmatprep.subr.mxu0 0.0
    %2016 = vmatpush2.msra.mxu0 %v1799
    %2017 = vmatprep.subr.mxu0 0.0
    %2018 = vmatpush2.msra.mxu0 %v1798
    %2019 = vmatprep.mubr.f32.mxu0 %v1732
    %2020 = vmatmul.mubr.f32.gmra.mxu0 %v1728
    %v2021 = vpop.f32.mrf.mxu0
    %v2022 = vadd.f32 %v1952, %v2021
    %v2023 = vpop.f32.mrf.mxu0
    %2024 = vdwg.mxu0
    %2025 = vmatprep.subr.mxu0 0.0
    %2026 = vmatpush1.msra.mxu0 %v1829
    %2027 = vmatprep.subr.mxu0 0.0
    %2028 = vmatpush1.msra.mxu0 %v1828
    %2029 = vmatprep.subr.mxu0 0.0
    %2030 = vmatpush1.msra.mxu0 %v1827
    %2031 = vmatprep.subr.mxu0 0.0
    %2032 = vmatpush1.msra.mxu0 %v1826
    %2033 = vmatprep.subr.mxu0 0.0
    %2034 = vmatpush1.msra.mxu0 %v1825
    %2035 = vmatprep.subr.mxu0 0.0
    %2036 = vmatpush1.msra.mxu0 %v1824
    %2037 = vmatprep.subr.mxu0 0.0
    %2038 = vmatpush1.msra.mxu0 %v1823
    %2039 = vmatprep.subr.mxu0 0.0
    %2040 = vmatpush1.msra.mxu0 %v1822
    %2041 = vmatprep.subr.mxu0 0.0
    %2042 = vmatpush1.msra.mxu0 %v1821
    %2043 = vmatprep.subr.mxu0 0.0
    %2044 = vmatpush1.msra.mxu0 %v1820
    %2045 = vmatprep.subr.mxu0 0.0
    %2046 = vmatpush1.msra.mxu0 %v1819
    %2047 = vmatprep.subr.mxu0 0.0
    %2048 = vmatpush1.msra.mxu0 %v1818
    %2049 = vmatprep.subr.mxu0 0.0
    %2050 = vmatpush1.msra.mxu0 %v1817
    %2051 = vmatprep.subr.mxu0 0.0
    %2052 = vmatpush1.msra.mxu0 %v1816
    %2053 = vmatprep.subr.mxu0 0.0
    %2054 = vmatpush1.msra.mxu0 %v1815
    %2055 = vmatprep.subr.mxu0 0.0
    %2056 = vmatpush1.msra.mxu0 %v1814
    %2057 = vmatprep.subr.mxu0 0.0
    %2058 = vmatpush2.msra.mxu0 %v1845
    %2059 = vmatprep.subr.mxu0 0.0
    %2060 = vmatpush2.msra.mxu0 %v1844
    %2061 = vmatprep.subr.mxu0 0.0
    %2062 = vmatpush2.msra.mxu0 %v1843
    %2063 = vmatprep.subr.mxu0 0.0
    %2064 = vmatpush2.msra.mxu0 %v1842
    %2065 = vmatprep.subr.mxu0 0.0
    %2066 = vmatpush2.msra.mxu0 %v1841
    %2067 = vmatprep.subr.mxu0 0.0
    %2068 = vmatpush2.msra.mxu0 %v1840
    %2069 = vmatprep.subr.mxu0 0.0
    %2070 = vmatpush2.msra.mxu0 %v1839
    %2071 = vmatprep.subr.mxu0 0.0
    %2072 = vmatpush2.msra.mxu0 %v1838
    %2073 = vmatprep.subr.mxu0 0.0
    %2074 = vmatpush2.msra.mxu0 %v1837
    %2075 = vmatprep.subr.mxu0 0.0
    %2076 = vmatpush2.msra.mxu0 %v1836
    %2077 = vmatprep.subr.mxu0 0.0
    %2078 = vmatpush2.msra.mxu0 %v1835
    %2079 = vmatprep.subr.mxu0 0.0
    %2080 = vmatpush2.msra.mxu0 %v1834
    %2081 = vmatprep.subr.mxu0 0.0
    %2082 = vmatpush2.msra.mxu0 %v1833
    %2083 = vmatprep.subr.mxu0 0.0
    %2084 = vmatpush2.msra.mxu0 %v1832
    %2085 = vmatprep.subr.mxu0 0.0
    %2086 = vmatpush2.msra.mxu0 %v1831
    %2087 = vmatprep.subr.mxu0 0.0
    %2088 = vmatpush2.msra.mxu0 %v1830
    %2089 = vmatprep.mubr.f32.mxu0 %v1740
    %2090 = vmatmul.mubr.f32.gmra.mxu0 %v1736
    %v2091 = vpop.f32.mrf.mxu0
    %v2092 = vadd.f32 %v2022, %v2091
    %v2093 = vpop.f32.mrf.mxu0
    %2094 = vdwg.mxu0
    %2095 = vmatprep.subr.mxu0 0.0
    %2096 = vmatpush1.msra.mxu0 %v1861
    %2097 = vmatprep.subr.mxu0 0.0
    %2098 = vmatpush1.msra.mxu0 %v1860
    %2099 = vmatprep.subr.mxu0 0.0
    %2100 = vmatpush1.msra.mxu0 %v1859
    %2101 = vmatprep.subr.mxu0 0.0
    %2102 = vmatpush1.msra.mxu0 %v1858
    %2103 = vmatprep.subr.mxu0 0.0
    %2104 = vmatpush1.msra.mxu0 %v1857
    %2105 = vmatprep.subr.mxu0 0.0
    %2106 = vmatpush1.msra.mxu0 %v1856
    %2107 = vmatprep.subr.mxu0 0.0
    %2108 = vmatpush1.msra.mxu0 %v1855
    %2109 = vmatprep.subr.mxu0 0.0
    %2110 = vmatpush1.msra.mxu0 %v1854
    %2111 = vmatprep.subr.mxu0 0.0
    %2112 = vmatpush1.msra.mxu0 %v1853
    %2113 = vmatprep.subr.mxu0 0.0
    %2114 = vmatpush1.msra.mxu0 %v1852
    %2115 = vmatprep.subr.mxu0 0.0
    %2116 = vmatpush1.msra.mxu0 %v1851
    %2117 = vmatprep.subr.mxu0 0.0
    %2118 = vmatpush1.msra.mxu0 %v1850
    %2119 = vmatprep.subr.mxu0 0.0
    %2120 = vmatpush1.msra.mxu0 %v1849
    %2121 = vmatprep.subr.mxu0 0.0
    %2122 = vmatpush1.msra.mxu0 %v1848
    %2123 = vmatprep.subr.mxu0 0.0
    %2124 = vmatpush1.msra.mxu0 %v1847
    %2125 = vmatprep.subr.mxu0 0.0
    %2126 = vmatpush1.msra.mxu0 %v1846
    %2127 = vmatprep.subr.mxu0 0.0
    %2128 = vmatpush2.msra.mxu0 %v1877
    %2129 = vmatprep.subr.mxu0 0.0
    %2130 = vmatpush2.msra.mxu0 %v1876
    %2131 = vmatprep.subr.mxu0 0.0
    %2132 = vmatpush2.msra.mxu0 %v1875
    %2133 = vmatprep.subr.mxu0 0.0
    %2134 = vmatpush2.msra.mxu0 %v1874
    %2135 = vmatprep.subr.mxu0 0.0
    %2136 = vmatpush2.msra.mxu0 %v1873
    %2137 = vmatprep.subr.mxu0 0.0
    %2138 = vmatpush2.msra.mxu0 %v1872
    %2139 = vmatprep.subr.mxu0 0.0
    %2140 = vmatpush2.msra.mxu0 %v1871
    %2141 = vmatprep.subr.mxu0 0.0
    %2142 = vmatpush2.msra.mxu0 %v1870
    %2143 = vmatprep.subr.mxu0 0.0
    %2144 = vmatpush2.msra.mxu0 %v1869
    %2145 = vmatprep.subr.mxu0 0.0
    %2146 = vmatpush2.msra.mxu0 %v1868
    %2147 = vmatprep.subr.mxu0 0.0
    %2148 = vmatpush2.msra.mxu0 %v1867
    %2149 = vmatprep.subr.mxu0 0.0
    %2150 = vmatpush2.msra.mxu0 %v1866
    %2151 = vmatprep.subr.mxu0 0.0
    %2152 = vmatpush2.msra.mxu0 %v1865
    %2153 = vmatprep.subr.mxu0 0.0
    %2154 = vmatpush2.msra.mxu0 %v1864
    %2155 = vmatprep.subr.mxu0 0.0
    %2156 = vmatpush2.msra.mxu0 %v1863
    %2157 = vmatprep.subr.mxu0 0.0
    %2158 = vmatpush2.msra.mxu0 %v1862
    %2159 = vmatprep.mubr.f32.mxu0 %v1748
    %2160 = vmatmul.mubr.f32.gmra.mxu0 %v1744
    %v2161 = vpop.f32.mrf.mxu0
    %v2162 = vadd.f32 %v2092, %v2161
    %v2163 = vpop.f32.mrf.mxu0
    %2164 = vdwg.mxu0
    %vm2165 = vcmp.gt.f32.partialorder %v2162, 0.0
    %v2166 = vmin.f32 %v2162, 0.0
    %v2167 = vmul.f32 %v2166, 1.442695
    %v2168 = vpow.pop %v2167
    %v2169 = vsub.f32 %v2168, 1.0
    %v2170 = vmul.f32 %v2169, 1.6732632
    %v2171 = vsel %vm2165, %v2162, %v2170
    %v2172 = vmul.f32 %v2171, 1.050701
    %v2173 = vld [vmem:[%s9] sm:$0xff]
    %v2174 = vld [vmem:[%s9 + $0x8] sm:$0xff]
    %v2175 = vld [vmem:[%s9 + $0x10] sm:$0xff]
    %v2176 = vld [vmem:[%s9 + $0x18] sm:$0xff]
    %v2177 = vld [vmem:[%s9 + $0x20] sm:$0xff]
    %v2178 = vld [vmem:[%s9 + $0x28] sm:$0xff]
    %v2179 = vld [vmem:[%s9 + $0x30] sm:$0xff]
    %v2180 = vld [vmem:[%s9 + $0x38] sm:$0xff]
    %v2181 = vld [vmem:[%s10] sm:$0x1]
    %v2183 = vlaneseq
    %v2184 = vshrl.u32 %v2183, 7
    %v2185 = vsub.s32 0, %v2184
    %v2186 = vrot.slane %v2181, %v2185
    %v2189 = vsel %vm274, %v2172, 0
    %2191 = vmatprep.subr.mxu0 0.0
    %2192 = vmatpush1.msra.mxu0 0.0
    %2193 = vmatprep.subr.mxu0 0.0
    %2194 = vmatpush1.msra.mxu0 0.0
    %2195 = vmatprep.subr.mxu0 0.0
    %2196 = vmatpush1.msra.mxu0 0.0
    %2197 = vmatprep.subr.mxu0 0.0
    %2198 = vmatpush1.msra.mxu0 0.0
    %2199 = vmatprep.subr.mxu0 0.0
    %2200 = vmatpush1.msra.mxu0 0.0
    %2201 = vmatprep.subr.mxu0 0.0
    %2202 = vmatpush1.msra.mxu0 0.0
    %2203 = vmatprep.subr.mxu0 0.0
    %2204 = vmatpush1.msra.mxu0 0.0
    %2205 = vmatprep.subr.mxu0 0.0
    %2206 = vmatpush1.msra.mxu0 0.0
    %2207 = vmatprep.subr.mxu0 0.0
    %2208 = vmatpush1.msra.mxu0 %v2180
    %2209 = vmatprep.subr.mxu0 0.0
    %2210 = vmatpush1.msra.mxu0 %v2179
    %2211 = vmatprep.subr.mxu0 0.0
    %2212 = vmatpush1.msra.mxu0 %v2178
    %2213 = vmatprep.subr.mxu0 0.0
    %2214 = vmatpush1.msra.mxu0 %v2177
    %2215 = vmatprep.subr.mxu0 0.0
    %2216 = vmatpush1.msra.mxu0 %v2176
    %2217 = vmatprep.subr.mxu0 0.0
    %2218 = vmatpush1.msra.mxu0 %v2175
    %2219 = vmatprep.subr.mxu0 0.0
    %2220 = vmatpush1.msra.mxu0 %v2174
    %2221 = vmatprep.subr.mxu0 0.0
    %2222 = vmatpush1.msra.mxu0 %v2173
    %2223 = vmatprep.subr.mxu0 0.0
    %2224 = vmatpush2.msra.mxu0 0.0
    %2225 = vmatprep.subr.mxu0 0.0
    %2226 = vmatpush2.msra.mxu0 0.0
    %2227 = vmatprep.subr.mxu0 0.0
    %2228 = vmatpush2.msra.mxu0 0.0
    %2229 = vmatprep.subr.mxu0 0.0
    %2230 = vmatpush2.msra.mxu0 0.0
    %2231 = vmatprep.subr.mxu0 0.0
    %2232 = vmatpush2.msra.mxu0 0.0
    %2233 = vmatprep.subr.mxu0 0.0
    %2234 = vmatpush2.msra.mxu0 0.0
    %2235 = vmatprep.subr.mxu0 0.0
    %2236 = vmatpush2.msra.mxu0 0.0
    %2237 = vmatprep.subr.mxu0 0.0
    %2238 = vmatpush2.msra.mxu0 0.0
    %2239 = vmatprep.subr.mxu0 0.0
    %2240 = vmatpush2.msra.mxu0 0.0
    %2241 = vmatprep.subr.mxu0 0.0
    %2242 = vmatpush2.msra.mxu0 0.0
    %2243 = vmatprep.subr.mxu0 0.0
    %2244 = vmatpush2.msra.mxu0 0.0
    %2245 = vmatprep.subr.mxu0 0.0
    %2246 = vmatpush2.msra.mxu0 0.0
    %2247 = vmatprep.subr.mxu0 0.0
    %2248 = vmatpush2.msra.mxu0 0.0
    %2249 = vmatprep.subr.mxu0 0.0
    %2250 = vmatpush2.msra.mxu0 0.0
    %2251 = vmatprep.subr.mxu0 0.0
    %2252 = vmatpush2.msra.mxu0 0.0
    %2253 = vmatprep.subr.mxu0 0.0
    %2254 = vmatpush2.msra.mxu0 0.0
    %2255 = vmatprep.mubr.f32.mxu0 0.0
    %2256 = vmatmul.mubr.f32.gmra.mxu0 %v2189
    %v2257 = vpop.f32.mrf.mxu0
    %v2258 = vadd.f32 %v2186, %v2257
    %v2259 = vpop.f32.mrf.mxu0
    %2260 = vdwg.mxu0
    %vm2261 = vcmp.gt.f32.partialorder %v2258, 0.0
    %v2262 = vmin.f32 %v2258, 0.0
    %v2263 = vmul.f32 %v2262, 1.442695
    %v2264 = vpow.pop %v2263
    %v2265 = vsub.f32 %v2264, 1.0
    %v2266 = vmul.f32 %v2265, 1.6732632
    %v2267 = vsel %vm2261, %v2258, %v2266
    %v2268 = vmul.f32 %v2267, 1.050701
    %v2269 = vld [vmem:[%s11] sm:$0xff]
    %v2270 = vld [vmem:[%s11 + $0x8] sm:$0xff]
    %v2271 = vld [vmem:[%s11 + $0x10] sm:$0xff]
    %v2272 = vld [vmem:[%s11 + $0x18] sm:$0xff]
    %v2273 = vld [vmem:[%s12] sm:$0x1]
    %v2275 = vlaneseq
    %v2276 = vshrl.u32 %v2275, 7
    %v2277 = vsub.s32 0, %v2276
    %v2278 = vrot.slane %v2273, %v2277
    %vm2280 = vcmask 261120
    %v2282 = vsel %vm2280, %v2268, 0
    %2284 = vmatprep.subr.mxu0 0.0
    %2285 = vmatpush1.msra.mxu0 0.0
    %2286 = vmatprep.subr.mxu0 0.0
    %2287 = vmatpush1.msra.mxu0 0.0
    %2288 = vmatprep.subr.mxu0 0.0
    %2289 = vmatpush1.msra.mxu0 0.0
    %2290 = vmatprep.subr.mxu0 0.0
    %2291 = vmatpush1.msra.mxu0 0.0
    %2292 = vmatprep.subr.mxu0 0.0
    %2293 = vmatpush1.msra.mxu0 0.0
    %2294 = vmatprep.subr.mxu0 0.0
    %2295 = vmatpush1.msra.mxu0 0.0
    %2296 = vmatprep.subr.mxu0 0.0
    %2297 = vmatpush1.msra.mxu0 0.0
    %2298 = vmatprep.subr.mxu0 0.0
    %2299 = vmatpush1.msra.mxu0 0.0
    %2300 = vmatprep.subr.mxu0 0.0
    %2301 = vmatpush1.msra.mxu0 0.0
    %2302 = vmatprep.subr.mxu0 0.0
    %2303 = vmatpush1.msra.mxu0 0.0
    %2304 = vmatprep.subr.mxu0 0.0
    %2305 = vmatpush1.msra.mxu0 0.0
    %2306 = vmatprep.subr.mxu0 0.0
    %2307 = vmatpush1.msra.mxu0 0.0
    %2308 = vmatprep.subr.mxu0 0.0
    %2309 = vmatpush1.msra.mxu0 %v2272
    %2310 = vmatprep.subr.mxu0 0.0
    %2311 = vmatpush1.msra.mxu0 %v2271
    %2312 = vmatprep.subr.mxu0 0.0
    %2313 = vmatpush1.msra.mxu0 %v2270
    %2314 = vmatprep.subr.mxu0 0.0
    %2315 = vmatpush1.msra.mxu0 %v2269
    %2316 = vmatprep.subr.mxu0 0.0
    %2317 = vmatpush2.msra.mxu0 0.0
    %2318 = vmatprep.subr.mxu0 0.0
    %2319 = vmatpush2.msra.mxu0 0.0
    %2320 = vmatprep.subr.mxu0 0.0
    %2321 = vmatpush2.msra.mxu0 0.0
    %2322 = vmatprep.subr.mxu0 0.0
    %2323 = vmatpush2.msra.mxu0 0.0
    %2324 = vmatprep.subr.mxu0 0.0
    %2325 = vmatpush2.msra.mxu0 0.0
    %2326 = vmatprep.subr.mxu0 0.0
    %2327 = vmatpush2.msra.mxu0 0.0
    %2328 = vmatprep.subr.mxu0 0.0
    %2329 = vmatpush2.msra.mxu0 0.0
    %2330 = vmatprep.subr.mxu0 0.0
    %2331 = vmatpush2.msra.mxu0 0.0
    %2332 = vmatprep.subr.mxu0 0.0
    %2333 = vmatpush2.msra.mxu0 0.0
    %2334 = vmatprep.subr.mxu0 0.0
    %2335 = vmatpush2.msra.mxu0 0.0
    %2336 = vmatprep.subr.mxu0 0.0
    %2337 = vmatpush2.msra.mxu0 0.0
    %2338 = vmatprep.subr.mxu0 0.0
    %2339 = vmatpush2.msra.mxu0 0.0
    %2340 = vmatprep.subr.mxu0 0.0
    %2341 = vmatpush2.msra.mxu0 0.0
    %2342 = vmatprep.subr.mxu0 0.0
    %2343 = vmatpush2.msra.mxu0 0.0
    %2344 = vmatprep.subr.mxu0 0.0
    %2345 = vmatpush2.msra.mxu0 0.0
    %2346 = vmatprep.subr.mxu0 0.0
    %2347 = vmatpush2.msra.mxu0 0.0
    %2348 = vmatprep.mubr.f32.mxu0 0.0
    %2349 = vmatmul.mubr.f32.gmra.mxu0 %v2282
    %v2350 = vpop.f32.mrf.mxu0
    %v2351 = vadd.f32 %v2278, %v2350
    %v2352 = vpop.f32.mrf.mxu0
    %2353 = vdwg.mxu0
    %v2356 = vunpack.c.l.s4 1966171168
    %v2357 = vunpack.c.0.s8 %v2356
    %v2358 = vlaneseq
    %v2359 = vshrl.u32 %v2358, 7
    %v2360 = vsub.s32 %v2357, %v2359
    %v2361 = vrot.slane %v2351, %v2360
    %v2362 = vcombine.high %v2361, %v2361
    %v2364 = vunpack.c.l.s4 1966171168
    %v2365 = vunpack.c.0.s8 %v2364
    %v2366 = vlaneseq
    %v2367 = vshrl.u32 %v2366, 7
    %v2368 = vsub.s32 %v2365, %v2367
    %v2369 = vrot.slane %v2361, %v2368
    %v2371 = vunpack.c.l.s4 1966171168
    %v2372 = vunpack.c.0.s8 %v2371
    %v2373 = vlaneseq
    %v2374 = vshrl.u32 %v2373, 7
    %v2375 = vsub.s32 %v2372, %v2374
    %v2376 = vrot.slane %v2362, %v2375
    %2377 = vset.pattern.permute.xlu0 0
    %2378 = vperm.xlu0 %2377, %v113
    %v2379 = vpop.permute.xlu0 %2378
    %2381 = vset.pattern.permute.xlu0 0
    %2382 = vperm.xlu0 %2381, %v114
    %v2383 = vpop.permute.xlu0 %2382
    %2385 = vset.pattern.permute.xlu0 0
    %2386 = vperm.xlu0 %2385, %v115
    %v2387 = vpop.permute.xlu0 %2386
    %2389 = vset.pattern.permute.xlu0 0
    %2390 = vperm.xlu0 %2389, %v116
    %v2391 = vpop.permute.xlu0 %2390
    %v2393 = vlaneseq
    %v2394 = vshrl.u32 %v2393, 7
    %v2395 = vsub.s32 0, %v2394
    %v2396 = vrot.slane %v2369, %v2395
    %v2397 = vlaneseq
    %v2398 = vshrl.u32 %v2397, 7
    %v2399 = vsub.s32 0, %v2398
    %v2400 = vrot.slane %v2376, %v2399
    %v2403 = vmul.f32 %v2379, %v2396
    %v2404 = vmul.f32 %v2383, %v2396
    %v2405 = vmul.f32 %v2387, %v2400
    %v2406 = vmul.f32 %v2391, %v2400
    %2407 = vset.pattern.permute.xlu0 1
    %2408 = vperm.xlu0 %2407, %v113
    %v2409 = vpop.permute.xlu0 %2408
    %2411 = vset.pattern.permute.xlu0 1
    %2412 = vperm.xlu0 %2411, %v114
    %v2413 = vpop.permute.xlu0 %2412
    %2415 = vset.pattern.permute.xlu0 1
    %2416 = vperm.xlu0 %2415, %v115
    %v2417 = vpop.permute.xlu0 %2416
    %2419 = vset.pattern.permute.xlu0 1
    %2420 = vperm.xlu0 %2419, %v116
    %v2421 = vpop.permute.xlu0 %2420
    %v2423 = vmul.f32 %v2409, %v2396
    %v2424 = vmul.f32 %v2413, %v2396
    %v2425 = vmul.f32 %v2417, %v2400
    %v2426 = vmul.f32 %v2421, %v2400
    %2431 = vrot.lane.b32.xlu0 %v2423, 125
    %v2432 = vpop.permute.xlu0 %2431
    %2433 = vrot.lane.b32.xlu0 %v2424, 125
    %v2434 = vpop.permute.xlu0 %2433
    %2435 = vrot.lane.b32.xlu0 %v2425, 125
    %v2436 = vpop.permute.xlu0 %2435
    %2437 = vrot.lane.b32.xlu0 %v2426, 125
    %v2438 = vpop.permute.xlu0 %2437
    %v2443 = vadd.f32 %v2403, %v2432
    %v2444 = vadd.f32 %v2404, %v2434
    %v2445 = vadd.f32 %v2405, %v2436
    %v2446 = vadd.f32 %v2406, %v2438
    %2447 = vset.pattern.permute.xlu0 2
    %2448 = vperm.xlu0 %2447, %v113
    %v2449 = vpop.permute.xlu0 %2448
    %2451 = vset.pattern.permute.xlu0 2
    %2452 = vperm.xlu0 %2451, %v114
    %v2453 = vpop.permute.xlu0 %2452
    %2455 = vset.pattern.permute.xlu0 2
    %2456 = vperm.xlu0 %2455, %v115
    %v2457 = vpop.permute.xlu0 %2456
    %2459 = vset.pattern.permute.xlu0 2
    %2460 = vperm.xlu0 %2459, %v116
    %v2461 = vpop.permute.xlu0 %2460
    %v2463 = vmul.f32 %v2449, %v2396
    %v2464 = vmul.f32 %v2453, %v2396
    %v2465 = vmul.f32 %v2457, %v2400
    %v2466 = vmul.f32 %v2461, %v2400
    %2471 = vrot.lane.b32.xlu0 %v2463, 122
    %v2472 = vpop.permute.xlu0 %2471
    %2473 = vrot.lane.b32.xlu0 %v2464, 122
    %v2474 = vpop.permute.xlu0 %2473
    %2475 = vrot.lane.b32.xlu0 %v2465, 122
    %v2476 = vpop.permute.xlu0 %2475
    %2477 = vrot.lane.b32.xlu0 %v2466, 122
    %v2478 = vpop.permute.xlu0 %2477
    %v2483 = vadd.f32 %v2443, %v2472
    %v2484 = vadd.f32 %v2444, %v2474
    %v2485 = vadd.f32 %v2445, %v2476
    %v2486 = vadd.f32 %v2446, %v2478
    %2487 = vrot.lane.b32.xlu0 %v2396, 119
    %v2488 = vpop.permute.xlu0 %2487
    %2489 = vrot.lane.b32.xlu0 %v2400, 119
    %v2490 = vpop.permute.xlu0 %2489
    %v2493 = vadd.f32 %v2483, %v2488
    %v2494 = vadd.f32 %v2484, %v2488
    %v2495 = vadd.f32 %v2485, %v2490
    %v2496 = vadd.f32 %v2486, %v2490
    %s2497 = scalar_lea.vmem %s3, 4
    %v2498 = vld [vmem:[%s2497] sm:$0x7]
    %s2499 = scalar_lea.vmem %s4, 1
    %v2500 = vld [vmem:[%s2499] sm:$0x1]
    %v2502 = vlaneseq
    %v2503 = vshrl.u32 %v2502, 7
    %v2504 = vsub.s32 0, %v2503
    %v2505 = vrot.slane %v2500, %v2504
    %v2508 = vsel %vm125, %v2493, 0
    %v2511 = vsel %vm125, %v2494, 0
    %v2514 = vsel %vm125, %v2495, 0
    %v2517 = vsel %vm125, %v2496, 0
    %v2520 = vsel %vm138, %v2498, 0
    %2522 = vmatprep.subr.mxu0 0.0
    %2523 = vmatpush1.msra.mxu0 0.0
    %2524 = vmatprep.subr.mxu0 0.0
    %2525 = vmatpush1.msra.mxu0 0.0
    %2526 = vmatprep.subr.mxu0 0.0
    %2527 = vmatpush1.msra.mxu0 0.0
    %2528 = vmatprep.subr.mxu0 0.0
    %2529 = vmatpush1.msra.mxu0 0.0
    %2530 = vmatprep.subr.mxu0 0.0
    %2531 = vmatpush1.msra.mxu0 0.0
    %2532 = vmatprep.subr.mxu0 0.0
    %2533 = vmatpush1.msra.mxu0 0.0
    %2534 = vmatprep.subr.mxu0 0.0
    %2535 = vmatpush1.msra.mxu0 0.0
    %2536 = vmatprep.subr.mxu0 0.0
    %2537 = vmatpush1.msra.mxu0 0.0
    %2538 = vmatprep.subr.mxu0 0.0
    %2539 = vmatpush1.msra.mxu0 0.0
    %2540 = vmatprep.subr.mxu0 0.0
    %2541 = vmatpush1.msra.mxu0 0.0
    %2542 = vmatprep.subr.mxu0 0.0
    %2543 = vmatpush1.msra.mxu0 0.0
    %2544 = vmatprep.subr.mxu0 0.0
    %2545 = vmatpush1.msra.mxu0 0.0
    %2546 = vmatprep.subr.mxu0 0.0
    %2547 = vmatpush1.msra.mxu0 0.0
    %2548 = vmatprep.subr.mxu0 0.0
    %2549 = vmatpush1.msra.mxu0 0.0
    %2550 = vmatprep.subr.mxu0 0.0
    %2551 = vmatpush1.msra.mxu0 0.0
    %2552 = vmatprep.subr.mxu0 0.0
    %2553 = vmatpush1.msra.mxu0 %v2520
    %2554 = vmatprep.subr.mxu0 0.0
    %2555 = vmatpush2.msra.mxu0 0.0
    %2556 = vmatprep.subr.mxu0 0.0
    %2557 = vmatpush2.msra.mxu0 0.0
    %2558 = vmatprep.subr.mxu0 0.0
    %2559 = vmatpush2.msra.mxu0 0.0
    %2560 = vmatprep.subr.mxu0 0.0
    %2561 = vmatpush2.msra.mxu0 0.0
    %2562 = vmatprep.subr.mxu0 0.0
    %2563 = vmatpush2.msra.mxu0 0.0
    %2564 = vmatprep.subr.mxu0 0.0
    %2565 = vmatpush2.msra.mxu0 0.0
    %2566 = vmatprep.subr.mxu0 0.0
    %2567 = vmatpush2.msra.mxu0 0.0
    %2568 = vmatprep.subr.mxu0 0.0
    %2569 = vmatpush2.msra.mxu0 0.0
    %2570 = vmatprep.subr.mxu0 0.0
    %2571 = vmatpush2.msra.mxu0 0.0
    %2572 = vmatprep.subr.mxu0 0.0
    %2573 = vmatpush2.msra.mxu0 0.0
    %2574 = vmatprep.subr.mxu0 0.0
    %2575 = vmatpush2.msra.mxu0 0.0
    %2576 = vmatprep.subr.mxu0 0.0
    %2577 = vmatpush2.msra.mxu0 0.0
    %2578 = vmatprep.subr.mxu0 0.0
    %2579 = vmatpush2.msra.mxu0 0.0
    %2580 = vmatprep.subr.mxu0 0.0
    %2581 = vmatpush2.msra.mxu0 0.0
    %2582 = vmatprep.subr.mxu0 0.0
    %2583 = vmatpush2.msra.mxu0 0.0
    %2584 = vmatprep.subr.mxu0 0.0
    %2585 = vmatpush2.msra.mxu0 0.0
    %2586 = vmatprep.mubr.f32.mxu0 0.0
    %2587 = vmatmul.mubr.f32.gmra.mxu0 %v2508
    %v2588 = vpop.f32.mrf.mxu0
    %v2589 = vadd.f32 %v2505, %v2588
    %v2590 = vpop.f32.mrf.mxu0
    %2591 = vmatprep.mubr.f32.mxu0 0.0
    %2592 = vmatmul.mubr.f32.gmra.mxu0 %v2511
    %v2593 = vpop.f32.mrf.mxu0
    %v2594 = vadd.f32 %v2505, %v2593
    %v2595 = vpop.f32.mrf.mxu0
    %2596 = vmatprep.mubr.f32.mxu0 0.0
    %2597 = vmatmul.mubr.f32.gmra.mxu0 %v2514
    %v2598 = vpop.f32.mrf.mxu0
    %v2599 = vadd.f32 %v2505, %v2598
    %v2600 = vpop.f32.mrf.mxu0
    %2601 = vmatprep.mubr.f32.mxu0 0.0
    %2602 = vmatmul.mubr.f32.gmra.mxu0 %v2517
    %v2603 = vpop.f32.mrf.mxu0
    %v2604 = vadd.f32 %v2505, %v2603
    %v2605 = vpop.f32.mrf.mxu0
    %2606 = vdwg.mxu0
    %vm2607 = vcmp.gt.f32.partialorder %v2589, 0.0
    %vm2608 = vcmp.gt.f32.partialorder %v2594, 0.0
    %vm2609 = vcmp.gt.f32.partialorder %v2599, 0.0
    %vm2610 = vcmp.gt.f32.partialorder %v2604, 0.0
    %v2611 = vmin.f32 %v2589, 0.0
    %v2612 = vmin.f32 %v2594, 0.0
    %v2613 = vmin.f32 %v2599, 0.0
    %v2614 = vmin.f32 %v2604, 0.0
    %v2615 = vmul.f32 %v2611, 1.442695
    %v2616 = vpow.pop %v2615
    %v2617 = vmul.f32 %v2612, 1.442695
    %v2618 = vpow.pop %v2617
    %v2619 = vmul.f32 %v2613, 1.442695
    %v2620 = vpow.pop %v2619
    %v2621 = vmul.f32 %v2614, 1.442695
    %v2622 = vpow.pop %v2621
    %v2623 = vsub.f32 %v2616, 1.0
    %v2624 = vsub.f32 %v2618, 1.0
    %v2625 = vsub.f32 %v2620, 1.0
    %v2626 = vsub.f32 %v2622, 1.0
    %v2627 = vmul.f32 %v2623, 1.6732632
    %v2628 = vmul.f32 %v2624, 1.6732632
    %v2629 = vmul.f32 %v2625, 1.6732632
    %v2630 = vmul.f32 %v2626, 1.6732632
    %v2631 = vsel %vm2607, %v2589, %v2627
    %v2632 = vsel %vm2608, %v2594, %v2628
    %v2633 = vsel %vm2609, %v2599, %v2629
    %v2634 = vsel %vm2610, %v2604, %v2630
    %v2635 = vmul.f32 %v2631, 1.050701
    %v2636 = vmul.f32 %v2632, 1.050701
    %v2637 = vmul.f32 %v2633, 1.050701
    %v2638 = vmul.f32 %v2634, 1.050701
    %s2639 = scalar_lea.vmem %s5, 64
    %v2640 = vld [vmem:[%s2639] sm:$0xff]
    %v2641 = vld [vmem:[%s2639 + $0x8] sm:$0xff]
    %v2642 = vld [vmem:[%s2639 + $0x10] sm:$0xff]
    %v2643 = vld [vmem:[%s2639 + $0x18] sm:$0xff]
    %v2644 = vld [vmem:[%s2639 + $0x20] sm:$0xff]
    %v2645 = vld [vmem:[%s2639 + $0x28] sm:$0xff]
    %v2646 = vld [vmem:[%s2639 + $0x30] sm:$0xff]
    %v2647 = vld [vmem:[%s2639 + $0x38] sm:$0xff]
    %s2648 = scalar_lea.vmem %s6, 1
    %v2649 = vld [vmem:[%s2648] sm:$0x1]
    %v2651 = vlaneseq
    %v2652 = vshrl.u32 %v2651, 7
    %v2653 = vsub.s32 0, %v2652
    %v2654 = vrot.slane %v2649, %v2653
    %v2657 = vsel %vm274, %v2635, 0
    %v2660 = vsel %vm274, %v2636, 0
    %v2663 = vsel %vm274, %v2637, 0
    %v2666 = vsel %vm274, %v2638, 0
    %2668 = vmatprep.subr.mxu0 0.0
    %2669 = vmatpush1.msra.mxu0 0.0
    %2670 = vmatprep.subr.mxu0 0.0
    %2671 = vmatpush1.msra.mxu0 0.0
    %2672 = vmatprep.subr.mxu0 0.0
    %2673 = vmatpush1.msra.mxu0 0.0
    %2674 = vmatprep.subr.mxu0 0.0
    %2675 = vmatpush1.msra.mxu0 0.0
    %2676 = vmatprep.subr.mxu0 0.0
    %2677 = vmatpush1.msra.mxu0 0.0
    %2678 = vmatprep.subr.mxu0 0.0
    %2679 = vmatpush1.msra.mxu0 0.0
    %2680 = vmatprep.subr.mxu0 0.0
    %2681 = vmatpush1.msra.mxu0 0.0
    %2682 = vmatprep.subr.mxu0 0.0
    %2683 = vmatpush1.msra.mxu0 0.0
    %2684 = vmatprep.subr.mxu0 0.0
    %2685 = vmatpush1.msra.mxu0 %v2647
    %2686 = vmatprep.subr.mxu0 0.0
    %2687 = vmatpush1.msra.mxu0 %v2646
    %2688 = vmatprep.subr.mxu0 0.0
    %2689 = vmatpush1.msra.mxu0 %v2645
    %2690 = vmatprep.subr.mxu0 0.0
    %2691 = vmatpush1.msra.mxu0 %v2644
    %2692 = vmatprep.subr.mxu0 0.0
    %2693 = vmatpush1.msra.mxu0 %v2643
    %2694 = vmatprep.subr.mxu0 0.0
    %2695 = vmatpush1.msra.mxu0 %v2642
    %2696 = vmatprep.subr.mxu0 0.0
    %2697 = vmatpush1.msra.mxu0 %v2641
    %2698 = vmatprep.subr.mxu0 0.0
    %2699 = vmatpush1.msra.mxu0 %v2640
    %2700 = vmatprep.subr.mxu0 0.0
    %2701 = vmatpush2.msra.mxu0 0.0
    %2702 = vmatprep.subr.mxu0 0.0
    %2703 = vmatpush2.msra.mxu0 0.0
    %2704 = vmatprep.subr.mxu0 0.0
    %2705 = vmatpush2.msra.mxu0 0.0
    %2706 = vmatprep.subr.mxu0 0.0
    %2707 = vmatpush2.msra.mxu0 0.0
    %2708 = vmatprep.subr.mxu0 0.0
    %2709 = vmatpush2.msra.mxu0 0.0
    %2710 = vmatprep.subr.mxu0 0.0
    %2711 = vmatpush2.msra.mxu0 0.0
    %2712 = vmatprep.subr.mxu0 0.0
    %2713 = vmatpush2.msra.mxu0 0.0
    %2714 = vmatprep.subr.mxu0 0.0
    %2715 = vmatpush2.msra.mxu0 0.0
    %2716 = vmatprep.subr.mxu0 0.0
    %2717 = vmatpush2.msra.mxu0 0.0
    %2718 = vmatprep.subr.mxu0 0.0
    %2719 = vmatpush2.msra.mxu0 0.0
    %2720 = vmatprep.subr.mxu0 0.0
    %2721 = vmatpush2.msra.mxu0 0.0
    %2722 = vmatprep.subr.mxu0 0.0
    %2723 = vmatpush2.msra.mxu0 0.0
    %2724 = vmatprep.subr.mxu0 0.0
    %2725 = vmatpush2.msra.mxu0 0.0
    %2726 = vmatprep.subr.mxu0 0.0
    %2727 = vmatpush2.msra.mxu0 0.0
    %2728 = vmatprep.subr.mxu0 0.0
    %2729 = vmatpush2.msra.mxu0 0.0
    %2730 = vmatprep.subr.mxu0 0.0
    %2731 = vmatpush2.msra.mxu0 0.0
    %2732 = vmatprep.mubr.f32.mxu0 0.0
    %2733 = vmatmul.mubr.f32.gmra.mxu0 %v2657
    %v2734 = vpop.f32.mrf.mxu0
    %v2735 = vadd.f32 %v2654, %v2734
    %v2736 = vpop.f32.mrf.mxu0
    %2737 = vmatprep.mubr.f32.mxu0 0.0
    %2738 = vmatmul.mubr.f32.gmra.mxu0 %v2660
    %v2739 = vpop.f32.mrf.mxu0
    %v2740 = vadd.f32 %v2654, %v2739
    %v2741 = vpop.f32.mrf.mxu0
    %2742 = vmatprep.mubr.f32.mxu0 0.0
    %2743 = vmatmul.mubr.f32.gmra.mxu0 %v2663
    %v2744 = vpop.f32.mrf.mxu0
    %v2745 = vadd.f32 %v2654, %v2744
    %v2746 = vpop.f32.mrf.mxu0
    %2747 = vmatprep.mubr.f32.mxu0 0.0
    %2748 = vmatmul.mubr.f32.gmra.mxu0 %v2666
    %v2749 = vpop.f32.mrf.mxu0
    %v2750 = vadd.f32 %v2654, %v2749
    %v2751 = vpop.f32.mrf.mxu0
    %2752 = vdwg.mxu0
    %vm2753 = vcmp.gt.f32.partialorder %v2735, 0.0
    %vm2754 = vcmp.gt.f32.partialorder %v2740, 0.0
    %vm2755 = vcmp.gt.f32.partialorder %v2745, 0.0
    %vm2756 = vcmp.gt.f32.partialorder %v2750, 0.0
    %v2757 = vmin.f32 %v2735, 0.0
    %v2758 = vmin.f32 %v2740, 0.0
    %v2759 = vmin.f32 %v2745, 0.0
    %v2760 = vmin.f32 %v2750, 0.0
    %v2761 = vmul.f32 %v2757, 1.442695
    %v2762 = vpow.pop %v2761
    %v2763 = vmul.f32 %v2758, 1.442695
    %v2764 = vpow.pop %v2763
    %v2765 = vmul.f32 %v2759, 1.442695
    %v2766 = vpow.pop %v2765
    %v2767 = vmul.f32 %v2760, 1.442695
    %v2768 = vpow.pop %v2767
    %v2769 = vsub.f32 %v2762, 1.0
    %v2770 = vsub.f32 %v2764, 1.0
    %v2771 = vsub.f32 %v2766, 1.0
    %v2772 = vsub.f32 %v2768, 1.0
    %v2773 = vmul.f32 %v2769, 1.6732632
    %v2774 = vmul.f32 %v2770, 1.6732632
    %v2775 = vmul.f32 %v2771, 1.6732632
    %v2776 = vmul.f32 %v2772, 1.6732632
    %v2777 = vsel %vm2753, %v2735, %v2773
    %v2778 = vsel %vm2754, %v2740, %v2774
    %v2779 = vsel %vm2755, %v2745, %v2775
    %v2780 = vsel %vm2756, %v2750, %v2776
    %v2781 = vmul.f32 %v2777, 1.050701
    %v2782 = vmul.f32 %v2778, 1.050701
    %v2783 = vmul.f32 %v2779, 1.050701
    %v2784 = vmul.f32 %v2780, 1.050701
    %v2789 = vcombine.high %v2781, %v2781
    %v2791 = vunpack.c.l.s4 1966171168
    %v2792 = vunpack.c.0.s8 %v2791
    %v2793 = vlaneseq
    %v2794 = vshrl.u32 %v2793, 7
    %v2795 = vsub.s32 %v2792, %v2794
    %v2796 = vrot.slane %v2781, %v2795
    %v2798 = vunpack.c.l.s4 1966171168
    %v2799 = vunpack.c.0.s8 %v2798
    %v2800 = vlaneseq
    %v2801 = vshrl.u32 %v2800, 7
    %v2802 = vsub.s32 %v2799, %v2801
    %v2803 = vrot.slane %v2789, %v2802
    %v2804 = vcombine.high %v2796, %v2796
    %v2805 = vcombine.high %v2803, %v2803
    %v2807 = vunpack.c.l.s4 1966171168
    %v2808 = vunpack.c.0.s8 %v2807
    %v2809 = vlaneseq
    %v2810 = vshrl.u32 %v2809, 7
    %v2811 = vsub.s32 %v2808, %v2810
    %v2812 = vrot.slane %v2796, %v2811
    %v2814 = vunpack.c.l.s4 1966171168
    %v2815 = vunpack.c.0.s8 %v2814
    %v2816 = vlaneseq
    %v2817 = vshrl.u32 %v2816, 7
    %v2818 = vsub.s32 %v2815, %v2817
    %v2819 = vrot.slane %v2803, %v2818
    %v2821 = vunpack.c.l.s4 1966171168
    %v2822 = vunpack.c.0.s8 %v2821
    %v2823 = vlaneseq
    %v2824 = vshrl.u32 %v2823, 7
    %v2825 = vsub.s32 %v2822, %v2824
    %v2826 = vrot.slane %v2804, %v2825
    %v2828 = vunpack.c.l.s4 1966171168
    %v2829 = vunpack.c.0.s8 %v2828
    %v2830 = vlaneseq
    %v2831 = vshrl.u32 %v2830, 7
    %v2832 = vsub.s32 %v2829, %v2831
    %v2833 = vrot.slane %v2805, %v2832
    %v2834 = vcombine.high %v2812, %v2812
    %v2835 = vcombine.high %v2819, %v2819
    %v2836 = vcombine.high %v2826, %v2826
    %v2837 = vcombine.high %v2833, %v2833
    %v2838 = vcombine.high %v2782, %v2782
    %v2840 = vunpack.c.l.s4 1966171168
    %v2841 = vunpack.c.0.s8 %v2840
    %v2842 = vlaneseq
    %v2843 = vshrl.u32 %v2842, 7
    %v2844 = vsub.s32 %v2841, %v2843
    %v2845 = vrot.slane %v2782, %v2844
    %v2847 = vunpack.c.l.s4 1966171168
    %v2848 = vunpack.c.0.s8 %v2847
    %v2849 = vlaneseq
    %v2850 = vshrl.u32 %v2849, 7
    %v2851 = vsub.s32 %v2848, %v2850
    %v2852 = vrot.slane %v2838, %v2851
    %v2853 = vcombine.high %v2845, %v2845
    %v2854 = vcombine.high %v2852, %v2852
    %v2856 = vunpack.c.l.s4 1966171168
    %v2857 = vunpack.c.0.s8 %v2856
    %v2858 = vlaneseq
    %v2859 = vshrl.u32 %v2858, 7
    %v2860 = vsub.s32 %v2857, %v2859
    %v2861 = vrot.slane %v2845, %v2860
    %v2863 = vunpack.c.l.s4 1966171168
    %v2864 = vunpack.c.0.s8 %v2863
    %v2865 = vlaneseq
    %v2866 = vshrl.u32 %v2865, 7
    %v2867 = vsub.s32 %v2864, %v2866
    %v2868 = vrot.slane %v2852, %v2867
    %v2870 = vunpack.c.l.s4 1966171168
    %v2871 = vunpack.c.0.s8 %v2870
    %v2872 = vlaneseq
    %v2873 = vshrl.u32 %v2872, 7
    %v2874 = vsub.s32 %v2871, %v2873
    %v2875 = vrot.slane %v2853, %v2874
    %v2877 = vunpack.c.l.s4 1966171168
    %v2878 = vunpack.c.0.s8 %v2877
    %v2879 = vlaneseq
    %v2880 = vshrl.u32 %v2879, 7
    %v2881 = vsub.s32 %v2878, %v2880
    %v2882 = vrot.slane %v2854, %v2881
    %v2883 = vcombine.high %v2861, %v2861
    %v2884 = vcombine.high %v2868, %v2868
    %v2885 = vcombine.high %v2875, %v2875
    %v2886 = vcombine.high %v2882, %v2882
    %v2887 = vcombine.high %v2783, %v2783
    %v2889 = vunpack.c.l.s4 1966171168
    %v2890 = vunpack.c.0.s8 %v2889
    %v2891 = vlaneseq
    %v2892 = vshrl.u32 %v2891, 7
    %v2893 = vsub.s32 %v2890, %v2892
    %v2894 = vrot.slane %v2783, %v2893
    %v2896 = vunpack.c.l.s4 1966171168
    %v2897 = vunpack.c.0.s8 %v2896
    %v2898 = vlaneseq
    %v2899 = vshrl.u32 %v2898, 7
    %v2900 = vsub.s32 %v2897, %v2899
    %v2901 = vrot.slane %v2887, %v2900
    %v2902 = vcombine.high %v2894, %v2894
    %v2903 = vcombine.high %v2901, %v2901
    %v2905 = vunpack.c.l.s4 1966171168
    %v2906 = vunpack.c.0.s8 %v2905
    %v2907 = vlaneseq
    %v2908 = vshrl.u32 %v2907, 7
    %v2909 = vsub.s32 %v2906, %v2908
    %v2910 = vrot.slane %v2894, %v2909
    %v2912 = vunpack.c.l.s4 1966171168
    %v2913 = vunpack.c.0.s8 %v2912
    %v2914 = vlaneseq
    %v2915 = vshrl.u32 %v2914, 7
    %v2916 = vsub.s32 %v2913, %v2915
    %v2917 = vrot.slane %v2901, %v2916
    %v2919 = vunpack.c.l.s4 1966171168
    %v2920 = vunpack.c.0.s8 %v2919
    %v2921 = vlaneseq
    %v2922 = vshrl.u32 %v2921, 7
    %v2923 = vsub.s32 %v2920, %v2922
    %v2924 = vrot.slane %v2902, %v2923
    %v2926 = vunpack.c.l.s4 1966171168
    %v2927 = vunpack.c.0.s8 %v2926
    %v2928 = vlaneseq
    %v2929 = vshrl.u32 %v2928, 7
    %v2930 = vsub.s32 %v2927, %v2929
    %v2931 = vrot.slane %v2903, %v2930
    %v2932 = vcombine.high %v2910, %v2910
    %v2933 = vcombine.high %v2917, %v2917
    %v2934 = vcombine.high %v2924, %v2924
    %v2935 = vcombine.high %v2931, %v2931
    %v2936 = vcombine.high %v2784, %v2784
    %v2938 = vunpack.c.l.s4 1966171168
    %v2939 = vunpack.c.0.s8 %v2938
    %v2940 = vlaneseq
    %v2941 = vshrl.u32 %v2940, 7
    %v2942 = vsub.s32 %v2939, %v2941
    %v2943 = vrot.slane %v2784, %v2942
    %v2945 = vunpack.c.l.s4 1966171168
    %v2946 = vunpack.c.0.s8 %v2945
    %v2947 = vlaneseq
    %v2948 = vshrl.u32 %v2947, 7
    %v2949 = vsub.s32 %v2946, %v2948
    %v2950 = vrot.slane %v2936, %v2949
    %v2951 = vcombine.high %v2943, %v2943
    %v2952 = vcombine.high %v2950, %v2950
    %v2954 = vunpack.c.l.s4 1966171168
    %v2955 = vunpack.c.0.s8 %v2954
    %v2956 = vlaneseq
    %v2957 = vshrl.u32 %v2956, 7
    %v2958 = vsub.s32 %v2955, %v2957
    %v2959 = vrot.slane %v2943, %v2958
    %v2961 = vunpack.c.l.s4 1966171168
    %v2962 = vunpack.c.0.s8 %v2961
    %v2963 = vlaneseq
    %v2964 = vshrl.u32 %v2963, 7
    %v2965 = vsub.s32 %v2962, %v2964
    %v2966 = vrot.slane %v2950, %v2965
    %v2968 = vunpack.c.l.s4 1966171168
    %v2969 = vunpack.c.0.s8 %v2968
    %v2970 = vlaneseq
    %v2971 = vshrl.u32 %v2970, 7
    %v2972 = vsub.s32 %v2969, %v2971
    %v2973 = vrot.slane %v2951, %v2972
    %v2975 = vunpack.c.l.s4 1966171168
    %v2976 = vunpack.c.0.s8 %v2975
    %v2977 = vlaneseq
    %v2978 = vshrl.u32 %v2977, 7
    %v2979 = vsub.s32 %v2976, %v2978
    %v2980 = vrot.slane %v2952, %v2979
    %v2981 = vcombine.high %v2959, %v2959
    %v2982 = vcombine.high %v2966, %v2966
    %v2983 = vcombine.high %v2973, %v2973
    %v2984 = vcombine.high %v2980, %v2980
    %v2985 = vlaneseq
    %v2986 = vshrl.u32 %v2985, 7
    %v2987 = vsub.s32 0, %v2986
    %v2988 = vrot.slane %v2812, %v2987
    %v2989 = vlaneseq
    %v2990 = vshrl.u32 %v2989, 7
    %v2991 = vsub.s32 0, %v2990
    %v2992 = vrot.slane %v2826, %v2991
    %v2993 = vlaneseq
    %v2994 = vshrl.u32 %v2993, 7
    %v2995 = vsub.s32 0, %v2994
    %v2996 = vrot.slane %v2834, %v2995
    %v2997 = vlaneseq
    %v2998 = vshrl.u32 %v2997, 7
    %v2999 = vsub.s32 0, %v2998
    %v3000 = vrot.slane %v2836, %v2999
    %v3001 = vlaneseq
    %v3002 = vshrl.u32 %v3001, 7
    %v3003 = vsub.s32 0, %v3002
    %v3004 = vrot.slane %v2819, %v3003
    %v3005 = vlaneseq
    %v3006 = vshrl.u32 %v3005, 7
    %v3007 = vsub.s32 0, %v3006
    %v3008 = vrot.slane %v2833, %v3007
    %v3009 = vlaneseq
    %v3010 = vshrl.u32 %v3009, 7
    %v3011 = vsub.s32 0, %v3010
    %v3012 = vrot.slane %v2835, %v3011
    %v3013 = vlaneseq
    %v3014 = vshrl.u32 %v3013, 7
    %v3015 = vsub.s32 0, %v3014
    %v3016 = vrot.slane %v2837, %v3015
    %v3017 = vlaneseq
    %v3018 = vshrl.u32 %v3017, 7
    %v3019 = vsub.s32 0, %v3018
    %v3020 = vrot.slane %v2861, %v3019
    %v3021 = vlaneseq
    %v3022 = vshrl.u32 %v3021, 7
    %v3023 = vsub.s32 0, %v3022
    %v3024 = vrot.slane %v2875, %v3023
    %v3025 = vlaneseq
    %v3026 = vshrl.u32 %v3025, 7
    %v3027 = vsub.s32 0, %v3026
    %v3028 = vrot.slane %v2883, %v3027
    %v3029 = vlaneseq
    %v3030 = vshrl.u32 %v3029, 7
    %v3031 = vsub.s32 0, %v3030
    %v3032 = vrot.slane %v2885, %v3031
    %v3033 = vlaneseq
    %v3034 = vshrl.u32 %v3033, 7
    %v3035 = vsub.s32 0, %v3034
    %v3036 = vrot.slane %v2868, %v3035
    %v3037 = vlaneseq
    %v3038 = vshrl.u32 %v3037, 7
    %v3039 = vsub.s32 0, %v3038
    %v3040 = vrot.slane %v2882, %v3039
    %v3041 = vlaneseq
    %v3042 = vshrl.u32 %v3041, 7
    %v3043 = vsub.s32 0, %v3042
    %v3044 = vrot.slane %v2884, %v3043
    %v3045 = vlaneseq
    %v3046 = vshrl.u32 %v3045, 7
    %v3047 = vsub.s32 0, %v3046
    %v3048 = vrot.slane %v2886, %v3047
    %v3049 = vlaneseq
    %v3050 = vshrl.u32 %v3049, 7
    %v3051 = vsub.s32 0, %v3050
    %v3052 = vrot.slane %v2910, %v3051
    %v3053 = vlaneseq
    %v3054 = vshrl.u32 %v3053, 7
    %v3055 = vsub.s32 0, %v3054
    %v3056 = vrot.slane %v2924, %v3055
    %v3057 = vlaneseq
    %v3058 = vshrl.u32 %v3057, 7
    %v3059 = vsub.s32 0, %v3058
    %v3060 = vrot.slane %v2932, %v3059
    %v3061 = vlaneseq
    %v3062 = vshrl.u32 %v3061, 7
    %v3063 = vsub.s32 0, %v3062
    %v3064 = vrot.slane %v2934, %v3063
    %v3065 = vlaneseq
    %v3066 = vshrl.u32 %v3065, 7
    %v3067 = vsub.s32 0, %v3066
    %v3068 = vrot.slane %v2917, %v3067
    %v3069 = vlaneseq
    %v3070 = vshrl.u32 %v3069, 7
    %v3071 = vsub.s32 0, %v3070
    %v3072 = vrot.slane %v2931, %v3071
    %v3073 = vlaneseq
    %v3074 = vshrl.u32 %v3073, 7
    %v3075 = vsub.s32 0, %v3074
    %v3076 = vrot.slane %v2933, %v3075
    %v3077 = vlaneseq
    %v3078 = vshrl.u32 %v3077, 7
    %v3079 = vsub.s32 0, %v3078
    %v3080 = vrot.slane %v2935, %v3079
    %v3081 = vlaneseq
    %v3082 = vshrl.u32 %v3081, 7
    %v3083 = vsub.s32 0, %v3082
    %v3084 = vrot.slane %v2959, %v3083
    %v3085 = vlaneseq
    %v3086 = vshrl.u32 %v3085, 7
    %v3087 = vsub.s32 0, %v3086
    %v3088 = vrot.slane %v2973, %v3087
    %v3089 = vlaneseq
    %v3090 = vshrl.u32 %v3089, 7
    %v3091 = vsub.s32 0, %v3090
    %v3092 = vrot.slane %v2981, %v3091
    %v3093 = vlaneseq
    %v3094 = vshrl.u32 %v3093, 7
    %v3095 = vsub.s32 0, %v3094
    %v3096 = vrot.slane %v2983, %v3095
    %v3097 = vlaneseq
    %v3098 = vshrl.u32 %v3097, 7
    %v3099 = vsub.s32 0, %v3098
    %v3100 = vrot.slane %v2966, %v3099
    %v3101 = vlaneseq
    %v3102 = vshrl.u32 %v3101, 7
    %v3103 = vsub.s32 0, %v3102
    %v3104 = vrot.slane %v2980, %v3103
    %v3105 = vlaneseq
    %v3106 = vshrl.u32 %v3105, 7
    %v3107 = vsub.s32 0, %v3106
    %v3108 = vrot.slane %v2982, %v3107
    %v3109 = vlaneseq
    %v3110 = vshrl.u32 %v3109, 7
    %v3111 = vsub.s32 0, %v3110
    %v3112 = vrot.slane %v2984, %v3111
    %vm3145 = vcmp.gt.f32.partialorder %v2988, %v2781
    %vm3146 = vcmp.gt.f32.partialorder %v2988, %v2782
    %vm3147 = vcmp.gt.f32.partialorder %v2992, %v2781
    %vm3148 = vcmp.gt.f32.partialorder %v2992, %v2782
    %vm3149 = vcmp.gt.f32.partialorder %v2996, %v2781
    %vm3150 = vcmp.gt.f32.partialorder %v2996, %v2782
    %vm3151 = vcmp.gt.f32.partialorder %v3000, %v2781
    %vm3152 = vcmp.gt.f32.partialorder %v3000, %v2782
    %vm3153 = vcmp.gt.f32.partialorder %v3004, %v2781
    %vm3154 = vcmp.gt.f32.partialorder %v3004, %v2782
    %vm3155 = vcmp.gt.f32.partialorder %v3008, %v2781
    %vm3156 = vcmp.gt.f32.partialorder %v3008, %v2782
    %vm3157 = vcmp.gt.f32.partialorder %v3012, %v2781
    %vm3158 = vcmp.gt.f32.partialorder %v3012, %v2782
    %vm3159 = vcmp.gt.f32.partialorder %v3016, %v2781
    %vm3160 = vcmp.gt.f32.partialorder %v3016, %v2782
    %vm3161 = vcmp.gt.f32.partialorder %v3020, %v2781
    %vm3162 = vcmp.gt.f32.partialorder %v3020, %v2782
    %vm3163 = vcmp.gt.f32.partialorder %v3024, %v2781
    %vm3164 = vcmp.gt.f32.partialorder %v3024, %v2782
    %vm3165 = vcmp.gt.f32.partialorder %v3028, %v2781
    %vm3166 = vcmp.gt.f32.partialorder %v3028, %v2782
    %vm3167 = vcmp.gt.f32.partialorder %v3032, %v2781
    %vm3168 = vcmp.gt.f32.partialorder %v3032, %v2782
    %vm3169 = vcmp.gt.f32.partialorder %v3036, %v2781
    %vm3170 = vcmp.gt.f32.partialorder %v3036, %v2782
    %vm3171 = vcmp.gt.f32.partialorder %v3040, %v2781
    %vm3172 = vcmp.gt.f32.partialorder %v3040, %v2782
    %vm3173 = vcmp.gt.f32.partialorder %v3044, %v2781
    %vm3174 = vcmp.gt.f32.partialorder %v3044, %v2782
    %vm3175 = vcmp.gt.f32.partialorder %v3048, %v2781
    %vm3176 = vcmp.gt.f32.partialorder %v3048, %v2782
    %vm3177 = vcmp.gt.f32.partialorder %v3052, %v2783
    %vm3178 = vcmp.gt.f32.partialorder %v3052, %v2784
    %vm3179 = vcmp.gt.f32.partialorder %v3056, %v2783
    %vm3180 = vcmp.gt.f32.partialorder %v3056, %v2784
    %vm3181 = vcmp.gt.f32.partialorder %v3060, %v2783
    %vm3182 = vcmp.gt.f32.partialorder %v3060, %v2784
    %vm3183 = vcmp.gt.f32.partialorder %v3064, %v2783
    %vm3184 = vcmp.gt.f32.partialorder %v3064, %v2784
    %vm3185 = vcmp.gt.f32.partialorder %v3068, %v2783
    %vm3186 = vcmp.gt.f32.partialorder %v3068, %v2784
    %vm3187 = vcmp.gt.f32.partialorder %v3072, %v2783
    %vm3188 = vcmp.gt.f32.partialorder %v3072, %v2784
    %vm3189 = vcmp.gt.f32.partialorder %v3076, %v2783
    %vm3190 = vcmp.gt.f32.partialorder %v3076, %v2784
    %vm3191 = vcmp.gt.f32.partialorder %v3080, %v2783
    %vm3192 = vcmp.gt.f32.partialorder %v3080, %v2784
    %vm3193 = vcmp.gt.f32.partialorder %v3084, %v2783
    %vm3194 = vcmp.gt.f32.partialorder %v3084, %v2784
    %vm3195 = vcmp.gt.f32.partialorder %v3088, %v2783
    %vm3196 = vcmp.gt.f32.partialorder %v3088, %v2784
    %vm3197 = vcmp.gt.f32.partialorder %v3092, %v2783
    %vm3198 = vcmp.gt.f32.partialorder %v3092, %v2784
    %vm3199 = vcmp.gt.f32.partialorder %v3096, %v2783
    %vm3200 = vcmp.gt.f32.partialorder %v3096, %v2784
    %vm3201 = vcmp.gt.f32.partialorder %v3100, %v2783
    %vm3202 = vcmp.gt.f32.partialorder %v3100, %v2784
    %vm3203 = vcmp.gt.f32.partialorder %v3104, %v2783
    %vm3204 = vcmp.gt.f32.partialorder %v3104, %v2784
    %vm3205 = vcmp.gt.f32.partialorder %v3108, %v2783
    %vm3206 = vcmp.gt.f32.partialorder %v3108, %v2784
    %vm3207 = vcmp.gt.f32.partialorder %v3112, %v2783
    %vm3208 = vcmp.gt.f32.partialorder %v3112, %v2784
    %vm3209 = vcmp.eq.f32.partialorder %v2988, %v2781
    %vm3210 = vcmp.eq.f32.partialorder %v2988, %v2782
    %vm3211 = vcmp.eq.f32.partialorder %v2992, %v2781
    %vm3212 = vcmp.eq.f32.partialorder %v2992, %v2782
    %vm3213 = vcmp.eq.f32.partialorder %v2996, %v2781
    %vm3214 = vcmp.eq.f32.partialorder %v2996, %v2782
    %vm3215 = vcmp.eq.f32.partialorder %v3000, %v2781
    %vm3216 = vcmp.eq.f32.partialorder %v3000, %v2782
    %vm3217 = vcmp.eq.f32.partialorder %v3004, %v2781
    %vm3218 = vcmp.eq.f32.partialorder %v3004, %v2782
    %vm3219 = vcmp.eq.f32.partialorder %v3008, %v2781
    %vm3220 = vcmp.eq.f32.partialorder %v3008, %v2782
    %vm3221 = vcmp.eq.f32.partialorder %v3012, %v2781
    %vm3222 = vcmp.eq.f32.partialorder %v3012, %v2782
    %vm3223 = vcmp.eq.f32.partialorder %v3016, %v2781
    %vm3224 = vcmp.eq.f32.partialorder %v3016, %v2782
    %vm3225 = vcmp.eq.f32.partialorder %v3020, %v2781
    %vm3226 = vcmp.eq.f32.partialorder %v3020, %v2782
    %vm3227 = vcmp.eq.f32.partialorder %v3024, %v2781
    %vm3228 = vcmp.eq.f32.partialorder %v3024, %v2782
    %vm3229 = vcmp.eq.f32.partialorder %v3028, %v2781
    %vm3230 = vcmp.eq.f32.partialorder %v3028, %v2782
    %vm3231 = vcmp.eq.f32.partialorder %v3032, %v2781
    %vm3232 = vcmp.eq.f32.partialorder %v3032, %v2782
    %vm3233 = vcmp.eq.f32.partialorder %v3036, %v2781
    %vm3234 = vcmp.eq.f32.partialorder %v3036, %v2782
    %vm3235 = vcmp.eq.f32.partialorder %v3040, %v2781
    %vm3236 = vcmp.eq.f32.partialorder %v3040, %v2782
    %vm3237 = vcmp.eq.f32.partialorder %v3044, %v2781
    %vm3238 = vcmp.eq.f32.partialorder %v3044, %v2782
    %vm3239 = vcmp.eq.f32.partialorder %v3048, %v2781
    %vm3240 = vcmp.eq.f32.partialorder %v3048, %v2782
    %vm3241 = vcmp.eq.f32.partialorder %v3052, %v2783
    %vm3242 = vcmp.eq.f32.partialorder %v3052, %v2784
    %vm3243 = vcmp.eq.f32.partialorder %v3056, %v2783
    %vm3244 = vcmp.eq.f32.partialorder %v3056, %v2784
    %vm3245 = vcmp.eq.f32.partialorder %v3060, %v2783
    %vm3246 = vcmp.eq.f32.partialorder %v3060, %v2784
    %vm3247 = vcmp.eq.f32.partialorder %v3064, %v2783
    %vm3248 = vcmp.eq.f32.partialorder %v3064, %v2784
    %vm3249 = vcmp.eq.f32.partialorder %v3068, %v2783
    %vm3250 = vcmp.eq.f32.partialorder %v3068, %v2784
    %vm3251 = vcmp.eq.f32.partialorder %v3072, %v2783
    %vm3252 = vcmp.eq.f32.partialorder %v3072, %v2784
    %vm3253 = vcmp.eq.f32.partialorder %v3076, %v2783
    %vm3254 = vcmp.eq.f32.partialorder %v3076, %v2784
    %vm3255 = vcmp.eq.f32.partialorder %v3080, %v2783
    %vm3256 = vcmp.eq.f32.partialorder %v3080, %v2784
    %vm3257 = vcmp.eq.f32.partialorder %v3084, %v2783
    %vm3258 = vcmp.eq.f32.partialorder %v3084, %v2784
    %vm3259 = vcmp.eq.f32.partialorder %v3088, %v2783
    %vm3260 = vcmp.eq.f32.partialorder %v3088, %v2784
    %vm3261 = vcmp.eq.f32.partialorder %v3092, %v2783
    %vm3262 = vcmp.eq.f32.partialorder %v3092, %v2784
    %vm3263 = vcmp.eq.f32.partialorder %v3096, %v2783
    %vm3264 = vcmp.eq.f32.partialorder %v3096, %v2784
    %vm3265 = vcmp.eq.f32.partialorder %v3100, %v2783
    %vm3266 = vcmp.eq.f32.partialorder %v3100, %v2784
    %vm3267 = vcmp.eq.f32.partialorder %v3104, %v2783
    %vm3268 = vcmp.eq.f32.partialorder %v3104, %v2784
    %vm3269 = vcmp.eq.f32.partialorder %v3108, %v2783
    %vm3270 = vcmp.eq.f32.partialorder %v3108, %v2784
    %vm3271 = vcmp.eq.f32.partialorder %v3112, %v2783
    %vm3272 = vcmp.eq.f32.partialorder %v3112, %v2784
    %vm3273 = vmand %vm3209, %vm1020
    %vm3274 = vmand %vm3210, %vm1021
    %vm3275 = vmand %vm3211, %vm1022
    %vm3276 = vmand %vm3212, %vm1023
    %vm3277 = vmand %vm3213, %vm1024
    %vm3278 = vmand %vm3214, %vm1025
    %vm3279 = vmand %vm3215, %vm1026
    %vm3280 = vmand %vm3216, %vm1027
    %vm3281 = vmand %vm3217, %vm1028
    %vm3282 = vmand %vm3218, %vm1029
    %vm3283 = vmand %vm3219, %vm1030
    %vm3284 = vmand %vm3220, %vm1031
    %vm3285 = vmand %vm3221, %vm1032
    %vm3286 = vmand %vm3222, %vm1033
    %vm3287 = vmand %vm3223, %vm1034
    %vm3288 = vmand %vm3224, %vm1035
    %vm3289 = vmand %vm3225, %vm1036
    %vm3290 = vmand %vm3226, %vm1037
    %vm3291 = vmand %vm3227, %vm1038
    %vm3292 = vmand %vm3228, %vm1039
    %vm3293 = vmand %vm3229, %vm1040
    %vm3294 = vmand %vm3230, %vm1041
    %vm3295 = vmand %vm3231, %vm1042
    %vm3296 = vmand %vm3232, %vm1043
    %vm3297 = vmand %vm3233, %vm1044
    %vm3298 = vmand %vm3234, %vm1045
    %vm3299 = vmand %vm3235, %vm1046
    %vm3300 = vmand %vm3236, %vm1047
    %vm3301 = vmand %vm3237, %vm1048
    %vm3302 = vmand %vm3238, %vm1049
    %vm3303 = vmand %vm3239, %vm1050
    %vm3304 = vmand %vm3240, %vm1051
    %vm3305 = vmand %vm3241, %vm1020
    %vm3306 = vmand %vm3242, %vm1021
    %vm3307 = vmand %vm3243, %vm1022
    %vm3308 = vmand %vm3244, %vm1023
    %vm3309 = vmand %vm3245, %vm1024
    %vm3310 = vmand %vm3246, %vm1025
    %vm3311 = vmand %vm3247, %vm1026
    %vm3312 = vmand %vm3248, %vm1027
    %vm3313 = vmand %vm3249, %vm1028
    %vm3314 = vmand %vm3250, %vm1029
    %vm3315 = vmand %vm3251, %vm1030
    %vm3316 = vmand %vm3252, %vm1031
    %vm3317 = vmand %vm3253, %vm1032
    %vm3318 = vmand %vm3254, %vm1033
    %vm3319 = vmand %vm3255, %vm1034
    %vm3320 = vmand %vm3256, %vm1035
    %vm3321 = vmand %vm3257, %vm1036
    %vm3322 = vmand %vm3258, %vm1037
    %vm3323 = vmand %vm3259, %vm1038
    %vm3324 = vmand %vm3260, %vm1039
    %vm3325 = vmand %vm3261, %vm1040
    %vm3326 = vmand %vm3262, %vm1041
    %vm3327 = vmand %vm3263, %vm1042
    %vm3328 = vmand %vm3264, %vm1043
    %vm3329 = vmand %vm3265, %vm1044
    %vm3330 = vmand %vm3266, %vm1045
    %vm3331 = vmand %vm3267, %vm1046
    %vm3332 = vmand %vm3268, %vm1047
    %vm3333 = vmand %vm3269, %vm1048
    %vm3334 = vmand %vm3270, %vm1049
    %vm3335 = vmand %vm3271, %vm1050
    %vm3336 = vmand %vm3272, %vm1051
    %vm3337 = vmor %vm3145, %vm3273
    %vm3338 = vmor %vm3146, %vm3274
    %vm3339 = vmor %vm3147, %vm3275
    %vm3340 = vmor %vm3148, %vm3276
    %vm3341 = vmor %vm3149, %vm3277
    %vm3342 = vmor %vm3150, %vm3278
    %vm3343 = vmor %vm3151, %vm3279
    %vm3344 = vmor %vm3152, %vm3280
    %vm3345 = vmor %vm3153, %vm3281
    %vm3346 = vmor %vm3154, %vm3282
    %vm3347 = vmor %vm3155, %vm3283
    %vm3348 = vmor %vm3156, %vm3284
    %vm3349 = vmor %vm3157, %vm3285
    %vm3350 = vmor %vm3158, %vm3286
    %vm3351 = vmor %vm3159, %vm3287
    %vm3352 = vmor %vm3160, %vm3288
    %vm3353 = vmor %vm3161, %vm3289
    %vm3354 = vmor %vm3162, %vm3290
    %vm3355 = vmor %vm3163, %vm3291
    %vm3356 = vmor %vm3164, %vm3292
    %vm3357 = vmor %vm3165, %vm3293
    %vm3358 = vmor %vm3166, %vm3294
    %vm3359 = vmor %vm3167, %vm3295
    %vm3360 = vmor %vm3168, %vm3296
    %vm3361 = vmor %vm3169, %vm3297
    %vm3362 = vmor %vm3170, %vm3298
    %vm3363 = vmor %vm3171, %vm3299
    %vm3364 = vmor %vm3172, %vm3300
    %vm3365 = vmor %vm3173, %vm3301
    %vm3366 = vmor %vm3174, %vm3302
    %vm3367 = vmor %vm3175, %vm3303
    %vm3368 = vmor %vm3176, %vm3304
    %vm3369 = vmor %vm3177, %vm3305
    %vm3370 = vmor %vm3178, %vm3306
    %vm3371 = vmor %vm3179, %vm3307
    %vm3372 = vmor %vm3180, %vm3308
    %vm3373 = vmor %vm3181, %vm3309
    %vm3374 = vmor %vm3182, %vm3310
    %vm3375 = vmor %vm3183, %vm3311
    %vm3376 = vmor %vm3184, %vm3312
    %vm3377 = vmor %vm3185, %vm3313
    %vm3378 = vmor %vm3186, %vm3314
    %vm3379 = vmor %vm3187, %vm3315
    %vm3380 = vmor %vm3188, %vm3316
    %vm3381 = vmor %vm3189, %vm3317
    %vm3382 = vmor %vm3190, %vm3318
    %vm3383 = vmor %vm3191, %vm3319
    %vm3384 = vmor %vm3192, %vm3320
    %vm3385 = vmor %vm3193, %vm3321
    %vm3386 = vmor %vm3194, %vm3322
    %vm3387 = vmor %vm3195, %vm3323
    %vm3388 = vmor %vm3196, %vm3324
    %vm3389 = vmor %vm3197, %vm3325
    %vm3390 = vmor %vm3198, %vm3326
    %vm3391 = vmor %vm3199, %vm3327
    %vm3392 = vmor %vm3200, %vm3328
    %vm3393 = vmor %vm3201, %vm3329
    %vm3394 = vmor %vm3202, %vm3330
    %vm3395 = vmor %vm3203, %vm3331
    %vm3396 = vmor %vm3204, %vm3332
    %vm3397 = vmor %vm3205, %vm3333
    %vm3398 = vmor %vm3206, %vm3334
    %vm3399 = vmor %vm3207, %vm3335
    %vm3400 = vmor %vm3208, %vm3336
    %v3401 = vsel %vm3337, 1, 0
    %v3402 = vsel %vm3338, 1, 0
    %v3403 = vsel %vm3339, 1, 0
    %v3404 = vsel %vm3340, 1, 0
    %v3405 = vsel %vm3341, 1, 0
    %v3406 = vsel %vm3342, 1, 0
    %v3407 = vsel %vm3343, 1, 0
    %v3408 = vsel %vm3344, 1, 0
    %v3409 = vsel %vm3345, 1, 0
    %v3410 = vsel %vm3346, 1, 0
    %v3411 = vsel %vm3347, 1, 0
    %v3412 = vsel %vm3348, 1, 0
    %v3413 = vsel %vm3349, 1, 0
    %v3414 = vsel %vm3350, 1, 0
    %v3415 = vsel %vm3351, 1, 0
    %v3416 = vsel %vm3352, 1, 0
    %v3417 = vsel %vm3353, 1, 0
    %v3418 = vsel %vm3354, 1, 0
    %v3419 = vsel %vm3355, 1, 0
    %v3420 = vsel %vm3356, 1, 0
    %v3421 = vsel %vm3357, 1, 0
    %v3422 = vsel %vm3358, 1, 0
    %v3423 = vsel %vm3359, 1, 0
    %v3424 = vsel %vm3360, 1, 0
    %v3425 = vsel %vm3361, 1, 0
    %v3426 = vsel %vm3362, 1, 0
    %v3427 = vsel %vm3363, 1, 0
    %v3428 = vsel %vm3364, 1, 0
    %v3429 = vsel %vm3365, 1, 0
    %v3430 = vsel %vm3366, 1, 0
    %v3431 = vsel %vm3367, 1, 0
    %v3432 = vsel %vm3368, 1, 0
    %v3433 = vsel %vm3369, 1, 0
    %v3434 = vsel %vm3370, 1, 0
    %v3435 = vsel %vm3371, 1, 0
    %v3436 = vsel %vm3372, 1, 0
    %v3437 = vsel %vm3373, 1, 0
    %v3438 = vsel %vm3374, 1, 0
    %v3439 = vsel %vm3375, 1, 0
    %v3440 = vsel %vm3376, 1, 0
    %v3441 = vsel %vm3377, 1, 0
    %v3442 = vsel %vm3378, 1, 0
    %v3443 = vsel %vm3379, 1, 0
    %v3444 = vsel %vm3380, 1, 0
    %v3445 = vsel %vm3381, 1, 0
    %v3446 = vsel %vm3382, 1, 0
    %v3447 = vsel %vm3383, 1, 0
    %v3448 = vsel %vm3384, 1, 0
    %v3449 = vsel %vm3385, 1, 0
    %v3450 = vsel %vm3386, 1, 0
    %v3451 = vsel %vm3387, 1, 0
    %v3452 = vsel %vm3388, 1, 0
    %v3453 = vsel %vm3389, 1, 0
    %v3454 = vsel %vm3390, 1, 0
    %v3455 = vsel %vm3391, 1, 0
    %v3456 = vsel %vm3392, 1, 0
    %v3457 = vsel %vm3393, 1, 0
    %v3458 = vsel %vm3394, 1, 0
    %v3459 = vsel %vm3395, 1, 0
    %v3460 = vsel %vm3396, 1, 0
    %v3461 = vsel %vm3397, 1, 0
    %v3462 = vsel %vm3398, 1, 0
    %v3463 = vsel %vm3399, 1, 0
    %v3464 = vsel %vm3400, 1, 0
    %v3465 = vcvt.s32.f32 %v3401
    %v3466 = vcvt.s32.f32 %v3402
    %v3467 = vcvt.s32.f32 %v3403
    %v3468 = vcvt.s32.f32 %v3404
    %v3469 = vcvt.s32.f32 %v3405
    %v3470 = vcvt.s32.f32 %v3406
    %v3471 = vcvt.s32.f32 %v3407
    %v3472 = vcvt.s32.f32 %v3408
    %v3473 = vcvt.s32.f32 %v3409
    %v3474 = vcvt.s32.f32 %v3410
    %v3475 = vcvt.s32.f32 %v3411
    %v3476 = vcvt.s32.f32 %v3412
    %v3477 = vcvt.s32.f32 %v3413
    %v3478 = vcvt.s32.f32 %v3414
    %v3479 = vcvt.s32.f32 %v3415
    %v3480 = vcvt.s32.f32 %v3416
    %v3481 = vcvt.s32.f32 %v3417
    %v3482 = vcvt.s32.f32 %v3418
    %v3483 = vcvt.s32.f32 %v3419
    %v3484 = vcvt.s32.f32 %v3420
    %v3485 = vcvt.s32.f32 %v3421
    %v3486 = vcvt.s32.f32 %v3422
    %v3487 = vcvt.s32.f32 %v3423
    %v3488 = vcvt.s32.f32 %v3424
    %v3489 = vcvt.s32.f32 %v3425
    %v3490 = vcvt.s32.f32 %v3426
    %v3491 = vcvt.s32.f32 %v3427
    %v3492 = vcvt.s32.f32 %v3428
    %v3493 = vcvt.s32.f32 %v3429
    %v3494 = vcvt.s32.f32 %v3430
    %v3495 = vcvt.s32.f32 %v3431
    %v3496 = vcvt.s32.f32 %v3432
    %v3497 = vcvt.s32.f32 %v3433
    %v3498 = vcvt.s32.f32 %v3434
    %v3499 = vcvt.s32.f32 %v3435
    %v3500 = vcvt.s32.f32 %v3436
    %v3501 = vcvt.s32.f32 %v3437
    %v3502 = vcvt.s32.f32 %v3438
    %v3503 = vcvt.s32.f32 %v3439
    %v3504 = vcvt.s32.f32 %v3440
    %v3505 = vcvt.s32.f32 %v3441
    %v3506 = vcvt.s32.f32 %v3442
    %v3507 = vcvt.s32.f32 %v3443
    %v3508 = vcvt.s32.f32 %v3444
    %v3509 = vcvt.s32.f32 %v3445
    %v3510 = vcvt.s32.f32 %v3446
    %v3511 = vcvt.s32.f32 %v3447
    %v3512 = vcvt.s32.f32 %v3448
    %v3513 = vcvt.s32.f32 %v3449
    %v3514 = vcvt.s32.f32 %v3450
    %v3515 = vcvt.s32.f32 %v3451
    %v3516 = vcvt.s32.f32 %v3452
    %v3517 = vcvt.s32.f32 %v3453
    %v3518 = vcvt.s32.f32 %v3454
    %v3519 = vcvt.s32.f32 %v3455
    %v3520 = vcvt.s32.f32 %v3456
    %v3521 = vcvt.s32.f32 %v3457
    %v3522 = vcvt.s32.f32 %v3458
    %v3523 = vcvt.s32.f32 %v3459
    %v3524 = vcvt.s32.f32 %v3460
    %v3525 = vcvt.s32.f32 %v3461
    %v3526 = vcvt.s32.f32 %v3462
    %v3527 = vcvt.s32.f32 %v3463
    %v3528 = vcvt.s32.f32 %v3464
    %v3529 = vadd.f32 %v3465, %v3467
    %v3530 = vadd.f32 %v3529, %v3469
    %v3531 = vadd.f32 %v3530, %v3471
    %v3532 = vadd.f32 %v3531, %v3473
    %v3533 = vadd.f32 %v3532, %v3475
    %v3534 = vadd.f32 %v3533, %v3477
    %v3535 = vadd.f32 %v3534, %v3479
    %v3536 = vadd.f32 %v3535, %v3481
    %v3537 = vadd.f32 %v3536, %v3483
    %v3538 = vadd.f32 %v3537, %v3485
    %v3539 = vadd.f32 %v3538, %v3487
    %v3540 = vadd.f32 %v3539, %v3489
    %v3541 = vadd.f32 %v3540, %v3491
    %v3542 = vadd.f32 %v3541, %v3493
    %v3543 = vadd.f32 %v3542, %v3495
    %v3544 = vadd.f32 %v3466, %v3468
    %v3545 = vadd.f32 %v3544, %v3470
    %v3546 = vadd.f32 %v3545, %v3472
    %v3547 = vadd.f32 %v3546, %v3474
    %v3548 = vadd.f32 %v3547, %v3476
    %v3549 = vadd.f32 %v3548, %v3478
    %v3550 = vadd.f32 %v3549, %v3480
    %v3551 = vadd.f32 %v3550, %v3482
    %v3552 = vadd.f32 %v3551, %v3484
    %v3553 = vadd.f32 %v3552, %v3486
    %v3554 = vadd.f32 %v3553, %v3488
    %v3555 = vadd.f32 %v3554, %v3490
    %v3556 = vadd.f32 %v3555, %v3492
    %v3557 = vadd.f32 %v3556, %v3494
    %v3558 = vadd.f32 %v3557, %v3496
    %v3559 = vadd.f32 %v3497, %v3499
    %v3560 = vadd.f32 %v3559, %v3501
    %v3561 = vadd.f32 %v3560, %v3503
    %v3562 = vadd.f32 %v3561, %v3505
    %v3563 = vadd.f32 %v3562, %v3507
    %v3564 = vadd.f32 %v3563, %v3509
    %v3565 = vadd.f32 %v3564, %v3511
    %v3566 = vadd.f32 %v3565, %v3513
    %v3567 = vadd.f32 %v3566, %v3515
    %v3568 = vadd.f32 %v3567, %v3517
    %v3569 = vadd.f32 %v3568, %v3519
    %v3570 = vadd.f32 %v3569, %v3521
    %v3571 = vadd.f32 %v3570, %v3523
    %v3572 = vadd.f32 %v3571, %v3525
    %v3573 = vadd.f32 %v3572, %v3527
    %v3574 = vadd.f32 %v3498, %v3500
    %v3575 = vadd.f32 %v3574, %v3502
    %v3576 = vadd.f32 %v3575, %v3504
    %v3577 = vadd.f32 %v3576, %v3506
    %v3578 = vadd.f32 %v3577, %v3508
    %v3579 = vadd.f32 %v3578, %v3510
    %v3580 = vadd.f32 %v3579, %v3512
    %v3581 = vadd.f32 %v3580, %v3514
    %v3582 = vadd.f32 %v3581, %v3516
    %v3583 = vadd.f32 %v3582, %v3518
    %v3584 = vadd.f32 %v3583, %v3520
    %v3585 = vadd.f32 %v3584, %v3522
    %v3586 = vadd.f32 %v3585, %v3524
    %v3587 = vadd.f32 %v3586, %v3526
    %v3588 = vadd.f32 %v3587, %v3528
    %vm3589 = vcmp.lt.f32.partialorder %v3543, 8.0
    %vm3590 = vcmp.lt.f32.partialorder %v3558, 8.0
    %vm3591 = vcmp.lt.f32.partialorder %v3573, 8.0
    %vm3592 = vcmp.lt.f32.partialorder %v3588, 8.0
    %v3593 = vsel %vm3589, 1, 0
    %v3594 = vsel %vm3590, 1, 0
    %v3595 = vsel %vm3591, 1, 0
    %v3596 = vsel %vm3592, 1, 0
    %v3597 = vcvt.s32.f32 %v3593
    %v3598 = vcvt.s32.f32 %v3594
    %v3599 = vcvt.s32.f32 %v3595
    %v3600 = vcvt.s32.f32 %v3596
    %3601 = vmatprep.subr.mxu0 0.0
    %3602 = vmatpush1.msra.mxu0 0.0
    %3603 = vmatprep.subr.mxu0 0.0
    %3604 = vmatpush1.msra.mxu0 0.0
    %3605 = vmatprep.subr.mxu0 0.0
    %3606 = vmatpush1.msra.mxu0 0.0
    %3607 = vmatprep.subr.mxu0 0.0
    %3608 = vmatpush1.msra.mxu0 0.0
    %3609 = vmatprep.subr.mxu0 0.0
    %3610 = vmatpush1.msra.mxu0 0.0
    %3611 = vmatprep.subr.mxu0 0.0
    %3612 = vmatpush1.msra.mxu0 0.0
    %3613 = vmatprep.subr.mxu0 0.0
    %3614 = vmatpush1.msra.mxu0 0.0
    %3615 = vmatprep.subr.mxu0 0.0
    %3616 = vmatpush1.msra.mxu0 0.0
    %3617 = vmatprep.subr.mxu0 0.0
    %3618 = vmatpush1.msra.mxu0 0.0
    %3619 = vmatprep.subr.mxu0 0.0
    %3620 = vmatpush1.msra.mxu0 0.0
    %3621 = vmatprep.subr.mxu0 0.0
    %3622 = vmatpush1.msra.mxu0 0.0
    %3623 = vmatprep.subr.mxu0 0.0
    %3624 = vmatpush1.msra.mxu0 0.0
    %3625 = vmatprep.subr.mxu0 0.0
    %3626 = vmatpush1.msra.mxu0 0.0
    %3627 = vmatprep.subr.mxu0 0.0
    %3628 = vmatpush1.msra.mxu0 0.0
    %3629 = vmatprep.subr.mxu0 0.0
    %3630 = vmatpush1.msra.mxu0 %v3598
    %3631 = vmatprep.subr.mxu0 0.0
    %3632 = vmatpush1.msra.mxu0 %v3597
    %3633 = vmatprep.subr.mxu0 0.0
    %3634 = vmatpush2.msra.mxu0 0.0
    %3635 = vmatprep.subr.mxu0 0.0
    %3636 = vmatpush2.msra.mxu0 0.0
    %3637 = vmatprep.subr.mxu0 0.0
    %3638 = vmatpush2.msra.mxu0 0.0
    %3639 = vmatprep.subr.mxu0 0.0
    %3640 = vmatpush2.msra.mxu0 0.0
    %3641 = vmatprep.subr.mxu0 0.0
    %3642 = vmatpush2.msra.mxu0 0.0
    %3643 = vmatprep.subr.mxu0 0.0
    %3644 = vmatpush2.msra.mxu0 0.0
    %3645 = vmatprep.subr.mxu0 0.0
    %3646 = vmatpush2.msra.mxu0 0.0
    %3647 = vmatprep.subr.mxu0 0.0
    %3648 = vmatpush2.msra.mxu0 0.0
    %3649 = vmatprep.subr.mxu0 0.0
    %3650 = vmatpush2.msra.mxu0 0.0
    %3651 = vmatprep.subr.mxu0 0.0
    %3652 = vmatpush2.msra.mxu0 0.0
    %3653 = vmatprep.subr.mxu0 0.0
    %3654 = vmatpush2.msra.mxu0 0.0
    %3655 = vmatprep.subr.mxu0 0.0
    %3656 = vmatpush2.msra.mxu0 0.0
    %3657 = vmatprep.subr.mxu0 0.0
    %3658 = vmatpush2.msra.mxu0 0.0
    %3659 = vmatprep.subr.mxu0 0.0
    %3660 = vmatpush2.msra.mxu0 0.0
    %3661 = vmatprep.subr.mxu0 0.0
    %3662 = vmatpush2.msra.mxu0 0.0
    %3663 = vmatprep.subr.mxu0 0.0
    %3664 = vmatpush2.msra.mxu0 0.0
    %3665 = vmatprep.mubr.f32.mxu0 0.0
    %3666 = vmatmul.mubr.f32.gmra.mxu0 %v1382
    %v3667 = vpop.f32.mrf.mxu0
    %v3668 = vadd.f32 0.0, %v3667
    %v3669 = vpop.f32.mrf.mxu0
    %3670 = vmatprep.mubr.f32.mxu0 0.0
    %3671 = vmatmul.mubr.f32.gmra.mxu0 %v1385
    %v3672 = vpop.f32.mrf.mxu0
    %v3673 = vadd.f32 0.0, %v3672
    %v3674 = vpop.f32.mrf.mxu0
    %3675 = vdwg.mxu0
    %3676 = vmatprep.subr.mxu0 0.0
    %3677 = vmatpush1.msra.mxu0 0.0
    %3678 = vmatprep.subr.mxu0 0.0
    %3679 = vmatpush1.msra.mxu0 0.0
    %3680 = vmatprep.subr.mxu0 0.0
    %3681 = vmatpush1.msra.mxu0 0.0
    %3682 = vmatprep.subr.mxu0 0.0
    %3683 = vmatpush1.msra.mxu0 0.0
    %3684 = vmatprep.subr.mxu0 0.0
    %3685 = vmatpush1.msra.mxu0 0.0
    %3686 = vmatprep.subr.mxu0 0.0
    %3687 = vmatpush1.msra.mxu0 0.0
    %3688 = vmatprep.subr.mxu0 0.0
    %3689 = vmatpush1.msra.mxu0 0.0
    %3690 = vmatprep.subr.mxu0 0.0
    %3691 = vmatpush1.msra.mxu0 0.0
    %3692 = vmatprep.subr.mxu0 0.0
    %3693 = vmatpush1.msra.mxu0 0.0
    %3694 = vmatprep.subr.mxu0 0.0
    %3695 = vmatpush1.msra.mxu0 0.0
    %3696 = vmatprep.subr.mxu0 0.0
    %3697 = vmatpush1.msra.mxu0 0.0
    %3698 = vmatprep.subr.mxu0 0.0
    %3699 = vmatpush1.msra.mxu0 0.0
    %3700 = vmatprep.subr.mxu0 0.0
    %3701 = vmatpush1.msra.mxu0 0.0
    %3702 = vmatprep.subr.mxu0 0.0
    %3703 = vmatpush1.msra.mxu0 0.0
    %3704 = vmatprep.subr.mxu0 0.0
    %3705 = vmatpush1.msra.mxu0 %v3600
    %3706 = vmatprep.subr.mxu0 0.0
    %3707 = vmatpush1.msra.mxu0 %v3599
    %3708 = vmatprep.subr.mxu0 0.0
    %3709 = vmatpush2.msra.mxu0 0.0
    %3710 = vmatprep.subr.mxu0 0.0
    %3711 = vmatpush2.msra.mxu0 0.0
    %3712 = vmatprep.subr.mxu0 0.0
    %3713 = vmatpush2.msra.mxu0 0.0
    %3714 = vmatprep.subr.mxu0 0.0
    %3715 = vmatpush2.msra.mxu0 0.0
    %3716 = vmatprep.subr.mxu0 0.0
    %3717 = vmatpush2.msra.mxu0 0.0
    %3718 = vmatprep.subr.mxu0 0.0
    %3719 = vmatpush2.msra.mxu0 0.0
    %3720 = vmatprep.subr.mxu0 0.0
    %3721 = vmatpush2.msra.mxu0 0.0
    %3722 = vmatprep.subr.mxu0 0.0
    %3723 = vmatpush2.msra.mxu0 0.0
    %3724 = vmatprep.subr.mxu0 0.0
    %3725 = vmatpush2.msra.mxu0 0.0
    %3726 = vmatprep.subr.mxu0 0.0
    %3727 = vmatpush2.msra.mxu0 0.0
    %3728 = vmatprep.subr.mxu0 0.0
    %3729 = vmatpush2.msra.mxu0 0.0
    %3730 = vmatprep.subr.mxu0 0.0
    %3731 = vmatpush2.msra.mxu0 0.0
    %3732 = vmatprep.subr.mxu0 0.0
    %3733 = vmatpush2.msra.mxu0 0.0
    %3734 = vmatprep.subr.mxu0 0.0
    %3735 = vmatpush2.msra.mxu0 0.0
    %3736 = vmatprep.subr.mxu0 0.0
    %3737 = vmatpush2.msra.mxu0 0.0
    %3738 = vmatprep.subr.mxu0 0.0
    %3739 = vmatpush2.msra.mxu0 0.0
    %3740 = vmatprep.mubr.f32.mxu0 0.0
    %3741 = vmatmul.mubr.f32.gmra.mxu0 %v1382
    %v3742 = vpop.f32.mrf.mxu0
    %v3743 = vadd.f32 0.0, %v3742
    %v3744 = vpop.f32.mrf.mxu0
    %3745 = vmatprep.mubr.f32.mxu0 0.0
    %3746 = vmatmul.mubr.f32.gmra.mxu0 %v1385
    %v3747 = vpop.f32.mrf.mxu0
    %v3748 = vadd.f32 0.0, %v3747
    %v3749 = vpop.f32.mrf.mxu0
    %3750 = vdwg.mxu0
    %v3751 = vmul.f32 %v2781, %v3597
    %v3752 = vmul.f32 %v2782, %v3598
    %v3753 = vmul.f32 %v2783, %v3599
    %v3754 = vmul.f32 %v2784, %v3600
    %vm3755 = vcmp.eq.f32.partialorder %v3668, 0.0
    %vm3756 = vcmp.eq.f32.partialorder %v3673, 0.0
    %vm3757 = vcmp.eq.f32.partialorder %v3743, 0.0
    %vm3758 = vcmp.eq.f32.partialorder %v3748, 0.0
    %v3759 = vsel %vm3755, %v3751, 0.0
    %v3760 = vsel %vm3756, %v3752, 0.0
    %v3761 = vsel %vm3757, %v3753, 0.0
    %v3762 = vsel %vm3758, %v3754, 0.0
    %v3763 = vadd.f32 %v3759, %v3760
    %v3764 = vrot.slane %v3763, 4
    %v3765 = vadd.f32 %v3763, %v3764
    %v3766 = vrot.slane %v3765, 2
    %v3767 = vadd.f32 %v3765, %v3766
    %v3768 = vrot.slane %v3767, 1
    %v3769 = vadd.f32 %v3767, %v3768
    %v3770 = vadd.f32 %v3761, %v3762
    %v3771 = vrot.slane %v3770, 4
    %v3772 = vadd.f32 %v3770, %v3771
    %v3773 = vrot.slane %v3772, 2
    %v3774 = vadd.f32 %v3772, %v3773
    %v3775 = vrot.slane %v3774, 1
    %v3776 = vadd.f32 %v3774, %v3775
    %vm3777 = vcmp.eq.f32.partialorder %v3668, 1.0
    %vm3778 = vcmp.eq.f32.partialorder %v3673, 1.0
    %vm3779 = vcmp.eq.f32.partialorder %v3743, 1.0
    %vm3780 = vcmp.eq.f32.partialorder %v3748, 1.0
    %v3781 = vsel %vm3777, %v3751, 0.0
    %v3782 = vsel %vm3778, %v3752, 0.0
    %v3783 = vsel %vm3779, %v3753, 0.0
    %v3784 = vsel %vm3780, %v3754, 0.0
    %v3785 = vadd.f32 %v3781, %v3782
    %v3786 = vrot.slane %v3785, 4
    %v3787 = vadd.f32 %v3785, %v3786
    %v3788 = vrot.slane %v3787, 2
    %v3789 = vadd.f32 %v3787, %v3788
    %v3790 = vrot.slane %v3789, 1
    %v3791 = vadd.f32 %v3789, %v3790
    %v3792 = vadd.f32 %v3783, %v3784
    %v3793 = vrot.slane %v3792, 4
    %v3794 = vadd.f32 %v3792, %v3793
    %v3795 = vrot.slane %v3794, 2
    %v3796 = vadd.f32 %v3794, %v3795
    %v3797 = vrot.slane %v3796, 1
    %v3798 = vadd.f32 %v3796, %v3797
    %vm3799 = vcmp.eq.f32.partialorder %v3668, 2.0
    %vm3800 = vcmp.eq.f32.partialorder %v3673, 2.0
    %vm3801 = vcmp.eq.f32.partialorder %v3743, 2.0
    %vm3802 = vcmp.eq.f32.partialorder %v3748, 2.0
    %v3803 = vsel %vm3799, %v3751, 0.0
    %v3804 = vsel %vm3800, %v3752, 0.0
    %v3805 = vsel %vm3801, %v3753, 0.0
    %v3806 = vsel %vm3802, %v3754, 0.0
    %v3807 = vadd.f32 %v3803, %v3804
    %v3808 = vrot.slane %v3807, 4
    %v3809 = vadd.f32 %v3807, %v3808
    %v3810 = vrot.slane %v3809, 2
    %v3811 = vadd.f32 %v3809, %v3810
    %v3812 = vrot.slane %v3811, 1
    %v3813 = vadd.f32 %v3811, %v3812
    %v3814 = vadd.f32 %v3805, %v3806
    %v3815 = vrot.slane %v3814, 4
    %v3816 = vadd.f32 %v3814, %v3815
    %v3817 = vrot.slane %v3816, 2
    %v3818 = vadd.f32 %v3816, %v3817
    %v3819 = vrot.slane %v3818, 1
    %v3820 = vadd.f32 %v3818, %v3819
    %vm3821 = vcmp.eq.f32.partialorder %v3668, 3.0
    %vm3822 = vcmp.eq.f32.partialorder %v3673, 3.0
    %vm3823 = vcmp.eq.f32.partialorder %v3743, 3.0
    %vm3824 = vcmp.eq.f32.partialorder %v3748, 3.0
    %v3825 = vsel %vm3821, %v3751, 0.0
    %v3826 = vsel %vm3822, %v3752, 0.0
    %v3827 = vsel %vm3823, %v3753, 0.0
    %v3828 = vsel %vm3824, %v3754, 0.0
    %v3829 = vadd.f32 %v3825, %v3826
    %v3830 = vrot.slane %v3829, 4
    %v3831 = vadd.f32 %v3829, %v3830
    %v3832 = vrot.slane %v3831, 2
    %v3833 = vadd.f32 %v3831, %v3832
    %v3834 = vrot.slane %v3833, 1
    %v3835 = vadd.f32 %v3833, %v3834
    %v3836 = vadd.f32 %v3827, %v3828
    %v3837 = vrot.slane %v3836, 4
    %v3838 = vadd.f32 %v3836, %v3837
    %v3839 = vrot.slane %v3838, 2
    %v3840 = vadd.f32 %v3838, %v3839
    %v3841 = vrot.slane %v3840, 1
    %v3842 = vadd.f32 %v3840, %v3841
    %vm3843 = vcmp.eq.f32.partialorder %v3668, 4.0
    %vm3844 = vcmp.eq.f32.partialorder %v3673, 4.0
    %vm3845 = vcmp.eq.f32.partialorder %v3743, 4.0
    %vm3846 = vcmp.eq.f32.partialorder %v3748, 4.0
    %v3847 = vsel %vm3843, %v3751, 0.0
    %v3848 = vsel %vm3844, %v3752, 0.0
    %v3849 = vsel %vm3845, %v3753, 0.0
    %v3850 = vsel %vm3846, %v3754, 0.0
    %v3851 = vadd.f32 %v3847, %v3848
    %v3852 = vrot.slane %v3851, 4
    %v3853 = vadd.f32 %v3851, %v3852
    %v3854 = vrot.slane %v3853, 2
    %v3855 = vadd.f32 %v3853, %v3854
    %v3856 = vrot.slane %v3855, 1
    %v3857 = vadd.f32 %v3855, %v3856
    %v3858 = vadd.f32 %v3849, %v3850
    %v3859 = vrot.slane %v3858, 4
    %v3860 = vadd.f32 %v3858, %v3859
    %v3861 = vrot.slane %v3860, 2
    %v3862 = vadd.f32 %v3860, %v3861
    %v3863 = vrot.slane %v3862, 1
    %v3864 = vadd.f32 %v3862, %v3863
    %vm3865 = vcmp.eq.f32.partialorder %v3668, 5.0
    %vm3866 = vcmp.eq.f32.partialorder %v3673, 5.0
    %vm3867 = vcmp.eq.f32.partialorder %v3743, 5.0
    %vm3868 = vcmp.eq.f32.partialorder %v3748, 5.0
    %v3869 = vsel %vm3865, %v3751, 0.0
    %v3870 = vsel %vm3866, %v3752, 0.0
    %v3871 = vsel %vm3867, %v3753, 0.0
    %v3872 = vsel %vm3868, %v3754, 0.0
    %v3873 = vadd.f32 %v3869, %v3870
    %v3874 = vrot.slane %v3873, 4
    %v3875 = vadd.f32 %v3873, %v3874
    %v3876 = vrot.slane %v3875, 2
    %v3877 = vadd.f32 %v3875, %v3876
    %v3878 = vrot.slane %v3877, 1
    %v3879 = vadd.f32 %v3877, %v3878
    %v3880 = vadd.f32 %v3871, %v3872
    %v3881 = vrot.slane %v3880, 4
    %v3882 = vadd.f32 %v3880, %v3881
    %v3883 = vrot.slane %v3882, 2
    %v3884 = vadd.f32 %v3882, %v3883
    %v3885 = vrot.slane %v3884, 1
    %v3886 = vadd.f32 %v3884, %v3885
    %vm3887 = vcmp.eq.f32.partialorder %v3668, 6.0
    %vm3888 = vcmp.eq.f32.partialorder %v3673, 6.0
    %vm3889 = vcmp.eq.f32.partialorder %v3743, 6.0
    %vm3890 = vcmp.eq.f32.partialorder %v3748, 6.0
    %v3891 = vsel %vm3887, %v3751, 0.0
    %v3892 = vsel %vm3888, %v3752, 0.0
    %v3893 = vsel %vm3889, %v3753, 0.0
    %v3894 = vsel %vm3890, %v3754, 0.0
    %v3895 = vadd.f32 %v3891, %v3892
    %v3896 = vrot.slane %v3895, 4
    %v3897 = vadd.f32 %v3895, %v3896
    %v3898 = vrot.slane %v3897, 2
    %v3899 = vadd.f32 %v3897, %v3898
    %v3900 = vrot.slane %v3899, 1
    %v3901 = vadd.f32 %v3899, %v3900
    %v3902 = vadd.f32 %v3893, %v3894
    %v3903 = vrot.slane %v3902, 4
    %v3904 = vadd.f32 %v3902, %v3903
    %v3905 = vrot.slane %v3904, 2
    %v3906 = vadd.f32 %v3904, %v3905
    %v3907 = vrot.slane %v3906, 1
    %v3908 = vadd.f32 %v3906, %v3907
    %vm3909 = vcmp.eq.f32.partialorder %v3668, 7.0
    %vm3910 = vcmp.eq.f32.partialorder %v3673, 7.0
    %vm3911 = vcmp.eq.f32.partialorder %v3743, 7.0
    %vm3912 = vcmp.eq.f32.partialorder %v3748, 7.0
    %v3913 = vsel %vm3909, %v3751, 0.0
    %v3914 = vsel %vm3910, %v3752, 0.0
    %v3915 = vsel %vm3911, %v3753, 0.0
    %v3916 = vsel %vm3912, %v3754, 0.0
    %v3917 = vadd.f32 %v3913, %v3914
    %v3918 = vrot.slane %v3917, 4
    %v3919 = vadd.f32 %v3917, %v3918
    %v3920 = vrot.slane %v3919, 2
    %v3921 = vadd.f32 %v3919, %v3920
    %v3922 = vrot.slane %v3921, 1
    %v3923 = vadd.f32 %v3921, %v3922
    %v3924 = vadd.f32 %v3915, %v3916
    %v3925 = vrot.slane %v3924, 4
    %v3926 = vadd.f32 %v3924, %v3925
    %v3927 = vrot.slane %v3926, 2
    %v3928 = vadd.f32 %v3926, %v3927
    %v3929 = vrot.slane %v3928, 1
    %v3930 = vadd.f32 %v3928, %v3929
    %v3933 = vsel %vm1719, %v3776, %v3769
    %v3937 = vsel %vm1719, %v3798, %v3791
    %v3941 = vsel %vm1719, %v3820, %v3813
    %v3945 = vsel %vm1719, %v3842, %v3835
    %v3949 = vsel %vm1719, %v3864, %v3857
    %v3953 = vsel %vm1719, %v3886, %v3879
    %v3957 = vsel %vm1719, %v3908, %v3901
    %v3961 = vsel %vm1719, %v3930, %v3923
    %s3963 = scalar_lea.vmem %s7, 1024
    %v3964 = vld [vmem:[%s3963] sm:$0xff]
    %v3965 = vld [vmem:[%s3963 + $0x8] sm:$0xff]
    %v3966 = vld [vmem:[%s3963 + $0x10] sm:$0xff]
    %v3967 = vld [vmem:[%s3963 + $0x18] sm:$0xff]
    %v3968 = vld [vmem:[%s3963 + $0x20] sm:$0xff]
    %v3969 = vld [vmem:[%s3963 + $0x28] sm:$0xff]
    %v3970 = vld [vmem:[%s3963 + $0x30] sm:$0xff]
    %v3971 = vld [vmem:[%s3963 + $0x38] sm:$0xff]
    %v3972 = vld [vmem:[%s3963 + $0x40] sm:$0xff]
    %v3973 = vld [vmem:[%s3963 + $0x48] sm:$0xff]
    %v3974 = vld [vmem:[%s3963 + $0x50] sm:$0xff]
    %v3975 = vld [vmem:[%s3963 + $0x58] sm:$0xff]
    %v3976 = vld [vmem:[%s3963 + $0x60] sm:$0xff]
    %v3977 = vld [vmem:[%s3963 + $0x68] sm:$0xff]
    %v3978 = vld [vmem:[%s3963 + $0x70] sm:$0xff]
    %v3979 = vld [vmem:[%s3963 + $0x78] sm:$0xff]
    %v3980 = vld [vmem:[%s3963 + $0x80] sm:$0xff]
    %v3981 = vld [vmem:[%s3963 + $0x88] sm:$0xff]
    %v3982 = vld [vmem:[%s3963 + $0x90] sm:$0xff]
    %v3983 = vld [vmem:[%s3963 + $0x98] sm:$0xff]
    %v3984 = vld [vmem:[%s3963 + $0xa0] sm:$0xff]
    %v3985 = vld [vmem:[%s3963 + $0xa8] sm:$0xff]
    %v3986 = vld [vmem:[%s3963 + $0xb0] sm:$0xff]
    %v3987 = vld [vmem:[%s3963 + $0xb8] sm:$0xff]
    %v3988 = vld [vmem:[%s3963 + $0xc0] sm:$0xff]
    %v3989 = vld [vmem:[%s3963 + $0xc8] sm:$0xff]
    %v3990 = vld [vmem:[%s3963 + $0xd0] sm:$0xff]
    %v3991 = vld [vmem:[%s3963 + $0xd8] sm:$0xff]
    %v3992 = vld [vmem:[%s3963 + $0xe0] sm:$0xff]
    %v3993 = vld [vmem:[%s3963 + $0xe8] sm:$0xff]
    %v3994 = vld [vmem:[%s3963 + $0xf0] sm:$0xff]
    %v3995 = vld [vmem:[%s3963 + $0xf8] sm:$0xff]
    %v3996 = vld [vmem:[%s3963 + $0x100] sm:$0xff]
    %v3997 = vld [vmem:[%s3963 + $0x108] sm:$0xff]
    %v3998 = vld [vmem:[%s3963 + $0x110] sm:$0xff]
    %v3999 = vld [vmem:[%s3963 + $0x118] sm:$0xff]
    %v4000 = vld [vmem:[%s3963 + $0x120] sm:$0xff]
    %v4001 = vld [vmem:[%s3963 + $0x128] sm:$0xff]
    %v4002 = vld [vmem:[%s3963 + $0x130] sm:$0xff]
    %v4003 = vld [vmem:[%s3963 + $0x138] sm:$0xff]
    %v4004 = vld [vmem:[%s3963 + $0x140] sm:$0xff]
    %v4005 = vld [vmem:[%s3963 + $0x148] sm:$0xff]
    %v4006 = vld [vmem:[%s3963 + $0x150] sm:$0xff]
    %v4007 = vld [vmem:[%s3963 + $0x158] sm:$0xff]
    %v4008 = vld [vmem:[%s3963 + $0x160] sm:$0xff]
    %v4009 = vld [vmem:[%s3963 + $0x168] sm:$0xff]
    %v4010 = vld [vmem:[%s3963 + $0x170] sm:$0xff]
    %v4011 = vld [vmem:[%s3963 + $0x178] sm:$0xff]
    %v4012 = vld [vmem:[%s3963 + $0x180] sm:$0xff]
    %v4013 = vld [vmem:[%s3963 + $0x188] sm:$0xff]
    %v4014 = vld [vmem:[%s3963 + $0x190] sm:$0xff]
    %v4015 = vld [vmem:[%s3963 + $0x198] sm:$0xff]
    %v4016 = vld [vmem:[%s3963 + $0x1a0] sm:$0xff]
    %v4017 = vld [vmem:[%s3963 + $0x1a8] sm:$0xff]
    %v4018 = vld [vmem:[%s3963 + $0x1b0] sm:$0xff]
    %v4019 = vld [vmem:[%s3963 + $0x1b8] sm:$0xff]
    %v4020 = vld [vmem:[%s3963 + $0x1c0] sm:$0xff]
    %v4021 = vld [vmem:[%s3963 + $0x1c8] sm:$0xff]
    %v4022 = vld [vmem:[%s3963 + $0x1d0] sm:$0xff]
    %v4023 = vld [vmem:[%s3963 + $0x1d8] sm:$0xff]
    %v4024 = vld [vmem:[%s3963 + $0x1e0] sm:$0xff]
    %v4025 = vld [vmem:[%s3963 + $0x1e8] sm:$0xff]
    %v4026 = vld [vmem:[%s3963 + $0x1f0] sm:$0xff]
    %v4027 = vld [vmem:[%s3963 + $0x1f8] sm:$0xff]
    %v4028 = vld [vmem:[%s3963 + $0x200] sm:$0xff]
    %v4029 = vld [vmem:[%s3963 + $0x208] sm:$0xff]
    %v4030 = vld [vmem:[%s3963 + $0x210] sm:$0xff]
    %v4031 = vld [vmem:[%s3963 + $0x218] sm:$0xff]
    %v4032 = vld [vmem:[%s3963 + $0x220] sm:$0xff]
    %v4033 = vld [vmem:[%s3963 + $0x228] sm:$0xff]
    %v4034 = vld [vmem:[%s3963 + $0x230] sm:$0xff]
    %v4035 = vld [vmem:[%s3963 + $0x238] sm:$0xff]
    %v4036 = vld [vmem:[%s3963 + $0x240] sm:$0xff]
    %v4037 = vld [vmem:[%s3963 + $0x248] sm:$0xff]
    %v4038 = vld [vmem:[%s3963 + $0x250] sm:$0xff]
    %v4039 = vld [vmem:[%s3963 + $0x258] sm:$0xff]
    %v4040 = vld [vmem:[%s3963 + $0x260] sm:$0xff]
    %v4041 = vld [vmem:[%s3963 + $0x268] sm:$0xff]
    %v4042 = vld [vmem:[%s3963 + $0x270] sm:$0xff]
    %v4043 = vld [vmem:[%s3963 + $0x278] sm:$0xff]
    %v4044 = vld [vmem:[%s3963 + $0x280] sm:$0xff]
    %v4045 = vld [vmem:[%s3963 + $0x288] sm:$0xff]
    %v4046 = vld [vmem:[%s3963 + $0x290] sm:$0xff]
    %v4047 = vld [vmem:[%s3963 + $0x298] sm:$0xff]
    %v4048 = vld [vmem:[%s3963 + $0x2a0] sm:$0xff]
    %v4049 = vld [vmem:[%s3963 + $0x2a8] sm:$0xff]
    %v4050 = vld [vmem:[%s3963 + $0x2b0] sm:$0xff]
    %v4051 = vld [vmem:[%s3963 + $0x2b8] sm:$0xff]
    %v4052 = vld [vmem:[%s3963 + $0x2c0] sm:$0xff]
    %v4053 = vld [vmem:[%s3963 + $0x2c8] sm:$0xff]
    %v4054 = vld [vmem:[%s3963 + $0x2d0] sm:$0xff]
    %v4055 = vld [vmem:[%s3963 + $0x2d8] sm:$0xff]
    %v4056 = vld [vmem:[%s3963 + $0x2e0] sm:$0xff]
    %v4057 = vld [vmem:[%s3963 + $0x2e8] sm:$0xff]
    %v4058 = vld [vmem:[%s3963 + $0x2f0] sm:$0xff]
    %v4059 = vld [vmem:[%s3963 + $0x2f8] sm:$0xff]
    %v4060 = vld [vmem:[%s3963 + $0x300] sm:$0xff]
    %v4061 = vld [vmem:[%s3963 + $0x308] sm:$0xff]
    %v4062 = vld [vmem:[%s3963 + $0x310] sm:$0xff]
    %v4063 = vld [vmem:[%s3963 + $0x318] sm:$0xff]
    %v4064 = vld [vmem:[%s3963 + $0x320] sm:$0xff]
    %v4065 = vld [vmem:[%s3963 + $0x328] sm:$0xff]
    %v4066 = vld [vmem:[%s3963 + $0x330] sm:$0xff]
    %v4067 = vld [vmem:[%s3963 + $0x338] sm:$0xff]
    %v4068 = vld [vmem:[%s3963 + $0x340] sm:$0xff]
    %v4069 = vld [vmem:[%s3963 + $0x348] sm:$0xff]
    %v4070 = vld [vmem:[%s3963 + $0x350] sm:$0xff]
    %v4071 = vld [vmem:[%s3963 + $0x358] sm:$0xff]
    %v4072 = vld [vmem:[%s3963 + $0x360] sm:$0xff]
    %v4073 = vld [vmem:[%s3963 + $0x368] sm:$0xff]
    %v4074 = vld [vmem:[%s3963 + $0x370] sm:$0xff]
    %v4075 = vld [vmem:[%s3963 + $0x378] sm:$0xff]
    %v4076 = vld [vmem:[%s3963 + $0x380] sm:$0xff]
    %v4077 = vld [vmem:[%s3963 + $0x388] sm:$0xff]
    %v4078 = vld [vmem:[%s3963 + $0x390] sm:$0xff]
    %v4079 = vld [vmem:[%s3963 + $0x398] sm:$0xff]
    %v4080 = vld [vmem:[%s3963 + $0x3a0] sm:$0xff]
    %v4081 = vld [vmem:[%s3963 + $0x3a8] sm:$0xff]
    %v4082 = vld [vmem:[%s3963 + $0x3b0] sm:$0xff]
    %v4083 = vld [vmem:[%s3963 + $0x3b8] sm:$0xff]
    %v4084 = vld [vmem:[%s3963 + $0x3c0] sm:$0xff]
    %v4085 = vld [vmem:[%s3963 + $0x3c8] sm:$0xff]
    %v4086 = vld [vmem:[%s3963 + $0x3d0] sm:$0xff]
    %v4087 = vld [vmem:[%s3963 + $0x3d8] sm:$0xff]
    %v4088 = vld [vmem:[%s3963 + $0x3e0] sm:$0xff]
    %v4089 = vld [vmem:[%s3963 + $0x3e8] sm:$0xff]
    %v4090 = vld [vmem:[%s3963 + $0x3f0] sm:$0xff]
    %v4091 = vld [vmem:[%s3963 + $0x3f8] sm:$0xff]
    %s4092 = scalar_lea.vmem %s8, 1
    %v4093 = vld [vmem:[%s4092] sm:$0x1]
    %v4095 = vlaneseq
    %v4096 = vshrl.u32 %v4095, 7
    %v4097 = vsub.s32 0, %v4096
    %v4098 = vrot.slane %v4093, %v4097
    %4100 = vmatprep.subr.mxu0 0.0
    %4101 = vmatpush1.msra.mxu0 %v3979
    %4102 = vmatprep.subr.mxu0 0.0
    %4103 = vmatpush1.msra.mxu0 %v3978
    %4104 = vmatprep.subr.mxu0 0.0
    %4105 = vmatpush1.msra.mxu0 %v3977
    %4106 = vmatprep.subr.mxu0 0.0
    %4107 = vmatpush1.msra.mxu0 %v3976
    %4108 = vmatprep.subr.mxu0 0.0
    %4109 = vmatpush1.msra.mxu0 %v3975
    %4110 = vmatprep.subr.mxu0 0.0
    %4111 = vmatpush1.msra.mxu0 %v3974
    %4112 = vmatprep.subr.mxu0 0.0
    %4113 = vmatpush1.msra.mxu0 %v3973
    %4114 = vmatprep.subr.mxu0 0.0
    %4115 = vmatpush1.msra.mxu0 %v3972
    %4116 = vmatprep.subr.mxu0 0.0
    %4117 = vmatpush1.msra.mxu0 %v3971
    %4118 = vmatprep.subr.mxu0 0.0
    %4119 = vmatpush1.msra.mxu0 %v3970
    %4120 = vmatprep.subr.mxu0 0.0
    %4121 = vmatpush1.msra.mxu0 %v3969
    %4122 = vmatprep.subr.mxu0 0.0
    %4123 = vmatpush1.msra.mxu0 %v3968
    %4124 = vmatprep.subr.mxu0 0.0
    %4125 = vmatpush1.msra.mxu0 %v3967
    %4126 = vmatprep.subr.mxu0 0.0
    %4127 = vmatpush1.msra.mxu0 %v3966
    %4128 = vmatprep.subr.mxu0 0.0
    %4129 = vmatpush1.msra.mxu0 %v3965
    %4130 = vmatprep.subr.mxu0 0.0
    %4131 = vmatpush1.msra.mxu0 %v3964
    %4132 = vmatprep.subr.mxu0 0.0
    %4133 = vmatpush2.msra.mxu0 %v3995
    %4134 = vmatprep.subr.mxu0 0.0
    %4135 = vmatpush2.msra.mxu0 %v3994
    %4136 = vmatprep.subr.mxu0 0.0
    %4137 = vmatpush2.msra.mxu0 %v3993
    %4138 = vmatprep.subr.mxu0 0.0
    %4139 = vmatpush2.msra.mxu0 %v3992
    %4140 = vmatprep.subr.mxu0 0.0
    %4141 = vmatpush2.msra.mxu0 %v3991
    %4142 = vmatprep.subr.mxu0 0.0
    %4143 = vmatpush2.msra.mxu0 %v3990
    %4144 = vmatprep.subr.mxu0 0.0
    %4145 = vmatpush2.msra.mxu0 %v3989
    %4146 = vmatprep.subr.mxu0 0.0
    %4147 = vmatpush2.msra.mxu0 %v3988
    %4148 = vmatprep.subr.mxu0 0.0
    %4149 = vmatpush2.msra.mxu0 %v3987
    %4150 = vmatprep.subr.mxu0 0.0
    %4151 = vmatpush2.msra.mxu0 %v3986
    %4152 = vmatprep.subr.mxu0 0.0
    %4153 = vmatpush2.msra.mxu0 %v3985
    %4154 = vmatprep.subr.mxu0 0.0
    %4155 = vmatpush2.msra.mxu0 %v3984
    %4156 = vmatprep.subr.mxu0 0.0
    %4157 = vmatpush2.msra.mxu0 %v3983
    %4158 = vmatprep.subr.mxu0 0.0
    %4159 = vmatpush2.msra.mxu0 %v3982
    %4160 = vmatprep.subr.mxu0 0.0
    %4161 = vmatpush2.msra.mxu0 %v3981
    %4162 = vmatprep.subr.mxu0 0.0
    %4163 = vmatpush2.msra.mxu0 %v3980
    %4164 = vmatprep.mubr.f32.mxu0 %v3937
    %4165 = vmatmul.mubr.f32.gmra.mxu0 %v3933
    %v4166 = vpop.f32.mrf.mxu0
    %v4167 = vadd.f32 %v4098, %v4166
    %v4168 = vpop.f32.mrf.mxu0
    %4169 = vdwg.mxu0
    %4170 = vmatprep.subr.mxu0 0.0
    %4171 = vmatpush1.msra.mxu0 %v4011
    %4172 = vmatprep.subr.mxu0 0.0
    %4173 = vmatpush1.msra.mxu0 %v4010
    %4174 = vmatprep.subr.mxu0 0.0
    %4175 = vmatpush1.msra.mxu0 %v4009
    %4176 = vmatprep.subr.mxu0 0.0
    %4177 = vmatpush1.msra.mxu0 %v4008
    %4178 = vmatprep.subr.mxu0 0.0
    %4179 = vmatpush1.msra.mxu0 %v4007
    %4180 = vmatprep.subr.mxu0 0.0
    %4181 = vmatpush1.msra.mxu0 %v4006
    %4182 = vmatprep.subr.mxu0 0.0
    %4183 = vmatpush1.msra.mxu0 %v4005
    %4184 = vmatprep.subr.mxu0 0.0
    %4185 = vmatpush1.msra.mxu0 %v4004
    %4186 = vmatprep.subr.mxu0 0.0
    %4187 = vmatpush1.msra.mxu0 %v4003
    %4188 = vmatprep.subr.mxu0 0.0
    %4189 = vmatpush1.msra.mxu0 %v4002
    %4190 = vmatprep.subr.mxu0 0.0
    %4191 = vmatpush1.msra.mxu0 %v4001
    %4192 = vmatprep.subr.mxu0 0.0
    %4193 = vmatpush1.msra.mxu0 %v4000
    %4194 = vmatprep.subr.mxu0 0.0
    %4195 = vmatpush1.msra.mxu0 %v3999
    %4196 = vmatprep.subr.mxu0 0.0
    %4197 = vmatpush1.msra.mxu0 %v3998
    %4198 = vmatprep.subr.mxu0 0.0
    %4199 = vmatpush1.msra.mxu0 %v3997
    %4200 = vmatprep.subr.mxu0 0.0
    %4201 = vmatpush1.msra.mxu0 %v3996
    %4202 = vmatprep.subr.mxu0 0.0
    %4203 = vmatpush2.msra.mxu0 %v4027
    %4204 = vmatprep.subr.mxu0 0.0
    %4205 = vmatpush2.msra.mxu0 %v4026
    %4206 = vmatprep.subr.mxu0 0.0
    %4207 = vmatpush2.msra.mxu0 %v4025
    %4208 = vmatprep.subr.mxu0 0.0
    %4209 = vmatpush2.msra.mxu0 %v4024
    %4210 = vmatprep.subr.mxu0 0.0
    %4211 = vmatpush2.msra.mxu0 %v4023
    %4212 = vmatprep.subr.mxu0 0.0
    %4213 = vmatpush2.msra.mxu0 %v4022
    %4214 = vmatprep.subr.mxu0 0.0
    %4215 = vmatpush2.msra.mxu0 %v4021
    %4216 = vmatprep.subr.mxu0 0.0
    %4217 = vmatpush2.msra.mxu0 %v4020
    %4218 = vmatprep.subr.mxu0 0.0
    %4219 = vmatpush2.msra.mxu0 %v4019
    %4220 = vmatprep.subr.mxu0 0.0
    %4221 = vmatpush2.msra.mxu0 %v4018
    %4222 = vmatprep.subr.mxu0 0.0
    %4223 = vmatpush2.msra.mxu0 %v4017
    %4224 = vmatprep.subr.mxu0 0.0
    %4225 = vmatpush2.msra.mxu0 %v4016
    %4226 = vmatprep.subr.mxu0 0.0
    %4227 = vmatpush2.msra.mxu0 %v4015
    %4228 = vmatprep.subr.mxu0 0.0
    %4229 = vmatpush2.msra.mxu0 %v4014
    %4230 = vmatprep.subr.mxu0 0.0
    %4231 = vmatpush2.msra.mxu0 %v4013
    %4232 = vmatprep.subr.mxu0 0.0
    %4233 = vmatpush2.msra.mxu0 %v4012
    %4234 = vmatprep.mubr.f32.mxu0 %v3945
    %4235 = vmatmul.mubr.f32.gmra.mxu0 %v3941
    %v4236 = vpop.f32.mrf.mxu0
    %v4237 = vadd.f32 %v4167, %v4236
    %v4238 = vpop.f32.mrf.mxu0
    %4239 = vdwg.mxu0
    %4240 = vmatprep.subr.mxu0 0.0
    %4241 = vmatpush1.msra.mxu0 %v4043
    %4242 = vmatprep.subr.mxu0 0.0
    %4243 = vmatpush1.msra.mxu0 %v4042
    %4244 = vmatprep.subr.mxu0 0.0
    %4245 = vmatpush1.msra.mxu0 %v4041
    %4246 = vmatprep.subr.mxu0 0.0
    %4247 = vmatpush1.msra.mxu0 %v4040
    %4248 = vmatprep.subr.mxu0 0.0
    %4249 = vmatpush1.msra.mxu0 %v4039
    %4250 = vmatprep.subr.mxu0 0.0
    %4251 = vmatpush1.msra.mxu0 %v4038
    %4252 = vmatprep.subr.mxu0 0.0
    %4253 = vmatpush1.msra.mxu0 %v4037
    %4254 = vmatprep.subr.mxu0 0.0
    %4255 = vmatpush1.msra.mxu0 %v4036
    %4256 = vmatprep.subr.mxu0 0.0
    %4257 = vmatpush1.msra.mxu0 %v4035
    %4258 = vmatprep.subr.mxu0 0.0
    %4259 = vmatpush1.msra.mxu0 %v4034
    %4260 = vmatprep.subr.mxu0 0.0
    %4261 = vmatpush1.msra.mxu0 %v4033
    %4262 = vmatprep.subr.mxu0 0.0
    %4263 = vmatpush1.msra.mxu0 %v4032
    %4264 = vmatprep.subr.mxu0 0.0
    %4265 = vmatpush1.msra.mxu0 %v4031
    %4266 = vmatprep.subr.mxu0 0.0
    %4267 = vmatpush1.msra.mxu0 %v4030
    %4268 = vmatprep.subr.mxu0 0.0
    %4269 = vmatpush1.msra.mxu0 %v4029
    %4270 = vmatprep.subr.mxu0 0.0
    %4271 = vmatpush1.msra.mxu0 %v4028
    %4272 = vmatprep.subr.mxu0 0.0
    %4273 = vmatpush2.msra.mxu0 %v4059
    %4274 = vmatprep.subr.mxu0 0.0
    %4275 = vmatpush2.msra.mxu0 %v4058
    %4276 = vmatprep.subr.mxu0 0.0
    %4277 = vmatpush2.msra.mxu0 %v4057
    %4278 = vmatprep.subr.mxu0 0.0
    %4279 = vmatpush2.msra.mxu0 %v4056
    %4280 = vmatprep.subr.mxu0 0.0
    %4281 = vmatpush2.msra.mxu0 %v4055
    %4282 = vmatprep.subr.mxu0 0.0
    %4283 = vmatpush2.msra.mxu0 %v4054
    %4284 = vmatprep.subr.mxu0 0.0
    %4285 = vmatpush2.msra.mxu0 %v4053
    %4286 = vmatprep.subr.mxu0 0.0
    %4287 = vmatpush2.msra.mxu0 %v4052
    %4288 = vmatprep.subr.mxu0 0.0
    %4289 = vmatpush2.msra.mxu0 %v4051
    %4290 = vmatprep.subr.mxu0 0.0
    %4291 = vmatpush2.msra.mxu0 %v4050
    %4292 = vmatprep.subr.mxu0 0.0
    %4293 = vmatpush2.msra.mxu0 %v4049
    %4294 = vmatprep.subr.mxu0 0.0
    %4295 = vmatpush2.msra.mxu0 %v4048
    %4296 = vmatprep.subr.mxu0 0.0
    %4297 = vmatpush2.msra.mxu0 %v4047
    %4298 = vmatprep.subr.mxu0 0.0
    %4299 = vmatpush2.msra.mxu0 %v4046
    %4300 = vmatprep.subr.mxu0 0.0
    %4301 = vmatpush2.msra.mxu0 %v4045
    %4302 = vmatprep.subr.mxu0 0.0
    %4303 = vmatpush2.msra.mxu0 %v4044
    %4304 = vmatprep.mubr.f32.mxu0 %v3953
    %4305 = vmatmul.mubr.f32.gmra.mxu0 %v3949
    %v4306 = vpop.f32.mrf.mxu0
    %v4307 = vadd.f32 %v4237, %v4306
    %v4308 = vpop.f32.mrf.mxu0
    %4309 = vdwg.mxu0
    %4310 = vmatprep.subr.mxu0 0.0
    %4311 = vmatpush1.msra.mxu0 %v4075
    %4312 = vmatprep.subr.mxu0 0.0
    %4313 = vmatpush1.msra.mxu0 %v4074
    %4314 = vmatprep.subr.mxu0 0.0
    %4315 = vmatpush1.msra.mxu0 %v4073
    %4316 = vmatprep.subr.mxu0 0.0
    %4317 = vmatpush1.msra.mxu0 %v4072
    %4318 = vmatprep.subr.mxu0 0.0
    %4319 = vmatpush1.msra.mxu0 %v4071
    %4320 = vmatprep.subr.mxu0 0.0
    %4321 = vmatpush1.msra.mxu0 %v4070
    %4322 = vmatprep.subr.mxu0 0.0
    %4323 = vmatpush1.msra.mxu0 %v4069
    %4324 = vmatprep.subr.mxu0 0.0
    %4325 = vmatpush1.msra.mxu0 %v4068
    %4326 = vmatprep.subr.mxu0 0.0
    %4327 = vmatpush1.msra.mxu0 %v4067
    %4328 = vmatprep.subr.mxu0 0.0
    %4329 = vmatpush1.msra.mxu0 %v4066
    %4330 = vmatprep.subr.mxu0 0.0
    %4331 = vmatpush1.msra.mxu0 %v4065
    %4332 = vmatprep.subr.mxu0 0.0
    %4333 = vmatpush1.msra.mxu0 %v4064
    %4334 = vmatprep.subr.mxu0 0.0
    %4335 = vmatpush1.msra.mxu0 %v4063
    %4336 = vmatprep.subr.mxu0 0.0
    %4337 = vmatpush1.msra.mxu0 %v4062
    %4338 = vmatprep.subr.mxu0 0.0
    %4339 = vmatpush1.msra.mxu0 %v4061
    %4340 = vmatprep.subr.mxu0 0.0
    %4341 = vmatpush1.msra.mxu0 %v4060
    %4342 = vmatprep.subr.mxu0 0.0
    %4343 = vmatpush2.msra.mxu0 %v4091
    %4344 = vmatprep.subr.mxu0 0.0
    %4345 = vmatpush2.msra.mxu0 %v4090
    %4346 = vmatprep.subr.mxu0 0.0
    %4347 = vmatpush2.msra.mxu0 %v4089
    %4348 = vmatprep.subr.mxu0 0.0
    %4349 = vmatpush2.msra.mxu0 %v4088
    %4350 = vmatprep.subr.mxu0 0.0
    %4351 = vmatpush2.msra.mxu0 %v4087
    %4352 = vmatprep.subr.mxu0 0.0
    %4353 = vmatpush2.msra.mxu0 %v4086
    %4354 = vmatprep.subr.mxu0 0.0
    %4355 = vmatpush2.msra.mxu0 %v4085
    %4356 = vmatprep.subr.mxu0 0.0
    %4357 = vmatpush2.msra.mxu0 %v4084
    %4358 = vmatprep.subr.mxu0 0.0
    %4359 = vmatpush2.msra.mxu0 %v4083
    %4360 = vmatprep.subr.mxu0 0.0
    %4361 = vmatpush2.msra.mxu0 %v4082
    %4362 = vmatprep.subr.mxu0 0.0
    %4363 = vmatpush2.msra.mxu0 %v4081
    %4364 = vmatprep.subr.mxu0 0.0
    %4365 = vmatpush2.msra.mxu0 %v4080
    %4366 = vmatprep.subr.mxu0 0.0
    %4367 = vmatpush2.msra.mxu0 %v4079
    %4368 = vmatprep.subr.mxu0 0.0
    %4369 = vmatpush2.msra.mxu0 %v4078
    %4370 = vmatprep.subr.mxu0 0.0
    %4371 = vmatpush2.msra.mxu0 %v4077
    %4372 = vmatprep.subr.mxu0 0.0
    %4373 = vmatpush2.msra.mxu0 %v4076
    %4374 = vmatprep.mubr.f32.mxu0 %v3961
    %4375 = vmatmul.mubr.f32.gmra.mxu0 %v3957
    %v4376 = vpop.f32.mrf.mxu0
    %v4377 = vadd.f32 %v4307, %v4376
    %v4378 = vpop.f32.mrf.mxu0
    %4379 = vdwg.mxu0
    %vm4380 = vcmp.gt.f32.partialorder %v4377, 0.0
    %v4381 = vmin.f32 %v4377, 0.0
    %v4382 = vmul.f32 %v4381, 1.442695
    %v4383 = vpow.pop %v4382
    %v4384 = vsub.f32 %v4383, 1.0
    %v4385 = vmul.f32 %v4384, 1.6732632
    %v4386 = vsel %vm4380, %v4377, %v4385
    %v4387 = vmul.f32 %v4386, 1.050701
    %s4388 = scalar_lea.vmem %s9, 64
    %v4389 = vld [vmem:[%s4388] sm:$0xff]
    %v4390 = vld [vmem:[%s4388 + $0x8] sm:$0xff]
    %v4391 = vld [vmem:[%s4388 + $0x10] sm:$0xff]
    %v4392 = vld [vmem:[%s4388 + $0x18] sm:$0xff]
    %v4393 = vld [vmem:[%s4388 + $0x20] sm:$0xff]
    %v4394 = vld [vmem:[%s4388 + $0x28] sm:$0xff]
    %v4395 = vld [vmem:[%s4388 + $0x30] sm:$0xff]
    %v4396 = vld [vmem:[%s4388 + $0x38] sm:$0xff]
    %s4397 = scalar_lea.vmem %s10, 1
    %v4398 = vld [vmem:[%s4397] sm:$0x1]
    %v4400 = vlaneseq
    %v4401 = vshrl.u32 %v4400, 7
    %v4402 = vsub.s32 0, %v4401
    %v4403 = vrot.slane %v4398, %v4402
    %v4406 = vsel %vm274, %v4387, 0
    %4408 = vmatprep.subr.mxu0 0.0
    %4409 = vmatpush1.msra.mxu0 0.0
    %4410 = vmatprep.subr.mxu0 0.0
    %4411 = vmatpush1.msra.mxu0 0.0
    %4412 = vmatprep.subr.mxu0 0.0
    %4413 = vmatpush1.msra.mxu0 0.0
    %4414 = vmatprep.subr.mxu0 0.0
    %4415 = vmatpush1.msra.mxu0 0.0
    %4416 = vmatprep.subr.mxu0 0.0
    %4417 = vmatpush1.msra.mxu0 0.0
    %4418 = vmatprep.subr.mxu0 0.0
    %4419 = vmatpush1.msra.mxu0 0.0
    %4420 = vmatprep.subr.mxu0 0.0
    %4421 = vmatpush1.msra.mxu0 0.0
    %4422 = vmatprep.subr.mxu0 0.0
    %4423 = vmatpush1.msra.mxu0 0.0
    %4424 = vmatprep.subr.mxu0 0.0
    %4425 = vmatpush1.msra.mxu0 %v4396
    %4426 = vmatprep.subr.mxu0 0.0
    %4427 = vmatpush1.msra.mxu0 %v4395
    %4428 = vmatprep.subr.mxu0 0.0
    %4429 = vmatpush1.msra.mxu0 %v4394
    %4430 = vmatprep.subr.mxu0 0.0
    %4431 = vmatpush1.msra.mxu0 %v4393
    %4432 = vmatprep.subr.mxu0 0.0
    %4433 = vmatpush1.msra.mxu0 %v4392
    %4434 = vmatprep.subr.mxu0 0.0
    %4435 = vmatpush1.msra.mxu0 %v4391
    %4436 = vmatprep.subr.mxu0 0.0
    %4437 = vmatpush1.msra.mxu0 %v4390
    %4438 = vmatprep.subr.mxu0 0.0
    %4439 = vmatpush1.msra.mxu0 %v4389
    %4440 = vmatprep.subr.mxu0 0.0
    %4441 = vmatpush2.msra.mxu0 0.0
    %4442 = vmatprep.subr.mxu0 0.0
    %4443 = vmatpush2.msra.mxu0 0.0
    %4444 = vmatprep.subr.mxu0 0.0
    %4445 = vmatpush2.msra.mxu0 0.0
    %4446 = vmatprep.subr.mxu0 0.0
    %4447 = vmatpush2.msra.mxu0 0.0
    %4448 = vmatprep.subr.mxu0 0.0
    %4449 = vmatpush2.msra.mxu0 0.0
    %4450 = vmatprep.subr.mxu0 0.0
    %4451 = vmatpush2.msra.mxu0 0.0
    %4452 = vmatprep.subr.mxu0 0.0
    %4453 = vmatpush2.msra.mxu0 0.0
    %4454 = vmatprep.subr.mxu0 0.0
    %4455 = vmatpush2.msra.mxu0 0.0
    %4456 = vmatprep.subr.mxu0 0.0
    %4457 = vmatpush2.msra.mxu0 0.0
    %4458 = vmatprep.subr.mxu0 0.0
    %4459 = vmatpush2.msra.mxu0 0.0
    %4460 = vmatprep.subr.mxu0 0.0
    %4461 = vmatpush2.msra.mxu0 0.0
    %4462 = vmatprep.subr.mxu0 0.0
    %4463 = vmatpush2.msra.mxu0 0.0
    %4464 = vmatprep.subr.mxu0 0.0
    %4465 = vmatpush2.msra.mxu0 0.0
    %4466 = vmatprep.subr.mxu0 0.0
    %4467 = vmatpush2.msra.mxu0 0.0
    %4468 = vmatprep.subr.mxu0 0.0
    %4469 = vmatpush2.msra.mxu0 0.0
    %4470 = vmatprep.subr.mxu0 0.0
    %4471 = vmatpush2.msra.mxu0 0.0
    %4472 = vmatprep.mubr.f32.mxu0 0.0
    %4473 = vmatmul.mubr.f32.gmra.mxu0 %v4406
    %v4474 = vpop.f32.mrf.mxu0
    %v4475 = vadd.f32 %v4403, %v4474
    %v4476 = vpop.f32.mrf.mxu0
    %4477 = vdwg.mxu0
    %vm4478 = vcmp.gt.f32.partialorder %v4475, 0.0
    %v4479 = vmin.f32 %v4475, 0.0
    %v4480 = vmul.f32 %v4479, 1.442695
    %v4481 = vpow.pop %v4480
    %v4482 = vsub.f32 %v4481, 1.0
    %v4483 = vmul.f32 %v4482, 1.6732632
    %v4484 = vsel %vm4478, %v4475, %v4483
    %v4485 = vmul.f32 %v4484, 1.050701
    %s4486 = scalar_lea.vmem %s11, 32
    %v4487 = vld [vmem:[%s4486] sm:$0xff]
    %v4488 = vld [vmem:[%s4486 + $0x8] sm:$0xff]
    %v4489 = vld [vmem:[%s4486 + $0x10] sm:$0xff]
    %v4490 = vld [vmem:[%s4486 + $0x18] sm:$0xff]
    %s4491 = scalar_lea.vmem %s12, 1
    %v4492 = vld [vmem:[%s4491] sm:$0x1]
    %v4494 = vlaneseq
    %v4495 = vshrl.u32 %v4494, 7
    %v4496 = vsub.s32 0, %v4495
    %v4497 = vrot.slane %v4492, %v4496
    %v4500 = vsel %vm2280, %v4485, 0
    %4502 = vmatprep.subr.mxu0 0.0
    %4503 = vmatpush1.msra.mxu0 0.0
    %4504 = vmatprep.subr.mxu0 0.0
    %4505 = vmatpush1.msra.mxu0 0.0
    %4506 = vmatprep.subr.mxu0 0.0
    %4507 = vmatpush1.msra.mxu0 0.0
    %4508 = vmatprep.subr.mxu0 0.0
    %4509 = vmatpush1.msra.mxu0 0.0
    %4510 = vmatprep.subr.mxu0 0.0
    %4511 = vmatpush1.msra.mxu0 0.0
    %4512 = vmatprep.subr.mxu0 0.0
    %4513 = vmatpush1.msra.mxu0 0.0
    %4514 = vmatprep.subr.mxu0 0.0
    %4515 = vmatpush1.msra.mxu0 0.0
    %4516 = vmatprep.subr.mxu0 0.0
    %4517 = vmatpush1.msra.mxu0 0.0
    %4518 = vmatprep.subr.mxu0 0.0
    %4519 = vmatpush1.msra.mxu0 0.0
    %4520 = vmatprep.subr.mxu0 0.0
    %4521 = vmatpush1.msra.mxu0 0.0
    %4522 = vmatprep.subr.mxu0 0.0
    %4523 = vmatpush1.msra.mxu0 0.0
    %4524 = vmatprep.subr.mxu0 0.0
    %4525 = vmatpush1.msra.mxu0 0.0
    %4526 = vmatprep.subr.mxu0 0.0
    %4527 = vmatpush1.msra.mxu0 %v4490
    %4528 = vmatprep.subr.mxu0 0.0
    %4529 = vmatpush1.msra.mxu0 %v4489
    %4530 = vmatprep.subr.mxu0 0.0
    %4531 = vmatpush1.msra.mxu0 %v4488
    %4532 = vmatprep.subr.mxu0 0.0
    %4533 = vmatpush1.msra.mxu0 %v4487
    %4534 = vmatprep.subr.mxu0 0.0
    %4535 = vmatpush2.msra.mxu0 0.0
    %4536 = vmatprep.subr.mxu0 0.0
    %4537 = vmatpush2.msra.mxu0 0.0
    %4538 = vmatprep.subr.mxu0 0.0
    %4539 = vmatpush2.msra.mxu0 0.0
    %4540 = vmatprep.subr.mxu0 0.0
    %4541 = vmatpush2.msra.mxu0 0.0
    %4542 = vmatprep.subr.mxu0 0.0
    %4543 = vmatpush2.msra.mxu0 0.0
    %4544 = vmatprep.subr.mxu0 0.0
    %4545 = vmatpush2.msra.mxu0 0.0
    %4546 = vmatprep.subr.mxu0 0.0
    %4547 = vmatpush2.msra.mxu0 0.0
    %4548 = vmatprep.subr.mxu0 0.0
    %4549 = vmatpush2.msra.mxu0 0.0
    %4550 = vmatprep.subr.mxu0 0.0
    %4551 = vmatpush2.msra.mxu0 0.0
    %4552 = vmatprep.subr.mxu0 0.0
    %4553 = vmatpush2.msra.mxu0 0.0
    %4554 = vmatprep.subr.mxu0 0.0
    %4555 = vmatpush2.msra.mxu0 0.0
    %4556 = vmatprep.subr.mxu0 0.0
    %4557 = vmatpush2.msra.mxu0 0.0
    %4558 = vmatprep.subr.mxu0 0.0
    %4559 = vmatpush2.msra.mxu0 0.0
    %4560 = vmatprep.subr.mxu0 0.0
    %4561 = vmatpush2.msra.mxu0 0.0
    %4562 = vmatprep.subr.mxu0 0.0
    %4563 = vmatpush2.msra.mxu0 0.0
    %4564 = vmatprep.subr.mxu0 0.0
    %4565 = vmatpush2.msra.mxu0 0.0
    %4566 = vmatprep.mubr.f32.mxu0 0.0
    %4567 = vmatmul.mubr.f32.gmra.mxu0 %v4500
    %v4568 = vpop.f32.mrf.mxu0
    %v4569 = vadd.f32 %v4497, %v4568
    %v4570 = vpop.f32.mrf.mxu0
    %4571 = vdwg.mxu0
    %v4574 = vunpack.c.l.s4 1966171168
    %v4575 = vunpack.c.0.s8 %v4574
    %v4576 = vlaneseq
    %v4577 = vshrl.u32 %v4576, 7
    %v4578 = vsub.s32 %v4575, %v4577
    %v4579 = vrot.slane %v4569, %v4578
    %v4580 = vcombine.high %v4579, %v4579
    %v4582 = vunpack.c.l.s4 1966171168
    %v4583 = vunpack.c.0.s8 %v4582
    %v4584 = vlaneseq
    %v4585 = vshrl.u32 %v4584, 7
    %v4586 = vsub.s32 %v4583, %v4585
    %v4587 = vrot.slane %v4579, %v4586
    %v4589 = vunpack.c.l.s4 1966171168
    %v4590 = vunpack.c.0.s8 %v4589
    %v4591 = vlaneseq
    %v4592 = vshrl.u32 %v4591, 7
    %v4593 = vsub.s32 %v4590, %v4592
    %v4594 = vrot.slane %v4580, %v4593
    %4595 = vset.pattern.permute.xlu0 0
    %4596 = vperm.xlu0 %4595, %v2493
    %v4597 = vpop.permute.xlu0 %4596
    %4599 = vset.pattern.permute.xlu0 0
    %4600 = vperm.xlu0 %4599, %v2494
    %v4601 = vpop.permute.xlu0 %4600
    %4603 = vset.pattern.permute.xlu0 0
    %4604 = vperm.xlu0 %4603, %v2495
    %v4605 = vpop.permute.xlu0 %4604
    %4607 = vset.pattern.permute.xlu0 0
    %4608 = vperm.xlu0 %4607, %v2496
    %v4609 = vpop.permute.xlu0 %4608
    %v4611 = vlaneseq
    %v4612 = vshrl.u32 %v4611, 7
    %v4613 = vsub.s32 0, %v4612
    %v4614 = vrot.slane %v4587, %v4613
    %v4615 = vlaneseq
    %v4616 = vshrl.u32 %v4615, 7
    %v4617 = vsub.s32 0, %v4616
    %v4618 = vrot.slane %v4594, %v4617
    %v4621 = vmul.f32 %v4597, %v4614
    %v4622 = vmul.f32 %v4601, %v4614
    %v4623 = vmul.f32 %v4605, %v4618
    %v4624 = vmul.f32 %v4609, %v4618
    %4625 = vset.pattern.permute.xlu0 1
    %4626 = vperm.xlu0 %4625, %v2493
    %v4627 = vpop.permute.xlu0 %4626
    %4629 = vset.pattern.permute.xlu0 1
    %4630 = vperm.xlu0 %4629, %v2494
    %v4631 = vpop.permute.xlu0 %4630
    %4633 = vset.pattern.permute.xlu0 1
    %4634 = vperm.xlu0 %4633, %v2495
    %v4635 = vpop.permute.xlu0 %4634
    %4637 = vset.pattern.permute.xlu0 1
    %4638 = vperm.xlu0 %4637, %v2496
    %v4639 = vpop.permute.xlu0 %4638
    %v4641 = vmul.f32 %v4627, %v4614
    %v4642 = vmul.f32 %v4631, %v4614
    %v4643 = vmul.f32 %v4635, %v4618
    %v4644 = vmul.f32 %v4639, %v4618
    %4649 = vrot.lane.b32.xlu0 %v4641, 125
    %v4650 = vpop.permute.xlu0 %4649
    %4651 = vrot.lane.b32.xlu0 %v4642, 125
    %v4652 = vpop.permute.xlu0 %4651
    %4653 = vrot.lane.b32.xlu0 %v4643, 125
    %v4654 = vpop.permute.xlu0 %4653
    %4655 = vrot.lane.b32.xlu0 %v4644, 125
    %v4656 = vpop.permute.xlu0 %4655
    %v4661 = vadd.f32 %v4621, %v4650
    %v4662 = vadd.f32 %v4622, %v4652
    %v4663 = vadd.f32 %v4623, %v4654
    %v4664 = vadd.f32 %v4624, %v4656
    %4665 = vset.pattern.permute.xlu0 2
    %4666 = vperm.xlu0 %4665, %v2493
    %v4667 = vpop.permute.xlu0 %4666
    %4669 = vset.pattern.permute.xlu0 2
    %4670 = vperm.xlu0 %4669, %v2494
    %v4671 = vpop.permute.xlu0 %4670
    %4673 = vset.pattern.permute.xlu0 2
    %4674 = vperm.xlu0 %4673, %v2495
    %v4675 = vpop.permute.xlu0 %4674
    %4677 = vset.pattern.permute.xlu0 2
    %4678 = vperm.xlu0 %4677, %v2496
    %v4679 = vpop.permute.xlu0 %4678
    %v4681 = vmul.f32 %v4667, %v4614
    %v4682 = vmul.f32 %v4671, %v4614
    %v4683 = vmul.f32 %v4675, %v4618
    %v4684 = vmul.f32 %v4679, %v4618
    %4689 = vrot.lane.b32.xlu0 %v4681, 122
    %v4690 = vpop.permute.xlu0 %4689
    %4691 = vrot.lane.b32.xlu0 %v4682, 122
    %v4692 = vpop.permute.xlu0 %4691
    %4693 = vrot.lane.b32.xlu0 %v4683, 122
    %v4694 = vpop.permute.xlu0 %4693
    %4695 = vrot.lane.b32.xlu0 %v4684, 122
    %v4696 = vpop.permute.xlu0 %4695
    %v4701 = vadd.f32 %v4661, %v4690
    %v4702 = vadd.f32 %v4662, %v4692
    %v4703 = vadd.f32 %v4663, %v4694
    %v4704 = vadd.f32 %v4664, %v4696
    %4705 = vrot.lane.b32.xlu0 %v4614, 119
    %v4706 = vpop.permute.xlu0 %4705
    %4707 = vrot.lane.b32.xlu0 %v4618, 119
    %v4708 = vpop.permute.xlu0 %4707
    %v4711 = vadd.f32 %v4701, %v4706
    %v4712 = vadd.f32 %v4702, %v4706
    %v4713 = vadd.f32 %v4703, %v4708
    %v4714 = vadd.f32 %v4704, %v4708
    %4715 = vst.msk [vmem:[%s13] sm:$0xff] %vm125, %v4711
    %4716 = vst.msk [vmem:[%s13 + $0x8] sm:$0xff] %vm125, %v4712
    %4717 = vst.msk [vmem:[%s13 + $0x10] sm:$0xff] %vm125, %v4713
    %4718 = vst.msk [vmem:[%s13 + $0x18] sm:$0xff] %vm125, %v4714
    %vm4721 = vcmask 90112
    %4722 = vst.msk [vmem:[#allocation2] sm:$0x1] %vm4721, %v4587
    %4723 = vst.msk [vmem:[#allocation2 + $0x1] sm:$0x1] %vm4721, %v4594
    // Predicated region
    $region54: #{tpu_custom_call.1} parent=1 // pred_check
      _
    $region55: #{tpu_custom_call.1} parent=1 // pred_check_branch
      %4725 = sbr.rel (0) target = $region57
    $region56: #{tpu_custom_call.1} parent=1 // pred_region
      _
    $region57: #{tpu_custom_call.1} parent=1 // pred_fallthru
      _
    // Predicated region
    $region58: #{tpu_custom_call.1} parent=1 // pred_check
      _
    $region59: #{tpu_custom_call.1} parent=1 // pred_check_branch
      %4727 = sbr.rel (0) target = $region61
    $region60: #{tpu_custom_call.1} parent=1 // pred_region
      %s4729 = ssub.s32 32, 32
      %4730 = vsyncadd [#allocation3], %s4729
      %s4731 = sshll.u32 [#allocation2], 4
      %s4732 = int_to_ptr.vmem [resolvable:$true] %s4731
      %4737 = dma.vmem_to_hbm [thread:$0]  %s4732, 32, %s14, [#allocation3], 16, 16, 1
    $region61: #{tpu_custom_call.1} parent=1 // pred_fallthru
      _
    // Predicated region
    $region62: #{tpu_custom_call.1} parent=1 // pred_check
      _
    $region63: #{tpu_custom_call.1} parent=1 // pred_check_branch
      %4739 = sbr.rel (0) target = $region65
    $region64: #{tpu_custom_call.1} parent=1 // pred_region
      _
    $region65: #{tpu_custom_call.1} parent=1 // pred_fallthru
      _
    // Predicated region
    $region66: #{tpu_custom_call.1} parent=1 // pred_check
      _
    $region67: #{tpu_custom_call.1} parent=1 // pred_check_branch
      %4741 = sbr.rel (0) target = $region69
    $region68: #{tpu_custom_call.1} parent=1 // pred_region
      %4742 = dma.done [#allocation3], 32
    $region69: #{tpu_custom_call.1} parent=1 // pred_fallthru
      _
    %4743 = vsyncpa [#allocation3], 1

</llo_original>
